<compile_context>
chip_gen: v7x
topology: tpu7x:2x2x1
jax: 0.10.0
libtpu: 0.0.40
codegen_flags: <defaults>
</compile_context>

<pallas_src>
import functools
import math

import jax
import jax.numpy as jnp
from jax.experimental import pallas as pl
from jax.experimental.pallas import tpu as pltpu


# ----------------------------------------------------------------------------
# Helpers
# ----------------------------------------------------------------------------

def _row_tile(s):
    """Largest row tile that divides s (whole s for small sequences). Multiples of 8 preferred."""
    if s <= 512:
        return s
    for t in (512, 256, 128, 64, 32, 16, 8):
        if s % t == 0:
            return t
    return s


def _const_spec(shape):
    """BlockSpec for a grid-invariant operand: single-buffered so it is not duplicated in VMEM."""
    return pl.BlockSpec(shape, lambda *_: (0,) * len(shape), pipeline_mode=pl.Buffered(1))


def _cparams(grid_ndims):
    return pltpu.CompilerParams(
        dimension_semantics=("parallel",) * grid_ndims,
        vmem_limit_bytes=32 * 1024 * 1024,
    )


def _bf16(a):
    return a.astype(jnp.bfloat16)


# ----------------------------------------------------------------------------
# Stem: value = x @ W + b + positional_embedding  (pos add fused into the matmul epilogue)
# ----------------------------------------------------------------------------

def _stem_kernel(x_ref, w_ref, b_ref, pos_ref, o_ref):
    y = jnp.dot(x_ref[0], w_ref[...], preferred_element_type=jnp.float32)   # bf16 MXU, f32 acc
    y = y + b_ref[...].astype(jnp.float32) + pos_ref[...].astype(jnp.float32)
    o_ref[0] = y.astype(o_ref.dtype)


def stem_embed(x, w, b, pos):
    """x: (B, S, inp) f32, w: (inp, E), b: (1, E), pos: (S, E) -> (B, S, E) bf16."""
    B, S, K = x.shape
    E = w.shape[1]
    ts = _row_tile(S)
    flops = 2 * B * S * K * E
    bytes_accessed = 2 * (B * S * K + K * E + E + S * E + B * S * E)
    return pl.pallas_call(
        _stem_kernel,
        out_shape=jax.ShapeDtypeStruct((B, S, E), jnp.bfloat16),
        grid=(B, S // ts),
        in_specs=[pl.BlockSpec((1, ts, K), lambda b, i: (b, i, 0)),
                  _const_spec((K, E)),
                  _const_spec((1, E)),
                  pl.BlockSpec((ts, E), lambda b, i: (i, 0))],
        out_specs=pl.BlockSpec((1, ts, E), lambda b, i: (b, i, 0)),
        compiler_params=_cparams(2),
        cost_estimate=pl.CostEstimate(flops=flops, transcendentals=0,
                                      bytes_accessed=bytes_accessed),
    )(_bf16(x), _bf16(w), _bf16(b), _bf16(pos))


# ----------------------------------------------------------------------------
# Fused MHA block: QKV proj + per-head attention + output proj + residual + LN1
# ----------------------------------------------------------------------------

def _mha_block_kernel(xq_ref, xkv_ref, wq_ref, wk_ref, wv_ref,
                      bq_ref, bk_ref, bv_ref, wo_ref, bo_ref,
                      g_ref, bb_ref, o_ref, *, num_heads, scale, eps):
    xq = xq_ref[0]                                   # (tq, E) bf16 (query rows + residual source)
    xkv = xkv_ref[0]                                 # (S,  E) bf16 (full sequence for K/V)
    acc = None
    for h in range(num_heads):                       # static unroll; heads indexed on the leading axis
        q = jnp.dot(xq, wq_ref[h], preferred_element_type=jnp.float32) + bq_ref[h].astype(jnp.float32)
        k = jnp.dot(xkv, wk_ref[h], preferred_element_type=jnp.float32) + bk_ref[h].astype(jnp.float32)
        v = jnp.dot(xkv, wv_ref[h], preferred_element_type=jnp.float32) + bv_ref[h].astype(jnp.float32)
        # scores: contract the head dim of q and k (no explicit transpose materialized)
        s = jax.lax.dot_general(q.astype(jnp.bfloat16), k.astype(jnp.bfloat16),
                                (((1,), (1,)), ((), ())),
                                preferred_element_type=jnp.float32) * scale       # (tq, S)
        m = jnp.max(s, axis=-1, keepdims=True)
        p = jnp.exp(s - m)
        p = p / jnp.sum(p, axis=-1, keepdims=True)                                 # exact softmax divide
        ctx = jnp.dot(p.astype(jnp.bfloat16), v.astype(jnp.bfloat16),
                      preferred_element_type=jnp.float32)                          # (tq, Dh)
        # fold this head straight into the output projection accumulator (no concat, no lane slices)
        contrib = jnp.dot(ctx.astype(jnp.bfloat16), wo_ref[h],
                          preferred_element_type=jnp.float32)                      # (tq, E)
        acc = contrib if acc is None else acc + contrib
    y = acc + bo_ref[...].astype(jnp.float32) + xq.astype(jnp.float32)             # residual add in f32
    mu = jnp.mean(y, axis=-1, keepdims=True)
    var = jnp.mean(jnp.square(y - mu), axis=-1, keepdims=True)
    yn = (y - mu) * jax.lax.rsqrt(var + eps)
    o_ref[0] = (yn * g_ref[...].astype(jnp.float32)
                + bb_ref[...].astype(jnp.float32)).astype(o_ref.dtype)


def mha_block(x, p, num_heads, eps=1e-5):
    """x: (B, S, E) bf16 -> LN1(x + MHA(x)): (B, S, E) bf16.  Grid over (batch, query-row tiles)."""
    B, S, E = x.shape
    Dh = E // num_heads
    tq = _row_tile(S)
    scale = 1.0 / math.sqrt(Dh)
    # TODO(synk): switch to flash-style KV blocking + online softmax for long S (VMEM-bounded scores).
    flops = 2 * B * (4 * S * E * E + 2 * S * S * E)
    transcendentals = B * num_heads * S * S
    bytes_accessed = 2 * (2 * B * S * E + 4 * E * E + 3 * E + 4 * E)
    return pl.pallas_call(
        functools.partial(_mha_block_kernel, num_heads=num_heads, scale=scale, eps=eps),
        out_shape=jax.ShapeDtypeStruct((B, S, E), jnp.bfloat16),
        grid=(B, S // tq),
        in_specs=[pl.BlockSpec((1, tq, E), lambda b, i: (b, i, 0)),   # query rows / residual
                  pl.BlockSpec((1, S, E), lambda b, i: (b, 0, 0)),    # full sequence for K/V
                  _const_spec((num_heads, E, Dh)),                    # wq (head-major)
                  _const_spec((num_heads, E, Dh)),                    # wk
                  _const_spec((num_heads, E, Dh)),                    # wv
                  _const_spec((num_heads, 1, Dh)),                    # bq
                  _const_spec((num_heads, 1, Dh)),                    # bk
                  _const_spec((num_heads, 1, Dh)),                    # bv
                  _const_spec((num_heads, Dh, E)),                    # wo (head-major)
                  _const_spec((1, E)),                                # bo
                  _const_spec((1, E)),                                # ln1 gamma
                  _const_spec((1, E))],                               # ln1 beta
        out_specs=pl.BlockSpec((1, tq, E), lambda b, i: (b, i, 0)),
        compiler_params=_cparams(2),
        cost_estimate=pl.CostEstimate(flops=flops, transcendentals=transcendentals,
                                      bytes_accessed=bytes_accessed),
    )(x, x,
      _bf16(p["wq"]), _bf16(p["wk"]), _bf16(p["wv"]),
      _bf16(p["bq"]), _bf16(p["bk"]), _bf16(p["bv"]),
      _bf16(p["wo"]), _bf16(p["bo"]), _bf16(p["ln1_g"]), _bf16(p["ln1_b"]))


# ----------------------------------------------------------------------------
# Fused MLP block: Linear(E,4E) + GELU + Linear(4E,E) + residual + LN2
# (the (ts, 4E) intermediate never leaves VMEM)
# ----------------------------------------------------------------------------

def _mlp_block_kernel(x_ref, w1_ref, b1_ref, w2_ref, b2_ref, g_ref, bb_ref, o_ref, *, eps):
    x = x_ref[0]                                                         # (ts, E) bf16
    h = jnp.dot(x, w1_ref[...], preferred_element_type=jnp.float32)
    h = h + b1_ref[...].astype(jnp.float32)
    # TODO(synk): PyTorch nn.GELU() default is exact erf; tanh approximation used here.
    h = jax.nn.gelu(h, approximate=True)                                 # (ts, 4E) stays on-chip
    y = jnp.dot(h.astype(jnp.bfloat16), w2_ref[...], preferred_element_type=jnp.float32)
    y = y + b2_ref[...].astype(jnp.float32) + x.astype(jnp.float32)      # residual add in f32
    mu = jnp.mean(y, axis=-1, keepdims=True)
    var = jnp.mean(jnp.square(y - mu), axis=-1, keepdims=True)
    yn = (y - mu) * jax.lax.rsqrt(var + eps)
    o_ref[0] = (yn * g_ref[...].astype(jnp.float32)
                + bb_ref[...].astype(jnp.float32)).astype(o_ref.dtype)


def mlp_block(x, p, eps=1e-5):
    """x: (B, S, E) bf16 -> LN2(x + MLP(x)): (B, S, E) bf16."""
    B, S, E = x.shape
    H4 = p["w1"].shape[1]
    ts = _row_tile(S)
    # TODO(synk): for large E, add an inner reduction loop over the 4E dim of w2 (and tile w1's N)
    # with a VMEM f32 accumulator so both weights + the (ts,4E) intermediate fit v7x's 64 MiB VMEM.
    flops = 2 * B * S * E * H4 * 2
    transcendentals = B * S * H4
    bytes_accessed = 2 * (2 * B * S * E + 2 * E * H4 + H4 + 3 * E)
    return pl.pallas_call(
        functools.partial(_mlp_block_kernel, eps=eps),
        out_shape=jax.ShapeDtypeStruct((B, S, E), jnp.bfloat16),
        grid=(B, S // ts),
        in_specs=[pl.BlockSpec((1, ts, E), lambda b, i: (b, i, 0)),
                  _const_spec((E, H4)),
                  _const_spec((1, H4)),
                  _const_spec((H4, E)),
                  _const_spec((1, E)),
                  _const_spec((1, E)),
                  _const_spec((1, E))],
        out_specs=pl.BlockSpec((1, ts, E), lambda b, i: (b, i, 0)),
        compiler_params=_cparams(2),
        cost_estimate=pl.CostEstimate(flops=flops, transcendentals=transcendentals,
                                      bytes_accessed=bytes_accessed),
    )(x, _bf16(p["w1"]), _bf16(p["b1"]), _bf16(p["w2"]), _bf16(p["b2"]),
      _bf16(p["ln2_g"]), _bf16(p["ln2_b"]))


# ----------------------------------------------------------------------------
# Model glue (parameter init + block / encoder composition)
# ----------------------------------------------------------------------------

def init_params(key, inp_dim, emb_dim, num_heads, num_blocks):
    dh = emb_dim // num_heads

    def nrm(k, shape, scale=0.02):
        return scale * jax.random.normal(k, shape, jnp.float32)

    keys = jax.random.split(key, 2 + num_blocks)
    params = {
        "stem_w": nrm(keys[0], (inp_dim, emb_dim)),
        "stem_b": jnp.zeros((1, emb_dim), jnp.float32),
        "pos_emb": nrm(keys[1], (220, emb_dim)),   # nn.Embedding(220, embDim)
        "blocks": [],
    }
    for bi in range(num_blocks):
        bk = jax.random.split(keys[2 + bi], 6)
        params["blocks"].append({
            # Attention projections are stored head-major so the kernel indexes heads along the
            # leading axis (no Dh-wide lane slicing and no concat inside the kernel).
            "wq": nrm(bk[0], (num_heads, emb_dim, dh)),
            "wk": nrm(bk[1], (num_heads, emb_dim, dh)),
            "wv": nrm(bk[2], (num_heads, emb_dim, dh)),
            "bq": jnp.zeros((num_heads, 1, dh), jnp.float32),
            "bk": jnp.zeros((num_heads, 1, dh), jnp.float32),
            "bv": jnp.zeros((num_heads, 1, dh), jnp.float32),
            "wo": nrm(bk[3], (num_heads, dh, emb_dim)),
            "bo": jnp.zeros((1, emb_dim), jnp.float32),
            "ln1_g": jnp.ones((1, emb_dim), jnp.float32),
            "ln1_b": jnp.zeros((1, emb_dim), jnp.float32),
            "w1": nrm(bk[4], (emb_dim, 4 * emb_dim)),
            "b1": jnp.zeros((1, 4 * emb_dim), jnp.float32),
            "w2": nrm(bk[5], (4 * emb_dim, emb_dim)),
            "b2": jnp.zeros((1, emb_dim), jnp.float32),
            "ln2_g": jnp.ones((1, emb_dim), jnp.float32),
            "ln2_b": jnp.zeros((1, emb_dim), jnp.float32),
        })
    return params


def transformer_block(x, p, num_heads):
    """x: (B, S, E) bf16 -> (B, S, E) bf16. Post-norm block, 2 fused pallas_calls."""
    x = mha_block(x, p, num_heads)   # QKV + attention + out-proj + residual + LN1
    x = mlp_block(x, p)              # MLP up + GELU + MLP down + residual + LN2
    return x


def encoder_forward(params, x, positional_indices, num_heads):
    """x: (B, S, inpDim) f32, positional_indices: (S,) int32 -> (B, S, embDim) f32."""
    pos = jnp.take(params["pos_emb"], positional_indices, axis=0)    # (S, E) embedding gather (XLA glue)
    emb = stem_embed(x, params["stem_w"], params["stem_b"], pos)     # stem + pos add fused, bf16 out
    for blk in params["blocks"]:
        emb = transformer_block(emb, blk, num_heads)
    return emb.astype(jnp.float32)


# ----------------------------------------------------------------------------
# Main
# ----------------------------------------------------------------------------

if __name__ == "__main__":
    INP_DIM, EMB_DIM, NUM_HEADS, NUM_BLOCKS = 16, 32, 4, 2
    B, S = 2, 8
    # NOTE: at these demo sizes (E=32 < 128 lanes) stores are masked / MXU lanes underused; on real
    # model sizes choose E and N-tiles as multiples of 128 (256 on v6e/v7x) for lane-dense stores.

    key = jax.random.PRNGKey(0)
    k_params, k_x = jax.random.split(key)
    params = init_params(k_params, INP_DIM, EMB_DIM, NUM_HEADS, NUM_BLOCKS)

    x = jax.random.normal(k_x, (B, S, INP_DIM), jnp.float32)
    positional_indices = jnp.arange(S, dtype=jnp.int32)

    fwd = jax.jit(functools.partial(encoder_forward, num_heads=NUM_HEADS))
    out = fwd(params, x, positional_indices)
    jax.block_until_ready(out)

    assert out.shape == (B, S, EMB_DIM), out.shape
    assert jnp.all(jnp.isfinite(out))
    print("KERNEL_OK")
</pallas_src>

<mosaic_0001>
module attributes {stable_mosaic.version = 11 : i64} {
  func.func @_stem_kernel(%arg0: i32, %arg1: i32, %arg2: memref<1x8x16xbf16, #tpu.memory_space<vmem>>, %arg3: memref<16x32xbf16, #tpu.memory_space<vmem>>, %arg4: memref<1x32xbf16, #tpu.memory_space<vmem>>, %arg5: memref<8x32xbf16, #tpu.memory_space<vmem>>, %arg6: memref<1x8x32xbf16, #tpu.memory_space<vmem>>) attributes {dimension_semantics = [#tpu.dimension_semantics<parallel>, #tpu.dimension_semantics<parallel>], iteration_bounds = array<i64: 2, 1>, scalar_prefetch = 0 : i64, scratch_operands = 0 : i64, tpu.core_type = #tpu.core_type<tc>, window_params = [{transform_indices = @transform_0, window_bounds = array<i64: 1, 8, 16>}, {pipeline_mode = #tpu.pipeline_mode<synchronous>, transform_indices = @transform_1, window_bounds = array<i64: 16, 32>}, {pipeline_mode = #tpu.pipeline_mode<synchronous>, transform_indices = @transform_2, window_bounds = array<i64: 1, 32>}, {transform_indices = @transform_3, window_bounds = array<i64: 8, 32>}, {transform_indices = @transform_4, window_bounds = array<i64: 1, 8, 32>}]} {
    %c0 = arith.constant 0 : index
    %c0_0 = arith.constant 0 : index
    %c0_1 = arith.constant 0 : index
    %0 = vector.load %arg2[%c0, %c0_0, %c0_1] : memref<1x8x16xbf16, #tpu.memory_space<vmem>>, vector<1x8x16xbf16>
    %1 = vector.shape_cast %0 : vector<1x8x16xbf16> to vector<8x16xbf16>
    %c0_2 = arith.constant 0 : index
    %c0_3 = arith.constant 0 : index
    %2 = vector.load %arg3[%c0_2, %c0_3] : memref<16x32xbf16, #tpu.memory_space<vmem>>, vector<16x32xbf16>
    %cst = arith.constant dense<0.000000e+00> : vector<8x32xf32>
    %3 = tpu.matmul %1, %2, %cst {dimension_numbers = #tpu.dot_dimension_numbers<[1], [0], [0], [1], [0, 0, 1, 1], [], []>} : vector<8x16xbf16>, vector<16x32xbf16>, vector<8x32xf32> -> vector<8x32xf32>
    %c0_4 = arith.constant 0 : index
    %c0_5 = arith.constant 0 : index
    %4 = vector.load %arg4[%c0_4, %c0_5] : memref<1x32xbf16, #tpu.memory_space<vmem>>, vector<1x32xbf16>
    %5 = arith.extf %4 : vector<1x32xbf16> to vector<1x32xf32>
    %6 = vector.broadcast %5 : vector<1x32xf32> to vector<8x32xf32>
    %7 = arith.addf %3, %6 : vector<8x32xf32>
    %c0_6 = arith.constant 0 : index
    %c0_7 = arith.constant 0 : index
    %8 = vector.load %arg5[%c0_6, %c0_7] : memref<8x32xbf16, #tpu.memory_space<vmem>>, vector<8x32xbf16>
    %9 = arith.extf %8 : vector<8x32xbf16> to vector<8x32xf32>
    %10 = arith.addf %7, %9 : vector<8x32xf32>
    %11 = arith.truncf %10 : vector<8x32xf32> to vector<8x32xbf16>
    %c0_8 = arith.constant 0 : index
    %c0_9 = arith.constant 0 : index
    %c0_10 = arith.constant 0 : index
    %12 = vector.load %arg6[%c0_8, %c0_9, %c0_10] : memref<1x8x32xbf16, #tpu.memory_space<vmem>>, vector<1x8x32xbf16>
    %13 = vector.shape_cast %12 : vector<1x8x32xbf16> to vector<8x32xbf16>
    %14 = vector.shape_cast %11 : vector<8x32xbf16> to vector<1x8x32xbf16>
    tpu.vector_store %arg6[%c0_8, %c0_9, %c0_10], %14 {strides = array<i32>} : memref<1x8x32xbf16, #tpu.memory_space<vmem>>, vector<1x8x32xbf16>,
    return
  }
  func.func @transform_0(%arg0: i32, %arg1: i32) -> (i32, i32, i32) {
    %c0_i32 = arith.constant 0 : i32
    %c0_i32_0 = arith.constant 0 : i32
    return %arg0, %arg1, %c0_i32 : i32, i32, i32
  }
  func.func @transform_1(%arg0: i32, %arg1: i32) -> (i32, i32) {
    %c0_i32 = arith.constant 0 : i32
    %c0_i32_0 = arith.constant 0 : i32
    %c0_i32_1 = arith.constant 0 : i32
    return %c0_i32, %c0_i32_0 : i32, i32
  }
  func.func @transform_2(%arg0: i32, %arg1: i32) -> (i32, i32) {
    %c0_i32 = arith.constant 0 : i32
    %c0_i32_0 = arith.constant 0 : i32
    %c0_i32_1 = arith.constant 0 : i32
    return %c0_i32, %c0_i32_0 : i32, i32
  }
  func.func @transform_3(%arg0: i32, %arg1: i32) -> (i32, i32) {
    %c0_i32 = arith.constant 0 : i32
    %c0_i32_0 = arith.constant 0 : i32
    return %arg1, %c0_i32 : i32, i32
  }
  func.func @transform_4(%arg0: i32, %arg1: i32) -> (i32, i32, i32) {
    %c0_i32 = arith.constant 0 : i32
    %c0_i32_0 = arith.constant 0 : i32
    return %arg0, %arg1, %c0_i32 : i32, i32, i32
  }
}

module attributes {stable_mosaic.version = 11 : i64} {
  func.func @_mlp_block_kernel(%arg0: i32, %arg1: i32, %arg2: memref<1x8x32xbf16, #tpu.memory_space<vmem>>, %arg3: memref<32x128xbf16, #tpu.memory_space<vmem>>, %arg4: memref<1x128xbf16, #tpu.memory_space<vmem>>, %arg5: memref<128x32xbf16, #tpu.memory_space<vmem>>, %arg6: memref<1x32xbf16, #tpu.memory_space<vmem>>, %arg7: memref<1x32xbf16, #tpu.memory_space<vmem>>, %arg8: memref<1x32xbf16, #tpu.memory_space<vmem>>, %arg9: memref<1x8x32xbf16, #tpu.memory_space<vmem>>) attributes {dimension_semantics = [#tpu.dimension_semantics<parallel>, #tpu.dimension_semantics<parallel>], iteration_bounds = array<i64: 2, 1>, scalar_prefetch = 0 : i64, scratch_operands = 0 : i64, tpu.core_type = #tpu.core_type<tc>, window_params = [{transform_indices = @transform_0, window_bounds = array<i64: 1, 8, 32>}, {pipeline_mode = #tpu.pipeline_mode<synchronous>, transform_indices = @transform_1, window_bounds = array<i64: 32, 128>}, {pipeline_mode = #tpu.pipeline_mode<synchronous>, transform_indices = @transform_2, window_bounds = array<i64: 1, 128>}, {pipeline_mode = #tpu.pipeline_mode<synchronous>, transform_indices = @transform_3, window_bounds = array<i64: 128, 32>}, {pipeline_mode = #tpu.pipeline_mode<synchronous>, transform_indices = @transform_4, window_bounds = array<i64: 1, 32>}, {pipeline_mode = #tpu.pipeline_mode<synchronous>, transform_indices = @transform_5, window_bounds = array<i64: 1, 32>}, {pipeline_mode = #tpu.pipeline_mode<synchronous>, transform_indices = @transform_6, window_bounds = array<i64: 1, 32>}, {transform_indices = @transform_7, window_bounds = array<i64: 1, 8, 32>}]} {
    %c0 = arith.constant 0 : index
    %c0_0 = arith.constant 0 : index
    %c0_1 = arith.constant 0 : index
    %0 = vector.load %arg2[%c0, %c0_0, %c0_1] : memref<1x8x32xbf16, #tpu.memory_space<vmem>>, vector<1x8x32xbf16>
    %1 = vector.shape_cast %0 : vector<1x8x32xbf16> to vector<8x32xbf16>
    %c0_2 = arith.constant 0 : index
    %c0_3 = arith.constant 0 : index
    %2 = vector.load %arg3[%c0_2, %c0_3] : memref<32x128xbf16, #tpu.memory_space<vmem>>, vector<32x128xbf16>
    %cst = arith.constant dense<0.000000e+00> : vector<8x128xf32>
    %3 = tpu.matmul %1, %2, %cst {dimension_numbers = #tpu.dot_dimension_numbers<[1], [0], [0], [1], [0, 0, 1, 1], [], []>} : vector<8x32xbf16>, vector<32x128xbf16>, vector<8x128xf32> -> vector<8x128xf32>
    %c0_4 = arith.constant 0 : index
    %c0_5 = arith.constant 0 : index
    %4 = vector.load %arg4[%c0_4, %c0_5] : memref<1x128xbf16, #tpu.memory_space<vmem>>, vector<1x128xbf16>
    %5 = arith.extf %4 : vector<1x128xbf16> to vector<1x128xf32>
    %6 = vector.broadcast %5 : vector<1x128xf32> to vector<8x128xf32>
    %7 = arith.addf %3, %6 : vector<8x128xf32>
    %8 = arith.mulf %7, %7 : vector<8x128xf32>
    %9 = arith.mulf %7, %8 : vector<8x128xf32>
    %cst_6 = arith.constant 4.471500e-02 : f32
    %10 = vector.broadcast %cst_6 : f32 to vector<8x128xf32>
    %11 = arith.mulf %10, %9 : vector<8x128xf32>
    %12 = arith.addf %7, %11 : vector<8x128xf32>
    %cst_7 = arith.constant 0.797884583 : f32
    %13 = vector.broadcast %cst_7 : f32 to vector<8x128xf32>
    %14 = arith.mulf %13, %12 : vector<8x128xf32>
    %15 = math.tanh %14 : vector<8x128xf32>
    %cst_8 = arith.constant 1.000000e+00 : f32
    %16 = vector.broadcast %cst_8 : f32 to vector<8x128xf32>
    %17 = arith.addf %16, %15 : vector<8x128xf32>
    %cst_9 = arith.constant 5.000000e-01 : f32
    %18 = vector.broadcast %cst_9 : f32 to vector<8x128xf32>
    %19 = arith.mulf %18, %17 : vector<8x128xf32>
    %20 = arith.mulf %7, %19 : vector<8x128xf32>
    %21 = arith.truncf %20 : vector<8x128xf32> to vector<8x128xbf16>
    %c0_10 = arith.constant 0 : index
    %c0_11 = arith.constant 0 : index
    %22 = vector.load %arg5[%c0_10, %c0_11] : memref<128x32xbf16, #tpu.memory_space<vmem>>, vector<128x32xbf16>
    %cst_12 = arith.constant dense<0.000000e+00> : vector<8x32xf32>
    %23 = tpu.matmul %21, %22, %cst_12 {dimension_numbers = #tpu.dot_dimension_numbers<[1], [0], [0], [1], [0, 0, 1, 1], [], []>} : vector<8x128xbf16>, vector<128x32xbf16>, vector<8x32xf32> -> vector<8x32xf32>
    %c0_13 = arith.constant 0 : index
    %c0_14 = arith.constant 0 : index
    %24 = vector.load %arg6[%c0_13, %c0_14] : memref<1x32xbf16, #tpu.memory_space<vmem>>, vector<1x32xbf16>
    %25 = arith.extf %24 : vector<1x32xbf16> to vector<1x32xf32>
    %26 = vector.broadcast %25 : vector<1x32xf32> to vector<8x32xf32>
    %27 = arith.addf %23, %26 : vector<8x32xf32>
    %28 = arith.extf %1 : vector<8x32xbf16> to vector<8x32xf32>
    %29 = arith.addf %27, %28 : vector<8x32xf32>
    %cst_15 = arith.constant dense<0.000000e+00> : vector<8xf32>
    %30 = vector.multi_reduction <add>, %29, %cst_15 [1] : vector<8x32xf32> to vector<8xf32>
    %31 = vector.shape_cast %30 : vector<8xf32> to vector<8x1xf32>
    %cst_16 = arith.constant 3.200000e+01 : f32
    %32 = vector.broadcast %cst_16 : f32 to vector<8x1xf32>
    %33 = arith.divf %31, %32 : vector<8x1xf32>
    %34 = vector.broadcast %33 : vector<8x1xf32> to vector<8x32xf32>
    %35 = arith.subf %29, %34 : vector<8x32xf32>
    %36 = arith.mulf %35, %35 : vector<8x32xf32>
    %cst_17 = arith.constant dense<0.000000e+00> : vector<8xf32>
    %37 = vector.multi_reduction <add>, %36, %cst_17 [1] : vector<8x32xf32> to vector<8xf32>
    %38 = vector.shape_cast %37 : vector<8xf32> to vector<8x1xf32>
    %cst_18 = arith.constant 3.200000e+01 : f32
    %39 = vector.broadcast %cst_18 : f32 to vector<8x1xf32>
    %40 = arith.divf %38, %39 : vector<8x1xf32>
    %41 = vector.broadcast %33 : vector<8x1xf32> to vector<8x32xf32>
    %42 = arith.subf %29, %41 : vector<8x32xf32>
    %cst_19 = arith.constant 9.99999974E-6 : f32
    %43 = vector.broadcast %cst_19 : f32 to vector<8x1xf32>
    %44 = arith.addf %40, %43 : vector<8x1xf32>
    %45 = math.rsqrt %44 : vector<8x1xf32>
    %46 = vector.broadcast %45 : vector<8x1xf32> to vector<8x32xf32>
    %47 = arith.mulf %42, %46 : vector<8x32xf32>
    %c0_20 = arith.constant 0 : index
    %c0_21 = arith.constant 0 : index
    %48 = vector.load %arg7[%c0_20, %c0_21] : memref<1x32xbf16, #tpu.memory_space<vmem>>, vector<1x32xbf16>
    %49 = arith.extf %48 : vector<1x32xbf16> to vector<1x32xf32>
    %50 = vector.broadcast %49 : vector<1x32xf32> to vector<8x32xf32>
    %51 = arith.mulf %47, %50 : vector<8x32xf32>
    %c0_22 = arith.constant 0 : index
    %c0_23 = arith.constant 0 : index
    %52 = vector.load %arg8[%c0_22, %c0_23] : memref<1x32xbf16, #tpu.memory_space<vmem>>, vector<1x32xbf16>
    %53 = arith.extf %52 : vector<1x32xbf16> to vector<1x32xf32>
    %54 = vector.broadcast %53 : vector<1x32xf32> to vector<8x32xf32>
    %55 = arith.addf %51, %54 : vector<8x32xf32>
    %56 = arith.truncf %55 : vector<8x32xf32> to vector<8x32xbf16>
    %c0_24 = arith.constant 0 : index
    %c0_25 = arith.constant 0 : index
    %c0_26 = arith.constant 0 : index
    %57 = vector.load %arg9[%c0_24, %c0_25, %c0_26] : memref<1x8x32xbf16, #tpu.memory_space<vmem>>, vector<1x8x32xbf16>
    %58 = vector.shape_cast %57 : vector<1x8x32xbf16> to vector<8x32xbf16>
    %59 = vector.shape_cast %56 : vector<8x32xbf16> to vector<1x8x32xbf16>
    tpu.vector_store %arg9[%c0_24, %c0_25, %c0_26], %59 {strides = array<i32>} : memref<1x8x32xbf16, #tpu.memory_space<vmem>>, vector<1x8x32xbf16>,
    return
  }
  func.func @transform_0(%arg0: i32, %arg1: i32) -> (i32, i32, i32) {
    %c0_i32 = arith.constant 0 : i32
    %c0_i32_0 = arith.constant 0 : i32
    return %arg0, %arg1, %c0_i32 : i32, i32, i32
  }
  func.func @transform_1(%arg0: i32, %arg1: i32) -> (i32, i32) {
    %c0_i32 = arith.constant 0 : i32
    %c0_i32_0 = arith.constant 0 : i32
    %c0_i32_1 = arith.constant 0 : i32
    return %c0_i32, %c0_i32_0 : i32, i32
  }
  func.func @transform_2(%arg0: i32, %arg1: i32) -> (i32, i32) {
    %c0_i32 = arith.constant 0 : i32
    %c0_i32_0 = arith.constant 0 : i32
    %c0_i32_1 = arith.constant 0 : i32
    return %c0_i32, %c0_i32_0 : i32, i32
  }
  func.func @transform_3(%arg0: i32, %arg1: i32) -> (i32, i32) {
    %c0_i32 = arith.constant 0 : i32
    %c0_i32_0 = arith.constant 0 : i32
    %c0_i32_1 = arith.constant 0 : i32
    return %c0_i32, %c0_i32_0 : i32, i32
  }
  func.func @transform_4(%arg0: i32, %arg1: i32) -> (i32, i32) {
    %c0_i32 = arith.constant 0 : i32
    %c0_i32_0 = arith.constant 0 : i32
    %c0_i32_1 = arith.constant 0 : i32
    return %c0_i32, %c0_i32_0 : i32, i32
  }
  func.func @transform_5(%arg0: i32, %arg1: i32) -> (i32, i32) {
    %c0_i32 = arith.constant 0 : i32
    %c0_i32_0 = arith.constant 0 : i32
    %c0_i32_1 = arith.constant 0 : i32
    return %c0_i32, %c0_i32_0 : i32, i32
  }
  func.func @transform_6(%arg0: i32, %arg1: i32) -> (i32, i32) {
    %c0_i32 = arith.constant 0 : i32
    %c0_i32_0 = arith.constant 0 : i32
    %c0_i32_1 = arith.constant 0 : i32
    return %c0_i32, %c0_i32_0 : i32, i32
  }
  func.func @transform_7(%arg0: i32, %arg1: i32) -> (i32, i32, i32) {
    %c0_i32 = arith.constant 0 : i32
    %c0_i32_0 = arith.constant 0 : i32
    return %arg0, %arg1, %c0_i32 : i32, i32, i32
  }
}

module attributes {stable_mosaic.version = 11 : i64} {
  func.func @_mha_block_kernel(%arg0: i32, %arg1: i32, %arg2: memref<1x8x32xbf16, #tpu.memory_space<vmem>>, %arg3: memref<1x8x32xbf16, #tpu.memory_space<vmem>>, %arg4: memref<4x32x8xbf16, #tpu.memory_space<vmem>>, %arg5: memref<4x32x8xbf16, #tpu.memory_space<vmem>>, %arg6: memref<4x32x8xbf16, #tpu.memory_space<vmem>>, %arg7: memref<4x1x8xbf16, #tpu.memory_space<vmem>>, %arg8: memref<4x1x8xbf16, #tpu.memory_space<vmem>>, %arg9: memref<4x1x8xbf16, #tpu.memory_space<vmem>>, %arg10: memref<4x8x32xbf16, #tpu.memory_space<vmem>>, %arg11: memref<1x32xbf16, #tpu.memory_space<vmem>>, %arg12: memref<1x32xbf16, #tpu.memory_space<vmem>>, %arg13: memref<1x32xbf16, #tpu.memory_space<vmem>>, %arg14: memref<1x8x32xbf16, #tpu.memory_space<vmem>>) attributes {dimension_semantics = [#tpu.dimension_semantics<parallel>, #tpu.dimension_semantics<parallel>], iteration_bounds = array<i64: 2, 1>, scalar_prefetch = 0 : i64, scratch_operands = 0 : i64, tpu.core_type = #tpu.core_type<tc>, window_params = [{transform_indices = @transform_0, window_bounds = array<i64: 1, 8, 32>}, {transform_indices = @transform_1, window_bounds = array<i64: 1, 8, 32>}, {pipeline_mode = #tpu.pipeline_mode<synchronous>, transform_indices = @transform_2, window_bounds = array<i64: 4, 32, 8>}, {pipeline_mode = #tpu.pipeline_mode<synchronous>, transform_indices = @transform_3, window_bounds = array<i64: 4, 32, 8>}, {pipeline_mode = #tpu.pipeline_mode<synchronous>, transform_indices = @transform_4, window_bounds = array<i64: 4, 32, 8>}, {pipeline_mode = #tpu.pipeline_mode<synchronous>, transform_indices = @transform_5, window_bounds = array<i64: 4, 1, 8>}, {pipeline_mode = #tpu.pipeline_mode<synchronous>, transform_indices = @transform_6, window_bounds = array<i64: 4, 1, 8>}, {pipeline_mode = #tpu.pipeline_mode<synchronous>, transform_indices = @transform_7, window_bounds = array<i64: 4, 1, 8>}, {pipeline_mode = #tpu.pipeline_mode<synchronous>, transform_indices = @transform_8, window_bounds = array<i64: 4, 8, 32>}, {pipeline_mode = #tpu.pipeline_mode<synchronous>, transform_indices = @transform_9, window_bounds = array<i64: 1, 32>}, {pipeline_mode = #tpu.pipeline_mode<synchronous>, transform_indices = @transform_10, window_bounds = array<i64: 1, 32>}, {pipeline_mode = #tpu.pipeline_mode<synchronous>, transform_indices = @transform_11, window_bounds = array<i64: 1, 32>}, {transform_indices = @transform_12, window_bounds = array<i64: 1, 8, 32>}]} {
    %c0 = arith.constant 0 : index
    %c0_0 = arith.constant 0 : index
    %c0_1 = arith.constant 0 : index
    %0 = vector.load %arg2[%c0, %c0_0, %c0_1] : memref<1x8x32xbf16, #tpu.memory_space<vmem>>, vector<1x8x32xbf16>
    %1 = vector.shape_cast %0 : vector<1x8x32xbf16> to vector<8x32xbf16>
    %c0_2 = arith.constant 0 : index
    %c0_3 = arith.constant 0 : index
    %c0_4 = arith.constant 0 : index
    %2 = vector.load %arg3[%c0_2, %c0_3, %c0_4] : memref<1x8x32xbf16, #tpu.memory_space<vmem>>, vector<1x8x32xbf16>
    %3 = vector.shape_cast %2 : vector<1x8x32xbf16> to vector<8x32xbf16>
    %c0_5 = arith.constant 0 : index
    %c0_6 = arith.constant 0 : index
    %c0_7 = arith.constant 0 : index
    %4 = vector.load %arg4[%c0_5, %c0_6, %c0_7] : memref<4x32x8xbf16, #tpu.memory_space<vmem>>, vector<1x32x8xbf16>
    %5 = vector.shape_cast %4 : vector<1x32x8xbf16> to vector<32x8xbf16>
    %cst = arith.constant dense<0.000000e+00> : vector<8x8xf32>
    %6 = tpu.matmul %1, %5, %cst {dimension_numbers = #tpu.dot_dimension_numbers<[1], [0], [0], [1], [0, 0, 1, 1], [], []>} : vector<8x32xbf16>, vector<32x8xbf16>, vector<8x8xf32> -> vector<8x8xf32>
    %c0_8 = arith.constant 0 : index
    %c0_9 = arith.constant 0 : index
    %c0_10 = arith.constant 0 : index
    %7 = vector.load %arg7[%c0_8, %c0_9, %c0_10] : memref<4x1x8xbf16, #tpu.memory_space<vmem>>, vector<1x1x8xbf16>
    %8 = vector.shape_cast %7 : vector<1x1x8xbf16> to vector<1x8xbf16>
    %9 = arith.extf %8 : vector<1x8xbf16> to vector<1x8xf32>
    %10 = vector.broadcast %9 : vector<1x8xf32> to vector<8x8xf32>
    %11 = arith.addf %6, %10 : vector<8x8xf32>
    %c0_11 = arith.constant 0 : index
    %c0_12 = arith.constant 0 : index
    %c0_13 = arith.constant 0 : index
    %12 = vector.load %arg5[%c0_11, %c0_12, %c0_13] : memref<4x32x8xbf16, #tpu.memory_space<vmem>>, vector<1x32x8xbf16>
    %13 = vector.shape_cast %12 : vector<1x32x8xbf16> to vector<32x8xbf16>
    %cst_14 = arith.constant dense<0.000000e+00> : vector<8x8xf32>
    %14 = tpu.matmul %3, %13, %cst_14 {dimension_numbers = #tpu.dot_dimension_numbers<[1], [0], [0], [1], [0, 0, 1, 1], [], []>} : vector<8x32xbf16>, vector<32x8xbf16>, vector<8x8xf32> -> vector<8x8xf32>
    %c0_15 = arith.constant 0 : index
    %c0_16 = arith.constant 0 : index
    %c0_17 = arith.constant 0 : index
    %15 = vector.load %arg8[%c0_15, %c0_16, %c0_17] : memref<4x1x8xbf16, #tpu.memory_space<vmem>>, vector<1x1x8xbf16>
    %16 = vector.shape_cast %15 : vector<1x1x8xbf16> to vector<1x8xbf16>
    %17 = arith.extf %16 : vector<1x8xbf16> to vector<1x8xf32>
    %18 = vector.broadcast %17 : vector<1x8xf32> to vector<8x8xf32>
    %19 = arith.addf %14, %18 : vector<8x8xf32>
    %c0_18 = arith.constant 0 : index
    %c0_19 = arith.constant 0 : index
    %c0_20 = arith.constant 0 : index
    %20 = vector.load %arg6[%c0_18, %c0_19, %c0_20] : memref<4x32x8xbf16, #tpu.memory_space<vmem>>, vector<1x32x8xbf16>
    %21 = vector.shape_cast %20 : vector<1x32x8xbf16> to vector<32x8xbf16>
    %cst_21 = arith.constant dense<0.000000e+00> : vector<8x8xf32>
    %22 = tpu.matmul %3, %21, %cst_21 {dimension_numbers = #tpu.dot_dimension_numbers<[1], [0], [0], [1], [0, 0, 1, 1], [], []>} : vector<8x32xbf16>, vector<32x8xbf16>, vector<8x8xf32> -> vector<8x8xf32>
    %c0_22 = arith.constant 0 : index
    %c0_23 = arith.constant 0 : index
    %c0_24 = arith.constant 0 : index
    %23 = vector.load %arg9[%c0_22, %c0_23, %c0_24] : memref<4x1x8xbf16, #tpu.memory_space<vmem>>, vector<1x1x8xbf16>
    %24 = vector.shape_cast %23 : vector<1x1x8xbf16> to vector<1x8xbf16>
    %25 = arith.extf %24 : vector<1x8xbf16> to vector<1x8xf32>
    %26 = vector.broadcast %25 : vector<1x8xf32> to vector<8x8xf32>
    %27 = arith.addf %22, %26 : vector<8x8xf32>
    %28 = arith.truncf %11 : vector<8x8xf32> to vector<8x8xbf16>
    %29 = arith.truncf %19 : vector<8x8xf32> to vector<8x8xbf16>
    %cst_25 = arith.constant dense<0.000000e+00> : vector<8x8xf32>
    %30 = tpu.matmul %28, %29, %cst_25 {dimension_numbers = #tpu.dot_dimension_numbers<[1], [1], [0], [0], [0, 0, 1, 0], [], []>} : vector<8x8xbf16>, vector<8x8xbf16>, vector<8x8xf32> -> vector<8x8xf32>
    %cst_26 = arith.constant 0.353553385 : f32
    %31 = vector.broadcast %cst_26 : f32 to vector<8x8xf32>
    %32 = arith.mulf %30, %31 : vector<8x8xf32>
    %cst_27 = arith.constant dense<0xFF800000> : vector<8xf32>
    %33 = vector.multi_reduction <maximumf>, %32, %cst_27 [1] : vector<8x8xf32> to vector<8xf32>
    %34 = vector.shape_cast %33 : vector<8xf32> to vector<8x1xf32>
    %35 = vector.broadcast %34 : vector<8x1xf32> to vector<8x8xf32>
    %36 = arith.subf %32, %35 : vector<8x8xf32>
    %37 = math.exp %36 : vector<8x8xf32>
    %cst_28 = arith.constant dense<0.000000e+00> : vector<8xf32>
    %38 = vector.multi_reduction <add>, %37, %cst_28 [1] : vector<8x8xf32> to vector<8xf32>
    %39 = vector.shape_cast %38 : vector<8xf32> to vector<8x1xf32>
    %40 = vector.broadcast %39 : vector<8x1xf32> to vector<8x8xf32>
    %41 = arith.divf %37, %40 : vector<8x8xf32>
    %42 = arith.truncf %41 : vector<8x8xf32> to vector<8x8xbf16>
    %43 = arith.truncf %27 : vector<8x8xf32> to vector<8x8xbf16>
    %cst_29 = arith.constant dense<0.000000e+00> : vector<8x8xf32>
    %44 = tpu.matmul %42, %43, %cst_29 {dimension_numbers = #tpu.dot_dimension_numbers<[1], [0], [0], [1], [0, 0, 1, 1], [], []>} : vector<8x8xbf16>, vector<8x8xbf16>, vector<8x8xf32> -> vector<8x8xf32>
    %45 = arith.truncf %44 : vector<8x8xf32> to vector<8x8xbf16>
    %c0_30 = arith.constant 0 : index
    %c0_31 = arith.constant 0 : index
    %c0_32 = arith.constant 0 : index
    %46 = vector.load %arg10[%c0_30, %c0_31, %c0_32] : memref<4x8x32xbf16, #tpu.memory_space<vmem>>, vector<1x8x32xbf16>
    %47 = vector.shape_cast %46 : vector<1x8x32xbf16> to vector<8x32xbf16>
    %cst_33 = arith.constant dense<0.000000e+00> : vector<8x32xf32>
    %48 = tpu.matmul %45, %47, %cst_33 {dimension_numbers = #tpu.dot_dimension_numbers<[1], [0], [0], [1], [0, 0, 1, 1], [], []>} : vector<8x8xbf16>, vector<8x32xbf16>, vector<8x32xf32> -> vector<8x32xf32>
    %c1 = arith.constant 1 : index
    %c0_34 = arith.constant 0 : index
    %c0_35 = arith.constant 0 : index
    %49 = vector.load %arg4[%c1, %c0_34, %c0_35] : memref<4x32x8xbf16, #tpu.memory_space<vmem>>, vector<1x32x8xbf16>
    %50 = vector.shape_cast %49 : vector<1x32x8xbf16> to vector<32x8xbf16>
    %cst_36 = arith.constant dense<0.000000e+00> : vector<8x8xf32>
    %51 = tpu.matmul %1, %50, %cst_36 {dimension_numbers = #tpu.dot_dimension_numbers<[1], [0], [0], [1], [0, 0, 1, 1], [], []>} : vector<8x32xbf16>, vector<32x8xbf16>, vector<8x8xf32> -> vector<8x8xf32>
    %c1_37 = arith.constant 1 : index
    %c0_38 = arith.constant 0 : index
    %c0_39 = arith.constant 0 : index
    %52 = vector.load %arg7[%c1_37, %c0_38, %c0_39] : memref<4x1x8xbf16, #tpu.memory_space<vmem>>, vector<1x1x8xbf16>
    %53 = vector.shape_cast %52 : vector<1x1x8xbf16> to vector<1x8xbf16>
    %54 = arith.extf %53 : vector<1x8xbf16> to vector<1x8xf32>
    %55 = vector.broadcast %54 : vector<1x8xf32> to vector<8x8xf32>
    %56 = arith.addf %51, %55 : vector<8x8xf32>
    %c1_40 = arith.constant 1 : index
    %c0_41 = arith.constant 0 : index
    %c0_42 = arith.constant 0 : index
    %57 = vector.load %arg5[%c1_40, %c0_41, %c0_42] : memref<4x32x8xbf16, #tpu.memory_space<vmem>>, vector<1x32x8xbf16>
    %58 = vector.shape_cast %57 : vector<1x32x8xbf16> to vector<32x8xbf16>
    %cst_43 = arith.constant dense<0.000000e+00> : vector<8x8xf32>
    %59 = tpu.matmul %3, %58, %cst_43 {dimension_numbers = #tpu.dot_dimension_numbers<[1], [0], [0], [1], [0, 0, 1, 1], [], []>} : vector<8x32xbf16>, vector<32x8xbf16>, vector<8x8xf32> -> vector<8x8xf32>
    %c1_44 = arith.constant 1 : index
    %c0_45 = arith.constant 0 : index
    %c0_46 = arith.constant 0 : index
    %60 = vector.load %arg8[%c1_44, %c0_45, %c0_46] : memref<4x1x8xbf16, #tpu.memory_space<vmem>>, vector<1x1x8xbf16>
    %61 = vector.shape_cast %60 : vector<1x1x8xbf16> to vector<1x8xbf16>
    %62 = arith.extf %61 : vector<1x8xbf16> to vector<1x8xf32>
    %63 = vector.broadcast %62 : vector<1x8xf32> to vector<8x8xf32>
    %64 = arith.addf %59, %63 : vector<8x8xf32>
    %c1_47 = arith.constant 1 : index
    %c0_48 = arith.constant 0 : index
    %c0_49 = arith.constant 0 : index
    %65 = vector.load %arg6[%c1_47, %c0_48, %c0_49] : memref<4x32x8xbf16, #tpu.memory_space<vmem>>, vector<1x32x8xbf16>
    %66 = vector.shape_cast %65 : vector<1x32x8xbf16> to vector<32x8xbf16>
    %cst_50 = arith.constant dense<0.000000e+00> : vector<8x8xf32>
    %67 = tpu.matmul %3, %66, %cst_50 {dimension_numbers = #tpu.dot_dimension_numbers<[1], [0], [0], [1], [0, 0, 1, 1], [], []>} : vector<8x32xbf16>, vector<32x8xbf16>, vector<8x8xf32> -> vector<8x8xf32>
    %c1_51 = arith.constant 1 : index
    %c0_52 = arith.constant 0 : index
    %c0_53 = arith.constant 0 : index
    %68 = vector.load %arg9[%c1_51, %c0_52, %c0_53] : memref<4x1x8xbf16, #tpu.memory_space<vmem>>, vector<1x1x8xbf16>
    %69 = vector.shape_cast %68 : vector<1x1x8xbf16> to vector<1x8xbf16>
    %70 = arith.extf %69 : vector<1x8xbf16> to vector<1x8xf32>
    %71 = vector.broadcast %70 : vector<1x8xf32> to vector<8x8xf32>
    %72 = arith.addf %67, %71 : vector<8x8xf32>
    %73 = arith.truncf %56 : vector<8x8xf32> to vector<8x8xbf16>
    %74 = arith.truncf %64 : vector<8x8xf32> to vector<8x8xbf16>
    %cst_54 = arith.constant dense<0.000000e+00> : vector<8x8xf32>
    %75 = tpu.matmul %73, %74, %cst_54 {dimension_numbers = #tpu.dot_dimension_numbers<[1], [1], [0], [0], [0, 0, 1, 0], [], []>} : vector<8x8xbf16>, vector<8x8xbf16>, vector<8x8xf32> -> vector<8x8xf32>
    %cst_55 = arith.constant 0.353553385 : f32
    %76 = vector.broadcast %cst_55 : f32 to vector<8x8xf32>
    %77 = arith.mulf %75, %76 : vector<8x8xf32>
    %cst_56 = arith.constant dense<0xFF800000> : vector<8xf32>
    %78 = vector.multi_reduction <maximumf>, %77, %cst_56 [1] : vector<8x8xf32> to vector<8xf32>
    %79 = vector.shape_cast %78 : vector<8xf32> to vector<8x1xf32>
    %80 = vector.broadcast %79 : vector<8x1xf32> to vector<8x8xf32>
    %81 = arith.subf %77, %80 : vector<8x8xf32>
    %82 = math.exp %81 : vector<8x8xf32>
    %cst_57 = arith.constant dense<0.000000e+00> : vector<8xf32>
    %83 = vector.multi_reduction <add>, %82, %cst_57 [1] : vector<8x8xf32> to vector<8xf32>
    %84 = vector.shape_cast %83 : vector<8xf32> to vector<8x1xf32>
    %85 = vector.broadcast %84 : vector<8x1xf32> to vector<8x8xf32>
    %86 = arith.divf %82, %85 : vector<8x8xf32>
    %87 = arith.truncf %86 : vector<8x8xf32> to vector<8x8xbf16>
    %88 = arith.truncf %72 : vector<8x8xf32> to vector<8x8xbf16>
    %cst_58 = arith.constant dense<0.000000e+00> : vector<8x8xf32>
    %89 = tpu.matmul %87, %88, %cst_58 {dimension_numbers = #tpu.dot_dimension_numbers<[1], [0], [0], [1], [0, 0, 1, 1], [], []>} : vector<8x8xbf16>, vector<8x8xbf16>, vector<8x8xf32> -> vector<8x8xf32>
    %90 = arith.truncf %89 : vector<8x8xf32> to vector<8x8xbf16>
    %c1_59 = arith.constant 1 : index
    %c0_60 = arith.constant 0 : index
    %c0_61 = arith.constant 0 : index
    %91 = vector.load %arg10[%c1_59, %c0_60, %c0_61] : memref<4x8x32xbf16, #tpu.memory_space<vmem>>, vector<1x8x32xbf16>
    %92 = vector.shape_cast %91 : vector<1x8x32xbf16> to vector<8x32xbf16>
    %cst_62 = arith.constant dense<0.000000e+00> : vector<8x32xf32>
    %93 = tpu.matmul %90, %92, %cst_62 {dimension_numbers = #tpu.dot_dimension_numbers<[1], [0], [0], [1], [0, 0, 1, 1], [], []>} : vector<8x8xbf16>, vector<8x32xbf16>, vector<8x32xf32> -> vector<8x32xf32>
    %94 = arith.addf %48, %93 : vector<8x32xf32>
    %c2 = arith.constant 2 : index
    %c0_63 = arith.constant 0 : index
    %c0_64 = arith.constant 0 : index
    %95 = vector.load %arg4[%c2, %c0_63, %c0_64] : memref<4x32x8xbf16, #tpu.memory_space<vmem>>, vector<1x32x8xbf16>
    %96 = vector.shape_cast %95 : vector<1x32x8xbf16> to vector<32x8xbf16>
    %cst_65 = arith.constant dense<0.000000e+00> : vector<8x8xf32>
    %97 = tpu.matmul %1, %96, %cst_65 {dimension_numbers = #tpu.dot_dimension_numbers<[1], [0], [0], [1], [0, 0, 1, 1], [], []>} : vector<8x32xbf16>, vector<32x8xbf16>, vector<8x8xf32> -> vector<8x8xf32>
    %c2_66 = arith.constant 2 : index
    %c0_67 = arith.constant 0 : index
    %c0_68 = arith.constant 0 : index
    %98 = vector.load %arg7[%c2_66, %c0_67, %c0_68] : memref<4x1x8xbf16, #tpu.memory_space<vmem>>, vector<1x1x8xbf16>
    %99 = vector.shape_cast %98 : vector<1x1x8xbf16> to vector<1x8xbf16>
    %100 = arith.extf %99 : vector<1x8xbf16> to vector<1x8xf32>
    %101 = vector.broadcast %100 : vector<1x8xf32> to vector<8x8xf32>
    %102 = arith.addf %97, %101 : vector<8x8xf32>
    %c2_69 = arith.constant 2 : index
    %c0_70 = arith.constant 0 : index
    %c0_71 = arith.constant 0 : index
    %103 = vector.load %arg5[%c2_69, %c0_70, %c0_71] : memref<4x32x8xbf16, #tpu.memory_space<vmem>>, vector<1x32x8xbf16>
    %104 = vector.shape_cast %103 : vector<1x32x8xbf16> to vector<32x8xbf16>
    %cst_72 = arith.constant dense<0.000000e+00> : vector<8x8xf32>
    %105 = tpu.matmul %3, %104, %cst_72 {dimension_numbers = #tpu.dot_dimension_numbers<[1], [0], [0], [1], [0, 0, 1, 1], [], []>} : vector<8x32xbf16>, vector<32x8xbf16>, vector<8x8xf32> -> vector<8x8xf32>
    %c2_73 = arith.constant 2 : index
    %c0_74 = arith.constant 0 : index
    %c0_75 = arith.constant 0 : index
    %106 = vector.load %arg8[%c2_73, %c0_74, %c0_75] : memref<4x1x8xbf16, #tpu.memory_space<vmem>>, vector<1x1x8xbf16>
    %107 = vector.shape_cast %106 : vector<1x1x8xbf16> to vector<1x8xbf16>
    %108 = arith.extf %107 : vector<1x8xbf16> to vector<1x8xf32>
    %109 = vector.broadcast %108 : vector<1x8xf32> to vector<8x8xf32>
    %110 = arith.addf %105, %109 : vector<8x8xf32>
    %c2_76 = arith.constant 2 : index
    %c0_77 = arith.constant 0 : index
    %c0_78 = arith.constant 0 : index
    %111 = vector.load %arg6[%c2_76, %c0_77, %c0_78] : memref<4x32x8xbf16, #tpu.memory_space<vmem>>, vector<1x32x8xbf16>
    %112 = vector.shape_cast %111 : vector<1x32x8xbf16> to vector<32x8xbf16>
    %cst_79 = arith.constant dense<0.000000e+00> : vector<8x8xf32>
    %113 = tpu.matmul %3, %112, %cst_79 {dimension_numbers = #tpu.dot_dimension_numbers<[1], [0], [0], [1], [0, 0, 1, 1], [], []>} : vector<8x32xbf16>, vector<32x8xbf16>, vector<8x8xf32> -> vector<8x8xf32>
    %c2_80 = arith.constant 2 : index
    %c0_81 = arith.constant 0 : index
    %c0_82 = arith.constant 0 : index
    %114 = vector.load %arg9[%c2_80, %c0_81, %c0_82] : memref<4x1x8xbf16, #tpu.memory_space<vmem>>, vector<1x1x8xbf16>
    %115 = vector.shape_cast %114 : vector<1x1x8xbf16> to vector<1x8xbf16>
    %116 = arith.extf %115 : vector<1x8xbf16> to vector<1x8xf32>
    %117 = vector.broadcast %116 : vector<1x8xf32> to vector<8x8xf32>
    %118 = arith.addf %113, %117 : vector<8x8xf32>
    %119 = arith.truncf %102 : vector<8x8xf32> to vector<8x8xbf16>
    %120 = arith.truncf %110 : vector<8x8xf32> to vector<8x8xbf16>
    %cst_83 = arith.constant dense<0.000000e+00> : vector<8x8xf32>
    %121 = tpu.matmul %119, %120, %cst_83 {dimension_numbers = #tpu.dot_dimension_numbers<[1], [1], [0], [0], [0, 0, 1, 0], [], []>} : vector<8x8xbf16>, vector<8x8xbf16>, vector<8x8xf32> -> vector<8x8xf32>
    %cst_84 = arith.constant 0.353553385 : f32
    %122 = vector.broadcast %cst_84 : f32 to vector<8x8xf32>
    %123 = arith.mulf %121, %122 : vector<8x8xf32>
    %cst_85 = arith.constant dense<0xFF800000> : vector<8xf32>
    %124 = vector.multi_reduction <maximumf>, %123, %cst_85 [1] : vector<8x8xf32> to vector<8xf32>
    %125 = vector.shape_cast %124 : vector<8xf32> to vector<8x1xf32>
    %126 = vector.broadcast %125 : vector<8x1xf32> to vector<8x8xf32>
    %127 = arith.subf %123, %126 : vector<8x8xf32>
    %128 = math.exp %127 : vector<8x8xf32>
    %cst_86 = arith.constant dense<0.000000e+00> : vector<8xf32>
    %129 = vector.multi_reduction <add>, %128, %cst_86 [1] : vector<8x8xf32> to vector<8xf32>
    %130 = vector.shape_cast %129 : vector<8xf32> to vector<8x1xf32>
    %131 = vector.broadcast %130 : vector<8x1xf32> to vector<8x8xf32>
    %132 = arith.divf %128, %131 : vector<8x8xf32>
    %133 = arith.truncf %132 : vector<8x8xf32> to vector<8x8xbf16>
    %134 = arith.truncf %118 : vector<8x8xf32> to vector<8x8xbf16>
    %cst_87 = arith.constant dense<0.000000e+00> : vector<8x8xf32>
    %135 = tpu.matmul %133, %134, %cst_87 {dimension_numbers = #tpu.dot_dimension_numbers<[1], [0], [0], [1], [0, 0, 1, 1], [], []>} : vector<8x8xbf16>, vector<8x8xbf16>, vector<8x8xf32> -> vector<8x8xf32>
    %136 = arith.truncf %135 : vector<8x8xf32> to vector<8x8xbf16>
    %c2_88 = arith.constant 2 : index
    %c0_89 = arith.constant 0 : index
    %c0_90 = arith.constant 0 : index
    %137 = vector.load %arg10[%c2_88, %c0_89, %c0_90] : memref<4x8x32xbf16, #tpu.memory_space<vmem>>, vector<1x8x32xbf16>
    %138 = vector.shape_cast %137 : vector<1x8x32xbf16> to vector<8x32xbf16>
    %cst_91 = arith.constant dense<0.000000e+00> : vector<8x32xf32>
    %139 = tpu.matmul %136, %138, %cst_91 {dimension_numbers = #tpu.dot_dimension_numbers<[1], [0], [0], [1], [0, 0, 1, 1], [], []>} : vector<8x8xbf16>, vector<8x32xbf16>, vector<8x32xf32> -> vector<8x32xf32>
    %140 = arith.addf %94, %139 : vector<8x32xf32>
    %c3 = arith.constant 3 : index
    %c0_92 = arith.constant 0 : index
    %c0_93 = arith.constant 0 : index
    %141 = vector.load %arg4[%c3, %c0_92, %c0_93] : memref<4x32x8xbf16, #tpu.memory_space<vmem>>, vector<1x32x8xbf16>
    %142 = vector.shape_cast %141 : vector<1x32x8xbf16> to vector<32x8xbf16>
    %cst_94 = arith.constant dense<0.000000e+00> : vector<8x8xf32>
    %143 = tpu.matmul %1, %142, %cst_94 {dimension_numbers = #tpu.dot_dimension_numbers<[1], [0], [0], [1], [0, 0, 1, 1], [], []>} : vector<8x32xbf16>, vector<32x8xbf16>, vector<8x8xf32> -> vector<8x8xf32>
    %c3_95 = arith.constant 3 : index
    %c0_96 = arith.constant 0 : index
    %c0_97 = arith.constant 0 : index
    %144 = vector.load %arg7[%c3_95, %c0_96, %c0_97] : memref<4x1x8xbf16, #tpu.memory_space<vmem>>, vector<1x1x8xbf16>
    %145 = vector.shape_cast %144 : vector<1x1x8xbf16> to vector<1x8xbf16>
    %146 = arith.extf %145 : vector<1x8xbf16> to vector<1x8xf32>
    %147 = vector.broadcast %146 : vector<1x8xf32> to vector<8x8xf32>
    %148 = arith.addf %143, %147 : vector<8x8xf32>
    %c3_98 = arith.constant 3 : index
    %c0_99 = arith.constant 0 : index
    %c0_100 = arith.constant 0 : index
    %149 = vector.load %arg5[%c3_98, %c0_99, %c0_100] : memref<4x32x8xbf16, #tpu.memory_space<vmem>>, vector<1x32x8xbf16>
    %150 = vector.shape_cast %149 : vector<1x32x8xbf16> to vector<32x8xbf16>
    %cst_101 = arith.constant dense<0.000000e+00> : vector<8x8xf32>
    %151 = tpu.matmul %3, %150, %cst_101 {dimension_numbers = #tpu.dot_dimension_numbers<[1], [0], [0], [1], [0, 0, 1, 1], [], []>} : vector<8x32xbf16>, vector<32x8xbf16>, vector<8x8xf32> -> vector<8x8xf32>
    %c3_102 = arith.constant 3 : index
    %c0_103 = arith.constant 0 : index
    %c0_104 = arith.constant 0 : index
    %152 = vector.load %arg8[%c3_102, %c0_103, %c0_104] : memref<4x1x8xbf16, #tpu.memory_space<vmem>>, vector<1x1x8xbf16>
    %153 = vector.shape_cast %152 : vector<1x1x8xbf16> to vector<1x8xbf16>
    %154 = arith.extf %153 : vector<1x8xbf16> to vector<1x8xf32>
    %155 = vector.broadcast %154 : vector<1x8xf32> to vector<8x8xf32>
    %156 = arith.addf %151, %155 : vector<8x8xf32>
    %c3_105 = arith.constant 3 : index
    %c0_106 = arith.constant 0 : index
    %c0_107 = arith.constant 0 : index
    %157 = vector.load %arg6[%c3_105, %c0_106, %c0_107] : memref<4x32x8xbf16, #tpu.memory_space<vmem>>, vector<1x32x8xbf16>
    %158 = vector.shape_cast %157 : vector<1x32x8xbf16> to vector<32x8xbf16>
    %cst_108 = arith.constant dense<0.000000e+00> : vector<8x8xf32>
    %159 = tpu.matmul %3, %158, %cst_108 {dimension_numbers = #tpu.dot_dimension_numbers<[1], [0], [0], [1], [0, 0, 1, 1], [], []>} : vector<8x32xbf16>, vector<32x8xbf16>, vector<8x8xf32> -> vector<8x8xf32>
    %c3_109 = arith.constant 3 : index
    %c0_110 = arith.constant 0 : index
    %c0_111 = arith.constant 0 : index
    %160 = vector.load %arg9[%c3_109, %c0_110, %c0_111] : memref<4x1x8xbf16, #tpu.memory_space<vmem>>, vector<1x1x8xbf16>
    %161 = vector.shape_cast %160 : vector<1x1x8xbf16> to vector<1x8xbf16>
    %162 = arith.extf %161 : vector<1x8xbf16> to vector<1x8xf32>
    %163 = vector.broadcast %162 : vector<1x8xf32> to vector<8x8xf32>
    %164 = arith.addf %159, %163 : vector<8x8xf32>
    %165 = arith.truncf %148 : vector<8x8xf32> to vector<8x8xbf16>
    %166 = arith.truncf %156 : vector<8x8xf32> to vector<8x8xbf16>
    %cst_112 = arith.constant dense<0.000000e+00> : vector<8x8xf32>
    %167 = tpu.matmul %165, %166, %cst_112 {dimension_numbers = #tpu.dot_dimension_numbers<[1], [1], [0], [0], [0, 0, 1, 0], [], []>} : vector<8x8xbf16>, vector<8x8xbf16>, vector<8x8xf32> -> vector<8x8xf32>
    %cst_113 = arith.constant 0.353553385 : f32
    %168 = vector.broadcast %cst_113 : f32 to vector<8x8xf32>
    %169 = arith.mulf %167, %168 : vector<8x8xf32>
    %cst_114 = arith.constant dense<0xFF800000> : vector<8xf32>
    %170 = vector.multi_reduction <maximumf>, %169, %cst_114 [1] : vector<8x8xf32> to vector<8xf32>
    %171 = vector.shape_cast %170 : vector<8xf32> to vector<8x1xf32>
    %172 = vector.broadcast %171 : vector<8x1xf32> to vector<8x8xf32>
    %173 = arith.subf %169, %172 : vector<8x8xf32>
    %174 = math.exp %173 : vector<8x8xf32>
    %cst_115 = arith.constant dense<0.000000e+00> : vector<8xf32>
    %175 = vector.multi_reduction <add>, %174, %cst_115 [1] : vector<8x8xf32> to vector<8xf32>
    %176 = vector.shape_cast %175 : vector<8xf32> to vector<8x1xf32>
    %177 = vector.broadcast %176 : vector<8x1xf32> to vector<8x8xf32>
    %178 = arith.divf %174, %177 : vector<8x8xf32>
    %179 = arith.truncf %178 : vector<8x8xf32> to vector<8x8xbf16>
    %180 = arith.truncf %164 : vector<8x8xf32> to vector<8x8xbf16>
    %cst_116 = arith.constant dense<0.000000e+00> : vector<8x8xf32>
    %181 = tpu.matmul %179, %180, %cst_116 {dimension_numbers = #tpu.dot_dimension_numbers<[1], [0], [0], [1], [0, 0, 1, 1], [], []>} : vector<8x8xbf16>, vector<8x8xbf16>, vector<8x8xf32> -> vector<8x8xf32>
    %182 = arith.truncf %181 : vector<8x8xf32> to vector<8x8xbf16>
    %c3_117 = arith.constant 3 : index
    %c0_118 = arith.constant 0 : index
    %c0_119 = arith.constant 0 : index
    %183 = vector.load %arg10[%c3_117, %c0_118, %c0_119] : memref<4x8x32xbf16, #tpu.memory_space<vmem>>, vector<1x8x32xbf16>
    %184 = vector.shape_cast %183 : vector<1x8x32xbf16> to vector<8x32xbf16>
    %cst_120 = arith.constant dense<0.000000e+00> : vector<8x32xf32>
    %185 = tpu.matmul %182, %184, %cst_120 {dimension_numbers = #tpu.dot_dimension_numbers<[1], [0], [0], [1], [0, 0, 1, 1], [], []>} : vector<8x8xbf16>, vector<8x32xbf16>, vector<8x32xf32> -> vector<8x32xf32>
    %186 = arith.addf %140, %185 : vector<8x32xf32>
    %c0_121 = arith.constant 0 : index
    %c0_122 = arith.constant 0 : index
    %187 = vector.load %arg11[%c0_121, %c0_122] : memref<1x32xbf16, #tpu.memory_space<vmem>>, vector<1x32xbf16>
    %188 = arith.extf %187 : vector<1x32xbf16> to vector<1x32xf32>
    %189 = vector.broadcast %188 : vector<1x32xf32> to vector<8x32xf32>
    %190 = arith.addf %186, %189 : vector<8x32xf32>
    %191 = arith.extf %1 : vector<8x32xbf16> to vector<8x32xf32>
    %192 = arith.addf %190, %191 : vector<8x32xf32>
    %cst_123 = arith.constant dense<0.000000e+00> : vector<8xf32>
    %193 = vector.multi_reduction <add>, %192, %cst_123 [1] : vector<8x32xf32> to vector<8xf32>
    %194 = vector.shape_cast %193 : vector<8xf32> to vector<8x1xf32>
    %cst_124 = arith.constant 3.200000e+01 : f32
    %195 = vector.broadcast %cst_124 : f32 to vector<8x1xf32>
    %196 = arith.divf %194, %195 : vector<8x1xf32>
    %197 = vector.broadcast %196 : vector<8x1xf32> to vector<8x32xf32>
    %198 = arith.subf %192, %197 : vector<8x32xf32>
    %199 = arith.mulf %198, %198 : vector<8x32xf32>
    %cst_125 = arith.constant dense<0.000000e+00> : vector<8xf32>
    %200 = vector.multi_reduction <add>, %199, %cst_125 [1] : vector<8x32xf32> to vector<8xf32>
    %201 = vector.shape_cast %200 : vector<8xf32> to vector<8x1xf32>
    %cst_126 = arith.constant 3.200000e+01 : f32
    %202 = vector.broadcast %cst_126 : f32 to vector<8x1xf32>
    %203 = arith.divf %201, %202 : vector<8x1xf32>
    %204 = vector.broadcast %196 : vector<8x1xf32> to vector<8x32xf32>
    %205 = arith.subf %192, %204 : vector<8x32xf32>
    %cst_127 = arith.constant 9.99999974E-6 : f32
    %206 = vector.broadcast %cst_127 : f32 to vector<8x1xf32>
    %207 = arith.addf %203, %206 : vector<8x1xf32>
    %208 = math.rsqrt %207 : vector<8x1xf32>
    %209 = vector.broadcast %208 : vector<8x1xf32> to vector<8x32xf32>
    %210 = arith.mulf %205, %209 : vector<8x32xf32>
    %c0_128 = arith.constant 0 : index
    %c0_129 = arith.constant 0 : index
    %211 = vector.load %arg12[%c0_128, %c0_129] : memref<1x32xbf16, #tpu.memory_space<vmem>>, vector<1x32xbf16>
    %212 = arith.extf %211 : vector<1x32xbf16> to vector<1x32xf32>
    %213 = vector.broadcast %212 : vector<1x32xf32> to vector<8x32xf32>
    %214 = arith.mulf %210, %213 : vector<8x32xf32>
    %c0_130 = arith.constant 0 : index
    %c0_131 = arith.constant 0 : index
    %215 = vector.load %arg13[%c0_130, %c0_131] : memref<1x32xbf16, #tpu.memory_space<vmem>>, vector<1x32xbf16>
    %216 = arith.extf %215 : vector<1x32xbf16> to vector<1x32xf32>
    %217 = vector.broadcast %216 : vector<1x32xf32> to vector<8x32xf32>
    %218 = arith.addf %214, %217 : vector<8x32xf32>
    %219 = arith.truncf %218 : vector<8x32xf32> to vector<8x32xbf16>
    %c0_132 = arith.constant 0 : index
    %c0_133 = arith.constant 0 : index
    %c0_134 = arith.constant 0 : index
    %220 = vector.load %arg14[%c0_132, %c0_133, %c0_134] : memref<1x8x32xbf16, #tpu.memory_space<vmem>>, vector<1x8x32xbf16>
    %221 = vector.shape_cast %220 : vector<1x8x32xbf16> to vector<8x32xbf16>
    %222 = vector.shape_cast %219 : vector<8x32xbf16> to vector<1x8x32xbf16>
    tpu.vector_store %arg14[%c0_132, %c0_133, %c0_134], %222 {strides = array<i32>} : memref<1x8x32xbf16, #tpu.memory_space<vmem>>, vector<1x8x32xbf16>,
    return
  }
  func.func @transform_0(%arg0: i32, %arg1: i32) -> (i32, i32, i32) {
    %c0_i32 = arith.constant 0 : i32
    %c0_i32_0 = arith.constant 0 : i32
    return %arg0, %arg1, %c0_i32 : i32, i32, i32
  }
  func.func @transform_1(%arg0: i32, %arg1: i32) -> (i32, i32, i32) {
    %c0_i32 = arith.constant 0 : i32
    %c0_i32_0 = arith.constant 0 : i32
    %c0_i32_1 = arith.constant 0 : i32
    return %arg0, %c0_i32, %c0_i32_0 : i32, i32, i32
  }
  func.func @transform_2(%arg0: i32, %arg1: i32) -> (i32, i32, i32) {
    %c0_i32 = arith.constant 0 : i32
    %c0_i32_0 = arith.constant 0 : i32
    %c0_i32_1 = arith.constant 0 : i32
    %c0_i32_2 = arith.constant 0 : i32
    return %c0_i32, %c0_i32_0, %c0_i32_1 : i32, i32, i32
  }
  func.func @transform_3(%arg0: i32, %arg1: i32) -> (i32, i32, i32) {
    %c0_i32 = arith.constant 0 : i32
    %c0_i32_0 = arith.constant 0 : i32
    %c0_i32_1 = arith.constant 0 : i32
    %c0_i32_2 = arith.constant 0 : i32
    return %c0_i32, %c0_i32_0, %c0_i32_1 : i32, i32, i32
  }
  func.func @transform_4(%arg0: i32, %arg1: i32) -> (i32, i32, i32) {
    %c0_i32 = arith.constant 0 : i32
    %c0_i32_0 = arith.constant 0 : i32
    %c0_i32_1 = arith.constant 0 : i32
    %c0_i32_2 = arith.constant 0 : i32
    return %c0_i32, %c0_i32_0, %c0_i32_1 : i32, i32, i32
  }
  func.func @transform_5(%arg0: i32, %arg1: i32) -> (i32, i32, i32) {
    %c0_i32 = arith.constant 0 : i32
    %c0_i32_0 = arith.constant 0 : i32
    %c0_i32_1 = arith.constant 0 : i32
    %c0_i32_2 = arith.constant 0 : i32
    return %c0_i32, %c0_i32_0, %c0_i32_1 : i32, i32, i32
  }
  func.func @transform_6(%arg0: i32, %arg1: i32) -> (i32, i32, i32) {
    %c0_i32 = arith.constant 0 : i32
    %c0_i32_0 = arith.constant 0 : i32
    %c0_i32_1 = arith.constant 0 : i32
    %c0_i32_2 = arith.constant 0 : i32
    return %c0_i32, %c0_i32_0, %c0_i32_1 : i32, i32, i32
  }
  func.func @transform_7(%arg0: i32, %arg1: i32) -> (i32, i32, i32) {
    %c0_i32 = arith.constant 0 : i32
    %c0_i32_0 = arith.constant 0 : i32
    %c0_i32_1 = arith.constant 0 : i32
    %c0_i32_2 = arith.constant 0 : i32
    return %c0_i32, %c0_i32_0, %c0_i32_1 : i32, i32, i32
  }
  func.func @transform_8(%arg0: i32, %arg1: i32) -> (i32, i32, i32) {
    %c0_i32 = arith.constant 0 : i32
    %c0_i32_0 = arith.constant 0 : i32
    %c0_i32_1 = arith.constant 0 : i32
    %c0_i32_2 = arith.constant 0 : i32
    return %c0_i32, %c0_i32_0, %c0_i32_1 : i32, i32, i32
  }
  func.func @transform_9(%arg0: i32, %arg1: i32) -> (i32, i32) {
    %c0_i32 = arith.constant 0 : i32
    %c0_i32_0 = arith.constant 0 : i32
    %c0_i32_1 = arith.constant 0 : i32
    return %c0_i32, %c0_i32_0 : i32, i32
  }
  func.func @transform_10(%arg0: i32, %arg1: i32) -> (i32, i32) {
    %c0_i32 = arith.constant 0 : i32
    %c0_i32_0 = arith.constant 0 : i32
    %c0_i32_1 = arith.constant 0 : i32
    return %c0_i32, %c0_i32_0 : i32, i32
  }
  func.func @transform_11(%arg0: i32, %arg1: i32) -> (i32, i32) {
    %c0_i32 = arith.constant 0 : i32
    %c0_i32_0 = arith.constant 0 : i32
    %c0_i32_1 = arith.constant 0 : i32
    return %c0_i32, %c0_i32_0 : i32, i32
  }
  func.func @transform_12(%arg0: i32, %arg1: i32) -> (i32, i32, i32) {
    %c0_i32 = arith.constant 0 : i32
    %c0_i32_0 = arith.constant 0 : i32
    return %arg0, %arg1, %c0_i32 : i32, i32, i32
  }
}

</mosaic_0001>

<llo_original>
// kernel: encoder_forward.5
$region0: #{encoder_forward.5}
  #allocation0 [shape = 'u32[]', space=smem, size = 0x4, offset = 0x4, fixed_abs, tag = 'smem constant byte address 0x4 - core index']
  #allocation1 [shape = 'u32[144,128]{1,0:T(1,128)}', space=vmem, size = 0x12000, scoped, tag = 'internal scratch']
  %s0 = inlined_call_operand.vmem [shape: bf16[2,8,16], index: 0, kind: input, shape index: {}]
  %s1 = inlined_call_operand.vmem [shape: bf16[16,32], index: 1, kind: input, shape index: {}]
  %s2 = inlined_call_operand.vmem [shape: bf16[1,32], index: 2, kind: input, shape index: {}]
  %s3 = inlined_call_operand.vmem [shape: bf16[8,32], index: 3, kind: input, shape index: {}]
  %s4 = inlined_call_operand.vmem [shape: bf16[2,8,32], index: 4, kind: output, shape index: {}]
  %s5 = sld [smem:[#allocation0]]
  $region49: #{encoder_forward.5} parent=0
    _
  %s7 = ssub.s32 1, %s5
  %s8 = scalar_select 0, %s7, %s5
  loop: start=0, step=1, limit=4
  $region2: #{encoder_forward.5} parent=0 // loop_pre_header
    _
  $region3: #{encoder_forward.5} parent=0 // loop_header
    %s10 = sphi 0, %s14
    %p11 = scmp.ge.s32.totalorder %s10, 4
    %s17 = sphi 0, %s29
    %s18 = sphi 0, %s25
    %s19 = sphi 0, %s17
    %s20 = sphi 0, %s18
    %s21 = sphi 0, %s19
    %s22 = sphi 0, %s20
    %s34 = sphi 0, %s36
    %s37 = sphi 0, %s34
    %s38 = sphi 0, %s37
    %s54 = sphi 0, %s38
    %s58 = sphi 0, %s58
    %s60 = sphi 0, %s58
    %s61 = sphi 0, %s60
    %s75 = sphi 0, %s61
    %s79 = sphi 0, %s79
    %s81 = sphi 0, %s79
    %s82 = sphi 0, %s81
    %s96 = sphi 0, %s82
    %s102 = sphi 0, %s104
    %s105 = sphi 0, %s102
    %s106 = sphi 0, %s105
    %s122 = sphi 0, %s106
    %s130 = sphi 0, %s132
    %s133 = sphi 0, %s130
    %s134 = sphi 0, %s133
    %s150 = sphi 0, %s134
  $region4: #{encoder_forward.5} parent=0 // loop_header_branch
    %13 = sbr.rel (%p11) target = $region8
  $region5: #{encoder_forward.5} parent=0 // loop_body
    %s15 = ssub.s32 %s10, 1
    %s16 = ssub.s32 %s10, 2
    %s23 = sadd.s32 1, %s18
    %p24 = scmp.ge.s32.totalorder %s23, 1
    %s25 = scalar_select %p24, 0, %s23
    %s26 = sadd.s32 1, %s17
    %s27 = scalar_select %p24, %s26, %s17
    %p28 = scmp.ge.s32.totalorder %s27, 2
    %s29 = scalar_select %p28, 0, %s27
    %s30 = ssub.s32 %s17, %s29
    %s31 = ssub.s32 %s18, %s25
    %s32 = sor.u32 %s30, %s31
    %p33 = scmp.eq.s32.totalorder %s32, 0
    %s35 = sadd.s32 %s34, 1
    %s36 = scalar_select %p33, %s34, %s35
    %p39 = pneg %p33
    %p40 = scmp.eq.s32.totalorder %s10, 1
    %p41 = por %p39, %p40
    %p42 = scmp.ne.s32.totalorder %s34, %s37
    %p43 = scmp.eq.s32.totalorder %s10, 0
    %p44 = por %p42, %p43
    %p45 = scmp.ne.s32.totalorder %s34, %s37
    %p46 = scmp.eq.s32.totalorder %s15, 1
    %p47 = por %p45, %p46
    %p48 = scmp.ne.s32.totalorder %s37, %s38
    %p49 = scmp.eq.s32.totalorder %s15, 0
    %p50 = por %p48, %p49
    %p51 = scmp.ne.s32.totalorder %s37, %s38
    %p52 = scmp.eq.s32.totalorder %s16, 1
    %p53 = por %p51, %p52
    %p55 = scmp.ne.s32.totalorder %s38, %s54
    %p56 = scmp.eq.s32.totalorder %s16, 0
    %p57 = por %p55, %p56
    %s59 = sadd.s32 %s58, 1
    %p62 = scmp.eq.s32.totalorder %s10, 1
    %p63 = scmp.ne.s32.totalorder %s58, %s60
    %p64 = scmp.eq.s32.totalorder %s10, 0
    %p65 = por %p63, %p64
    %p66 = scmp.ne.s32.totalorder %s58, %s60
    %p67 = scmp.eq.s32.totalorder %s15, 1
    %p68 = por %p66, %p67
    %p69 = scmp.ne.s32.totalorder %s60, %s61
    %p70 = scmp.eq.s32.totalorder %s15, 0
    %p71 = por %p69, %p70
    %p72 = scmp.ne.s32.totalorder %s60, %s61
    %p73 = scmp.eq.s32.totalorder %s16, 1
    %p74 = por %p72, %p73
    %p76 = scmp.ne.s32.totalorder %s61, %s75
    %p77 = scmp.eq.s32.totalorder %s16, 0
    %p78 = por %p76, %p77
    %s80 = sadd.s32 %s79, 1
    %p83 = scmp.eq.s32.totalorder %s10, 1
    %p84 = scmp.ne.s32.totalorder %s79, %s81
    %p85 = scmp.eq.s32.totalorder %s10, 0
    %p86 = por %p84, %p85
    %p87 = scmp.ne.s32.totalorder %s79, %s81
    %p88 = scmp.eq.s32.totalorder %s15, 1
    %p89 = por %p87, %p88
    %p90 = scmp.ne.s32.totalorder %s81, %s82
    %p91 = scmp.eq.s32.totalorder %s15, 0
    %p92 = por %p90, %p91
    %p93 = scmp.ne.s32.totalorder %s81, %s82
    %p94 = scmp.eq.s32.totalorder %s16, 1
    %p95 = por %p93, %p94
    %p97 = scmp.ne.s32.totalorder %s82, %s96
    %p98 = scmp.eq.s32.totalorder %s16, 0
    %p99 = por %p97, %p98
    %s100 = ssub.s32 %s18, %s25
    %p101 = scmp.eq.s32.totalorder %s100, 0
    %s103 = sadd.s32 %s102, 1
    %s104 = scalar_select %p101, %s102, %s103
    %p107 = pneg %p101
    %p108 = scmp.eq.s32.totalorder %s10, 1
    %p109 = por %p107, %p108
    %p110 = scmp.ne.s32.totalorder %s102, %s105
    %p111 = scmp.eq.s32.totalorder %s10, 0
    %p112 = por %p110, %p111
    %p113 = scmp.ne.s32.totalorder %s102, %s105
    %p114 = scmp.eq.s32.totalorder %s15, 1
    %p115 = por %p113, %p114
    %p116 = scmp.ne.s32.totalorder %s105, %s106
    %p117 = scmp.eq.s32.totalorder %s15, 0
    %p118 = por %p116, %p117
    %p119 = scmp.ne.s32.totalorder %s105, %s106
    %p120 = scmp.eq.s32.totalorder %s16, 1
    %p121 = por %p119, %p120
    %p123 = scmp.ne.s32.totalorder %s106, %s122
    %p124 = scmp.eq.s32.totalorder %s16, 0
    %p125 = por %p123, %p124
    %s126 = ssub.s32 %s17, %s29
    %s127 = ssub.s32 %s18, %s25
    %s128 = sor.u32 %s126, %s127
    %p129 = scmp.eq.s32.totalorder %s128, 0
    %s131 = sadd.s32 %s130, 1
    %s132 = scalar_select %p129, %s130, %s131
    %p135 = pneg %p129
    %p136 = scmp.eq.s32.totalorder %s10, 1
    %p137 = por %p135, %p136
    %p138 = scmp.ne.s32.totalorder %s130, %s133
    %p139 = scmp.eq.s32.totalorder %s10, 0
    %p140 = por %p138, %p139
    %p141 = scmp.ne.s32.totalorder %s130, %s133
    %p142 = scmp.eq.s32.totalorder %s15, 1
    %p143 = por %p141, %p142
    %p144 = scmp.ne.s32.totalorder %s133, %s134
    %p145 = scmp.eq.s32.totalorder %s15, 0
    %p146 = por %p144, %p145
    %p147 = scmp.ne.s32.totalorder %s133, %s134
    %p148 = scmp.eq.s32.totalorder %s16, 1
    %p149 = por %p147, %p148
    %p151 = scmp.ne.s32.totalorder %s134, %s150
    %p152 = scmp.eq.s32.totalorder %s16, 0
    %p153 = por %p151, %p152
    %p154 = scmp.le.s32.totalorder 1, %s10
    %p155 = scmp.lt.s32.totalorder %s10, 3
    %p156 = pnand %p154, %p155
    %p157 = pneg %p156
    // Predicated region
    $region9: #{encoder_forward.5} parent=5 // pred_check
      _
    $region10: #{encoder_forward.5} parent=5 // pred_check_branch
      %159 = sbr.rel (%p156) target = $region12
    $region11: #{encoder_forward.5} parent=5 // pred_region
      %s160 = ssub.s32 %s10, 1
      // Predicated region
      $region13: #{encoder_forward.5} parent=11 // pred_check
        %p161 = pneg %p71
      $region14: #{encoder_forward.5} parent=11 // pred_check_branch
        %163 = sbr.rel (%p161) target = $region16
      $region15: #{encoder_forward.5} parent=11 // pred_region
        _
      $region16: #{encoder_forward.5} parent=11 // pred_fallthru
        _
      // Predicated region
      $region17: #{encoder_forward.5} parent=11 // pred_check
        %p164 = pneg %p92
      $region18: #{encoder_forward.5} parent=11 // pred_check_branch
        %166 = sbr.rel (%p164) target = $region20
      $region19: #{encoder_forward.5} parent=11 // pred_region
        _
      $region20: #{encoder_forward.5} parent=11 // pred_fallthru
        _
      // Predicated region
      $region21: #{encoder_forward.5} parent=11 // pred_check
        %p167 = pneg %p118
      $region22: #{encoder_forward.5} parent=11 // pred_check_branch
        %169 = sbr.rel (%p167) target = $region24
      $region23: #{encoder_forward.5} parent=11 // pred_region
        %p170 = scmp.lt.s32.totalorder %s20, 0
        %s171 = scalar_select %p170, %s20, 0
        %s172 = smul.addr %s171, 4
        %s173 = scalar_lea.vmem %s3, %s172
      $region24: #{encoder_forward.5} parent=11 // pred_fallthru
        _
    $region12: #{encoder_forward.5} parent=5 // pred_fallthru
      _
    %p174 = scmp.lt.s32.totalorder %s10, 2
    // Predicated region
    $region25: #{encoder_forward.5} parent=5 // pred_check
      %p175 = pneg %p174
    $region26: #{encoder_forward.5} parent=5 // pred_check_branch
      %177 = sbr.rel (%p175) target = $region28
    $region27: #{encoder_forward.5} parent=5 // pred_region
      // Predicated region
      $region29: #{encoder_forward.5} parent=27 // pred_check
        %p178 = pneg %p44
      $region30: #{encoder_forward.5} parent=27 // pred_check_branch
        %180 = sbr.rel (%p178) target = $region32
      $region31: #{encoder_forward.5} parent=27 // pred_region
        %p181 = scmp.lt.s32.totalorder %s17, 1
        %s182 = scalar_select %p181, %s17, 1
        %p183 = scmp.lt.s32.totalorder %s18, 0
        %s184 = scalar_select %p183, %s18, 0
        %s185 = sadd.s32 %s184, %s182
        %s186 = smul.addr %s185, 4
        %s187 = scalar_lea.vmem %s0, %s186
      $region32: #{encoder_forward.5} parent=27 // pred_fallthru
        _
    $region28: #{encoder_forward.5} parent=5 // pred_fallthru
      _
    %p188 = scmp.le.s32.totalorder 1, %s10
    %p189 = scmp.lt.s32.totalorder %s10, 3
    %p190 = pnand %p188, %p189
    %p191 = pneg %p190
    // Predicated region
    $region33: #{encoder_forward.5} parent=5 // pred_check
      _
    $region34: #{encoder_forward.5} parent=5 // pred_check_branch
      %193 = sbr.rel (%p190) target = $region36
    $region35: #{encoder_forward.5} parent=5 // pred_region
      %s194 = ssub.s32 %s10, 1
      %p195 = scmp.lt.s32.totalorder %s19, 1
      %s196 = scalar_select %p195, %s19, 1
      %p197 = scmp.lt.s32.totalorder %s20, 0
      %s198 = scalar_select %p197, %s20, 0
      %s199 = sadd.s32 %s198, %s196
      %s200 = smul.addr %s199, 4
      %s201 = scalar_lea.vmem %s0, %s200
      %p202 = pneg %p50
      %p203 = pneg %p47
      %p204 = pneg %p71
      %p205 = pneg %p68
      %p206 = pneg %p92
      %p207 = pneg %p89
      %p208 = scmp.lt.s32.totalorder %s20, 0
      %s209 = scalar_select %p208, %s20, 0
      %s210 = smul.addr %s209, 4
      %s211 = scalar_lea.vmem %s3, %s210
      %p212 = pneg %p118
      %p213 = pneg %p115
      %p214 = pneg %p146
      %p215 = pneg %p143
      %p216 = scmp.lt.s32.totalorder %s19, 1
      %s217 = scalar_select %p216, %s19, 1
      %p218 = scmp.lt.s32.totalorder %s20, 0
      %s219 = scalar_select %p218, %s20, 0
      %s220 = sadd.s32 %s219, %s217
      %s221 = smul.addr %s220, 4
      %s222 = scalar_lea.vmem %s4, %s221
      %p223 = scmp.lt.s32.totalorder %s19, 1
      %s224 = scalar_select %p223, %s19, 1
      %p225 = scmp.lt.s32.totalorder %s20, 0
      %s226 = scalar_select %p225, %s20, 0
      %s227 = sadd.s32 %s226, %s224
      %s228 = smul.addr %s227, 4
      %s229 = scalar_lea.vmem %s0, %s228
      %p230 = scmp.lt.s32.totalorder %s20, 0
      %s231 = scalar_select %p230, %s20, 0
      %s232 = smul.addr %s231, 4
      %s233 = scalar_lea.vmem %s3, %s232
      %p234 = scmp.lt.s32.totalorder %s19, 1
      %s235 = scalar_select %p234, %s19, 1
      %p236 = scmp.lt.s32.totalorder %s20, 0
      %s237 = scalar_select %p236, %s20, 0
      %s238 = sadd.s32 %s237, %s235
      %s239 = smul.addr %s238, 4
      %s240 = scalar_lea.vmem %s4, %s239
      %v242 = vld [vmem:[%s229] sm:$0xf]
      %v243 = vld [vmem:[%s1] sm:$0xf]
      %v244 = vld [vmem:[%s1 + $0x4] sm:$0xf]
      %v245 = vld [vmem:[%s2] sm:$0x1]
      %v246 = vunpack.c.l.bf16 %v245
      %v247 = vlaneseq
      %v248 = vshrl.u32 %v247, 7
      %v249 = vsub.s32 0, %v248
      %v250 = vrot.slane %v246, %v249
      %v253 = vunpack.c.l.b16 %v243
      %v254 = vunpack.c.l.b16 %v244
      %v255 = vpack.c.b16 %v254, %v253
      %vm257 = vcmask 130048
      %v259 = vsel %vm257, %v242, 0
      %261 = vmatprep.subr.bf16.mxu0 0
      %262 = vmatpush1.bf16.msra.mxu0 %v255
      %263 = vmatprep.subr.bf16.mxu0 0
      %264 = vmatpush1.bf16.msra.mxu0 0
      %265 = vmatprep.subr.bf16.mxu0 0
      %266 = vmatpush1.bf16.msra.mxu0 0
      %267 = vmatprep.subr.bf16.mxu0 0
      %268 = vmatpush1.bf16.msra.mxu0 0
      %269 = vmatprep.subr.bf16.mxu0 0
      %270 = vmatpush1.bf16.msra.mxu0 0
      %271 = vmatprep.subr.bf16.mxu0 0
      %272 = vmatpush1.bf16.msra.mxu0 0
      %273 = vmatprep.subr.bf16.mxu0 0
      %274 = vmatpush1.bf16.msra.mxu0 0
      %275 = vmatprep.subr.bf16.mxu0 0
      %276 = vmatpush1.bf16.msra.mxu0 0
      %277 = vmatprep.subr.bf16.mxu0 0
      %278 = vmatpush1.bf16.msra.mxu0 0
      %279 = vmatprep.subr.bf16.mxu0 0
      %280 = vmatpush1.bf16.msra.mxu0 0
      %281 = vmatprep.subr.bf16.mxu0 0
      %282 = vmatpush1.bf16.msra.mxu0 0
      %283 = vmatprep.subr.bf16.mxu0 0
      %284 = vmatpush1.bf16.msra.mxu0 0
      %285 = vmatprep.subr.bf16.mxu0 0
      %286 = vmatpush1.bf16.msra.mxu0 0
      %287 = vmatprep.subr.bf16.mxu0 0
      %288 = vmatpush1.bf16.msra.mxu0 0
      %289 = vmatprep.subr.bf16.mxu0 0
      %290 = vmatpush1.bf16.msra.mxu0 0
      %291 = vmatprep.subr.bf16.mxu0 0
      %292 = vmatpush1.bf16.msra.mxu0 0
      %293 = vmatprep.mubr.bf16.mxu0 0
      %294 = vmatmul.mubr.bf16.gmra.mrb[0].mxu0 %v259
      %v295 = vpop.f32.mrb[0].mxu0
      %v296 = vadd.f32 %v250, %v295
      %v297 = vpop.f32.mrb[0].mxu0
      %v298 = vpop.f32.mrb[0].mxu0
      %v299 = vpop.f32.mrb[0].mxu0
      %300 = vdwg.mxu0
      %v301 = vld [vmem:[%s233] sm:$0xf]
      %v302 = vunpack.c.l.bf16 %v301
      %v303 = vadd.f32 %v296, %v302
      %v304 = vpack.c.bf16 %v303, %v303
      %vm305 = vcmask 257024
      %306 = vst.msk [vmem:[%s240] sm:$0xf] %vm305, %v304
      %p307 = scmp.lt.s32.totalorder %s19, 1
      %s308 = scalar_select %p307, %s19, 1
      %p309 = scmp.lt.s32.totalorder %s20, 0
      %s310 = scalar_select %p309, %s20, 0
      %s311 = sadd.s32 %s310, %s308
      %s312 = smul.addr %s311, 4
      %s313 = scalar_lea.vmem %s4, %s312
      // Predicated region
      $region37: #{encoder_forward.5} parent=35 // pred_check
        %p314 = pneg %p143
      $region38: #{encoder_forward.5} parent=35 // pred_check_branch
        %316 = sbr.rel (%p314) target = $region40
      $region39: #{encoder_forward.5} parent=35 // pred_region
        _
      $region40: #{encoder_forward.5} parent=35 // pred_fallthru
        _
    $region36: #{encoder_forward.5} parent=5 // pred_fallthru
      _
    %p317 = scmp.le.s32.totalorder 2, %s10
    // Predicated region
    $region41: #{encoder_forward.5} parent=5 // pred_check
      %p318 = pneg %p317
    $region42: #{encoder_forward.5} parent=5 // pred_check_branch
      %320 = sbr.rel (%p318) target = $region44
    $region43: #{encoder_forward.5} parent=5 // pred_region
      %s321 = ssub.s32 %s10, 2
      // Predicated region
      $region45: #{encoder_forward.5} parent=43 // pred_check
        %p322 = pneg %p149
      $region46: #{encoder_forward.5} parent=43 // pred_check_branch
        %324 = sbr.rel (%p322) target = $region48
      $region47: #{encoder_forward.5} parent=43 // pred_region
        %p325 = scmp.lt.s32.totalorder %s21, 1
        %s326 = scalar_select %p325, %s21, 1
        %p327 = scmp.lt.s32.totalorder %s22, 0
        %s328 = scalar_select %p327, %s22, 0
        %s329 = sadd.s32 %s328, %s326
        %s330 = smul.addr %s329, 4
        %s331 = scalar_lea.vmem %s4, %s330
      $region48: #{encoder_forward.5} parent=43 // pred_fallthru
        _
    $region44: #{encoder_forward.5} parent=5 // pred_fallthru
      _
  $region6: #{encoder_forward.5} parent=0 // loop_footer
    %s14 = sadd.s32 1, %s10
  $region7: #{encoder_forward.5} parent=0 // loop_footer_branch
    %9 = sbr.rel target = $region3
  $region8: #{encoder_forward.5} parent=0 // loop_exit
    _

// kernel: encoder_forward.7
$region0: #{encoder_forward.7}
  #allocation0 [shape = 'u32[]', space=smem, size = 0x4, offset = 0x4, fixed_abs, tag = 'smem constant byte address 0x4 - core index']
  #allocation1 [shape = 'u32[144,128]{1,0:T(1,128)}', space=vmem, size = 0x12000, scoped, tag = 'internal scratch']
  %s0 = inlined_call_operand.vmem [shape: bf16[2,8,32], index: 0, kind: input, shape index: {}]
  %s1 = inlined_call_operand.vmem [shape: bf16[32,128], index: 1, kind: input, shape index: {}]
  %s2 = inlined_call_operand.vmem [shape: bf16[1,128], index: 2, kind: input, shape index: {}]
  %s3 = inlined_call_operand.vmem [shape: bf16[128,32], index: 3, kind: input, shape index: {}]
  %s4 = inlined_call_operand.vmem [shape: bf16[1,32], index: 4, kind: input, shape index: {}]
  %s5 = inlined_call_operand.vmem [shape: bf16[1,32], index: 5, kind: input, shape index: {}]
  %s6 = inlined_call_operand.vmem [shape: bf16[1,32], index: 6, kind: input, shape index: {}]
  %s7 = inlined_call_operand.vmem [shape: bf16[2,8,32], index: 7, kind: output, shape index: {}]
  %s8 = sld [smem:[#allocation0]]
  $region61: #{encoder_forward.7} parent=0
    _
  %s10 = ssub.s32 1, %s8
  %s11 = scalar_select 0, %s10, %s8
  loop: start=0, step=1, limit=4
  $region2: #{encoder_forward.7} parent=0 // loop_pre_header
    _
  $region3: #{encoder_forward.7} parent=0 // loop_header
    %s13 = sphi 0, %s17
    %p14 = scmp.ge.s32.totalorder %s13, 4
    %s20 = sphi 0, %s32
    %s21 = sphi 0, %s28
    %s22 = sphi 0, %s20
    %s23 = sphi 0, %s21
    %s24 = sphi 0, %s22
    %s25 = sphi 0, %s23
    %s37 = sphi 0, %s39
    %s40 = sphi 0, %s37
    %s41 = sphi 0, %s40
    %s57 = sphi 0, %s41
    %s61 = sphi 0, %s61
    %s63 = sphi 0, %s61
    %s64 = sphi 0, %s63
    %s78 = sphi 0, %s64
    %s82 = sphi 0, %s82
    %s84 = sphi 0, %s82
    %s85 = sphi 0, %s84
    %s99 = sphi 0, %s85
    %s103 = sphi 0, %s103
    %s105 = sphi 0, %s103
    %s106 = sphi 0, %s105
    %s120 = sphi 0, %s106
    %s124 = sphi 0, %s124
    %s126 = sphi 0, %s124
    %s127 = sphi 0, %s126
    %s141 = sphi 0, %s127
    %s145 = sphi 0, %s145
    %s147 = sphi 0, %s145
    %s148 = sphi 0, %s147
    %s162 = sphi 0, %s148
    %s166 = sphi 0, %s166
    %s168 = sphi 0, %s166
    %s169 = sphi 0, %s168
    %s183 = sphi 0, %s169
    %s191 = sphi 0, %s193
    %s194 = sphi 0, %s191
    %s195 = sphi 0, %s194
    %s211 = sphi 0, %s195
  $region4: #{encoder_forward.7} parent=0 // loop_header_branch
    %16 = sbr.rel (%p14) target = $region8
  $region5: #{encoder_forward.7} parent=0 // loop_body
    %s18 = ssub.s32 %s13, 1
    %s19 = ssub.s32 %s13, 2
    %s26 = sadd.s32 1, %s21
    %p27 = scmp.ge.s32.totalorder %s26, 1
    %s28 = scalar_select %p27, 0, %s26
    %s29 = sadd.s32 1, %s20
    %s30 = scalar_select %p27, %s29, %s20
    %p31 = scmp.ge.s32.totalorder %s30, 2
    %s32 = scalar_select %p31, 0, %s30
    %s33 = ssub.s32 %s20, %s32
    %s34 = ssub.s32 %s21, %s28
    %s35 = sor.u32 %s33, %s34
    %p36 = scmp.eq.s32.totalorder %s35, 0
    %s38 = sadd.s32 %s37, 1
    %s39 = scalar_select %p36, %s37, %s38
    %p42 = pneg %p36
    %p43 = scmp.eq.s32.totalorder %s13, 1
    %p44 = por %p42, %p43
    %p45 = scmp.ne.s32.totalorder %s37, %s40
    %p46 = scmp.eq.s32.totalorder %s13, 0
    %p47 = por %p45, %p46
    %p48 = scmp.ne.s32.totalorder %s37, %s40
    %p49 = scmp.eq.s32.totalorder %s18, 1
    %p50 = por %p48, %p49
    %p51 = scmp.ne.s32.totalorder %s40, %s41
    %p52 = scmp.eq.s32.totalorder %s18, 0
    %p53 = por %p51, %p52
    %p54 = scmp.ne.s32.totalorder %s40, %s41
    %p55 = scmp.eq.s32.totalorder %s19, 1
    %p56 = por %p54, %p55
    %p58 = scmp.ne.s32.totalorder %s41, %s57
    %p59 = scmp.eq.s32.totalorder %s19, 0
    %p60 = por %p58, %p59
    %s62 = sadd.s32 %s61, 1
    %p65 = scmp.eq.s32.totalorder %s13, 1
    %p66 = scmp.ne.s32.totalorder %s61, %s63
    %p67 = scmp.eq.s32.totalorder %s13, 0
    %p68 = por %p66, %p67
    %p69 = scmp.ne.s32.totalorder %s61, %s63
    %p70 = scmp.eq.s32.totalorder %s18, 1
    %p71 = por %p69, %p70
    %p72 = scmp.ne.s32.totalorder %s63, %s64
    %p73 = scmp.eq.s32.totalorder %s18, 0
    %p74 = por %p72, %p73
    %p75 = scmp.ne.s32.totalorder %s63, %s64
    %p76 = scmp.eq.s32.totalorder %s19, 1
    %p77 = por %p75, %p76
    %p79 = scmp.ne.s32.totalorder %s64, %s78
    %p80 = scmp.eq.s32.totalorder %s19, 0
    %p81 = por %p79, %p80
    %s83 = sadd.s32 %s82, 1
    %p86 = scmp.eq.s32.totalorder %s13, 1
    %p87 = scmp.ne.s32.totalorder %s82, %s84
    %p88 = scmp.eq.s32.totalorder %s13, 0
    %p89 = por %p87, %p88
    %p90 = scmp.ne.s32.totalorder %s82, %s84
    %p91 = scmp.eq.s32.totalorder %s18, 1
    %p92 = por %p90, %p91
    %p93 = scmp.ne.s32.totalorder %s84, %s85
    %p94 = scmp.eq.s32.totalorder %s18, 0
    %p95 = por %p93, %p94
    %p96 = scmp.ne.s32.totalorder %s84, %s85
    %p97 = scmp.eq.s32.totalorder %s19, 1
    %p98 = por %p96, %p97
    %p100 = scmp.ne.s32.totalorder %s85, %s99
    %p101 = scmp.eq.s32.totalorder %s19, 0
    %p102 = por %p100, %p101
    %s104 = sadd.s32 %s103, 1
    %p107 = scmp.eq.s32.totalorder %s13, 1
    %p108 = scmp.ne.s32.totalorder %s103, %s105
    %p109 = scmp.eq.s32.totalorder %s13, 0
    %p110 = por %p108, %p109
    %p111 = scmp.ne.s32.totalorder %s103, %s105
    %p112 = scmp.eq.s32.totalorder %s18, 1
    %p113 = por %p111, %p112
    %p114 = scmp.ne.s32.totalorder %s105, %s106
    %p115 = scmp.eq.s32.totalorder %s18, 0
    %p116 = por %p114, %p115
    %p117 = scmp.ne.s32.totalorder %s105, %s106
    %p118 = scmp.eq.s32.totalorder %s19, 1
    %p119 = por %p117, %p118
    %p121 = scmp.ne.s32.totalorder %s106, %s120
    %p122 = scmp.eq.s32.totalorder %s19, 0
    %p123 = por %p121, %p122
    %s125 = sadd.s32 %s124, 1
    %p128 = scmp.eq.s32.totalorder %s13, 1
    %p129 = scmp.ne.s32.totalorder %s124, %s126
    %p130 = scmp.eq.s32.totalorder %s13, 0
    %p131 = por %p129, %p130
    %p132 = scmp.ne.s32.totalorder %s124, %s126
    %p133 = scmp.eq.s32.totalorder %s18, 1
    %p134 = por %p132, %p133
    %p135 = scmp.ne.s32.totalorder %s126, %s127
    %p136 = scmp.eq.s32.totalorder %s18, 0
    %p137 = por %p135, %p136
    %p138 = scmp.ne.s32.totalorder %s126, %s127
    %p139 = scmp.eq.s32.totalorder %s19, 1
    %p140 = por %p138, %p139
    %p142 = scmp.ne.s32.totalorder %s127, %s141
    %p143 = scmp.eq.s32.totalorder %s19, 0
    %p144 = por %p142, %p143
    %s146 = sadd.s32 %s145, 1
    %p149 = scmp.eq.s32.totalorder %s13, 1
    %p150 = scmp.ne.s32.totalorder %s145, %s147
    %p151 = scmp.eq.s32.totalorder %s13, 0
    %p152 = por %p150, %p151
    %p153 = scmp.ne.s32.totalorder %s145, %s147
    %p154 = scmp.eq.s32.totalorder %s18, 1
    %p155 = por %p153, %p154
    %p156 = scmp.ne.s32.totalorder %s147, %s148
    %p157 = scmp.eq.s32.totalorder %s18, 0
    %p158 = por %p156, %p157
    %p159 = scmp.ne.s32.totalorder %s147, %s148
    %p160 = scmp.eq.s32.totalorder %s19, 1
    %p161 = por %p159, %p160
    %p163 = scmp.ne.s32.totalorder %s148, %s162
    %p164 = scmp.eq.s32.totalorder %s19, 0
    %p165 = por %p163, %p164
    %s167 = sadd.s32 %s166, 1
    %p170 = scmp.eq.s32.totalorder %s13, 1
    %p171 = scmp.ne.s32.totalorder %s166, %s168
    %p172 = scmp.eq.s32.totalorder %s13, 0
    %p173 = por %p171, %p172
    %p174 = scmp.ne.s32.totalorder %s166, %s168
    %p175 = scmp.eq.s32.totalorder %s18, 1
    %p176 = por %p174, %p175
    %p177 = scmp.ne.s32.totalorder %s168, %s169
    %p178 = scmp.eq.s32.totalorder %s18, 0
    %p179 = por %p177, %p178
    %p180 = scmp.ne.s32.totalorder %s168, %s169
    %p181 = scmp.eq.s32.totalorder %s19, 1
    %p182 = por %p180, %p181
    %p184 = scmp.ne.s32.totalorder %s169, %s183
    %p185 = scmp.eq.s32.totalorder %s19, 0
    %p186 = por %p184, %p185
    %s187 = ssub.s32 %s20, %s32
    %s188 = ssub.s32 %s21, %s28
    %s189 = sor.u32 %s187, %s188
    %p190 = scmp.eq.s32.totalorder %s189, 0
    %s192 = sadd.s32 %s191, 1
    %s193 = scalar_select %p190, %s191, %s192
    %p196 = pneg %p190
    %p197 = scmp.eq.s32.totalorder %s13, 1
    %p198 = por %p196, %p197
    %p199 = scmp.ne.s32.totalorder %s191, %s194
    %p200 = scmp.eq.s32.totalorder %s13, 0
    %p201 = por %p199, %p200
    %p202 = scmp.ne.s32.totalorder %s191, %s194
    %p203 = scmp.eq.s32.totalorder %s18, 1
    %p204 = por %p202, %p203
    %p205 = scmp.ne.s32.totalorder %s194, %s195
    %p206 = scmp.eq.s32.totalorder %s18, 0
    %p207 = por %p205, %p206
    %p208 = scmp.ne.s32.totalorder %s194, %s195
    %p209 = scmp.eq.s32.totalorder %s19, 1
    %p210 = por %p208, %p209
    %p212 = scmp.ne.s32.totalorder %s195, %s211
    %p213 = scmp.eq.s32.totalorder %s19, 0
    %p214 = por %p212, %p213
    %p215 = scmp.le.s32.totalorder 1, %s13
    %p216 = scmp.lt.s32.totalorder %s13, 3
    %p217 = pnand %p215, %p216
    %p218 = pneg %p217
    // Predicated region
    $region9: #{encoder_forward.7} parent=5 // pred_check
      _
    $region10: #{encoder_forward.7} parent=5 // pred_check_branch
      %220 = sbr.rel (%p217) target = $region12
    $region11: #{encoder_forward.7} parent=5 // pred_region
      %s221 = ssub.s32 %s13, 1
      // Predicated region
      $region13: #{encoder_forward.7} parent=11 // pred_check
        %p222 = pneg %p74
      $region14: #{encoder_forward.7} parent=11 // pred_check_branch
        %224 = sbr.rel (%p222) target = $region16
      $region15: #{encoder_forward.7} parent=11 // pred_region
        _
      $region16: #{encoder_forward.7} parent=11 // pred_fallthru
        _
      // Predicated region
      $region17: #{encoder_forward.7} parent=11 // pred_check
        %p225 = pneg %p95
      $region18: #{encoder_forward.7} parent=11 // pred_check_branch
        %227 = sbr.rel (%p225) target = $region20
      $region19: #{encoder_forward.7} parent=11 // pred_region
        _
      $region20: #{encoder_forward.7} parent=11 // pred_fallthru
        _
      // Predicated region
      $region21: #{encoder_forward.7} parent=11 // pred_check
        %p228 = pneg %p116
      $region22: #{encoder_forward.7} parent=11 // pred_check_branch
        %230 = sbr.rel (%p228) target = $region24
      $region23: #{encoder_forward.7} parent=11 // pred_region
        _
      $region24: #{encoder_forward.7} parent=11 // pred_fallthru
        _
      // Predicated region
      $region25: #{encoder_forward.7} parent=11 // pred_check
        %p231 = pneg %p137
      $region26: #{encoder_forward.7} parent=11 // pred_check_branch
        %233 = sbr.rel (%p231) target = $region28
      $region27: #{encoder_forward.7} parent=11 // pred_region
        _
      $region28: #{encoder_forward.7} parent=11 // pred_fallthru
        _
      // Predicated region
      $region29: #{encoder_forward.7} parent=11 // pred_check
        %p234 = pneg %p158
      $region30: #{encoder_forward.7} parent=11 // pred_check_branch
        %236 = sbr.rel (%p234) target = $region32
      $region31: #{encoder_forward.7} parent=11 // pred_region
        _
      $region32: #{encoder_forward.7} parent=11 // pred_fallthru
        _
      // Predicated region
      $region33: #{encoder_forward.7} parent=11 // pred_check
        %p237 = pneg %p179
      $region34: #{encoder_forward.7} parent=11 // pred_check_branch
        %239 = sbr.rel (%p237) target = $region36
      $region35: #{encoder_forward.7} parent=11 // pred_region
        _
      $region36: #{encoder_forward.7} parent=11 // pred_fallthru
        _
    $region12: #{encoder_forward.7} parent=5 // pred_fallthru
      _
    %p240 = scmp.lt.s32.totalorder %s13, 2
    // Predicated region
    $region37: #{encoder_forward.7} parent=5 // pred_check
      %p241 = pneg %p240
    $region38: #{encoder_forward.7} parent=5 // pred_check_branch
      %243 = sbr.rel (%p241) target = $region40
    $region39: #{encoder_forward.7} parent=5 // pred_region
      // Predicated region
      $region41: #{encoder_forward.7} parent=39 // pred_check
        %p244 = pneg %p47
      $region42: #{encoder_forward.7} parent=39 // pred_check_branch
        %246 = sbr.rel (%p244) target = $region44
      $region43: #{encoder_forward.7} parent=39 // pred_region
        %p247 = scmp.lt.s32.totalorder %s20, 1
        %s248 = scalar_select %p247, %s20, 1
        %p249 = scmp.lt.s32.totalorder %s21, 0
        %s250 = scalar_select %p249, %s21, 0
        %s251 = sadd.s32 %s250, %s248
        %s252 = smul.addr %s251, 4
        %s253 = scalar_lea.vmem %s0, %s252
      $region44: #{encoder_forward.7} parent=39 // pred_fallthru
        _
    $region40: #{encoder_forward.7} parent=5 // pred_fallthru
      _
    %p254 = scmp.le.s32.totalorder 1, %s13
    %p255 = scmp.lt.s32.totalorder %s13, 3
    %p256 = pnand %p254, %p255
    %p257 = pneg %p256
    // Predicated region
    $region45: #{encoder_forward.7} parent=5 // pred_check
      _
    $region46: #{encoder_forward.7} parent=5 // pred_check_branch
      %259 = sbr.rel (%p256) target = $region48
    $region47: #{encoder_forward.7} parent=5 // pred_region
      %s260 = ssub.s32 %s13, 1
      %p261 = scmp.lt.s32.totalorder %s22, 1
      %s262 = scalar_select %p261, %s22, 1
      %p263 = scmp.lt.s32.totalorder %s23, 0
      %s264 = scalar_select %p263, %s23, 0
      %s265 = sadd.s32 %s264, %s262
      %s266 = smul.addr %s265, 4
      %s267 = scalar_lea.vmem %s0, %s266
      %p268 = pneg %p53
      %p269 = pneg %p50
      %p270 = pneg %p74
      %p271 = pneg %p71
      %p272 = pneg %p95
      %p273 = pneg %p92
      %p274 = pneg %p116
      %p275 = pneg %p113
      %p276 = pneg %p137
      %p277 = pneg %p134
      %p278 = pneg %p158
      %p279 = pneg %p155
      %p280 = pneg %p179
      %p281 = pneg %p176
      %p282 = pneg %p207
      %p283 = pneg %p204
      %p284 = scmp.lt.s32.totalorder %s22, 1
      %s285 = scalar_select %p284, %s22, 1
      %p286 = scmp.lt.s32.totalorder %s23, 0
      %s287 = scalar_select %p286, %s23, 0
      %s288 = sadd.s32 %s287, %s285
      %s289 = smul.addr %s288, 4
      %s290 = scalar_lea.vmem %s7, %s289
      %p291 = scmp.lt.s32.totalorder %s22, 1
      %s292 = scalar_select %p291, %s22, 1
      %p293 = scmp.lt.s32.totalorder %s23, 0
      %s294 = scalar_select %p293, %s23, 0
      %s295 = sadd.s32 %s294, %s292
      %s296 = smul.addr %s295, 4
      %s297 = scalar_lea.vmem %s0, %s296
      %p298 = scmp.lt.s32.totalorder %s22, 1
      %s299 = scalar_select %p298, %s22, 1
      %p300 = scmp.lt.s32.totalorder %s23, 0
      %s301 = scalar_select %p300, %s23, 0
      %s302 = sadd.s32 %s301, %s299
      %s303 = smul.addr %s302, 4
      %s304 = scalar_lea.vmem %s7, %s303
      %v306 = vld [vmem:[%s297] sm:$0xf]
      %v307 = vld [vmem:[%s1] sm:$0xf]
      %v308 = vld [vmem:[%s1 + $0x4] sm:$0xf]
      %v309 = vld [vmem:[%s1 + $0x8] sm:$0xf]
      %v310 = vld [vmem:[%s1 + $0xc] sm:$0xf]
      %v311 = vld [vmem:[%s2] sm:$0x1]
      %v312 = vunpack.c.l.bf16 %v311
      %v313 = vlaneseq
      %v314 = vshrl.u32 %v313, 7
      %v315 = vsub.s32 0, %v314
      %v316 = vrot.slane %v312, %v315
      %v321 = vunpack.c.l.b16 %v307
      %v322 = vunpack.c.l.b16 %v308
      %v323 = vunpack.c.l.b16 %v309
      %v324 = vunpack.c.l.b16 %v310
      %v325 = vpack.c.b16 %v322, %v321
      %v326 = vpack.c.b16 %v324, %v323
      %vm329 = vcmask 261120
      %v331 = vsel %vm329, %v306, 0
      %333 = vmatprep.subr.bf16.mxu0 0
      %334 = vmatpush1.bf16.msra.mxu0 %v325
      %335 = vmatprep.subr.bf16.mxu0 0
      %336 = vmatpush1.bf16.msra.mxu0 %v326
      %337 = vmatprep.subr.bf16.mxu0 0
      %338 = vmatpush1.bf16.msra.mxu0 0
      %339 = vmatprep.subr.bf16.mxu0 0
      %340 = vmatpush1.bf16.msra.mxu0 0
      %341 = vmatprep.subr.bf16.mxu0 0
      %342 = vmatpush1.bf16.msra.mxu0 0
      %343 = vmatprep.subr.bf16.mxu0 0
      %344 = vmatpush1.bf16.msra.mxu0 0
      %345 = vmatprep.subr.bf16.mxu0 0
      %346 = vmatpush1.bf16.msra.mxu0 0
      %347 = vmatprep.subr.bf16.mxu0 0
      %348 = vmatpush1.bf16.msra.mxu0 0
      %349 = vmatprep.subr.bf16.mxu0 0
      %350 = vmatpush1.bf16.msra.mxu0 0
      %351 = vmatprep.subr.bf16.mxu0 0
      %352 = vmatpush1.bf16.msra.mxu0 0
      %353 = vmatprep.subr.bf16.mxu0 0
      %354 = vmatpush1.bf16.msra.mxu0 0
      %355 = vmatprep.subr.bf16.mxu0 0
      %356 = vmatpush1.bf16.msra.mxu0 0
      %357 = vmatprep.subr.bf16.mxu0 0
      %358 = vmatpush1.bf16.msra.mxu0 0
      %359 = vmatprep.subr.bf16.mxu0 0
      %360 = vmatpush1.bf16.msra.mxu0 0
      %361 = vmatprep.subr.bf16.mxu0 0
      %362 = vmatpush1.bf16.msra.mxu0 0
      %363 = vmatprep.subr.bf16.mxu0 0
      %364 = vmatpush1.bf16.msra.mxu0 0
      %365 = vmatprep.mubr.bf16.mxu0 0
      %366 = vmatmul.mubr.bf16.gmra.mrb[0].mxu0 %v331
      %v367 = vpop.f32.mrb[0].mxu0
      %v368 = vadd.f32 %v316, %v367
      %v369 = vpop.f32.mrb[0].mxu0
      %v370 = vpop.f32.mrb[0].mxu0
      %v371 = vpop.f32.mrb[0].mxu0
      %372 = vdwg.mxu0
      %v373 = vmul.f32 %v368, %v368
      %v374 = vmul.f32 %v368, %v373
      %v375 = vmul.f32 %v374, 0.044715
      %v376 = vadd.f32 %v368, %v375
      %v377 = vmul.f32 %v376, 0.7978846
      %v378 = vtanh.pop %v377
      %v379 = vadd.f32 %v378, 1.0
      %v380 = vmul.f32 %v379, 0.5
      %v381 = vmul.f32 %v368, %v380
      %v382 = vpack.c.bf16 %v381, %v381
      %v383 = vld [vmem:[%s3] sm:$0xf]
      %v384 = vld [vmem:[%s3 + $0x4] sm:$0xf]
      %v385 = vld [vmem:[%s3 + $0x8] sm:$0xf]
      %v386 = vld [vmem:[%s3 + $0xc] sm:$0xf]
      %v387 = vld [vmem:[%s3 + $0x10] sm:$0xf]
      %v388 = vld [vmem:[%s3 + $0x14] sm:$0xf]
      %v389 = vld [vmem:[%s3 + $0x18] sm:$0xf]
      %v390 = vld [vmem:[%s3 + $0x1c] sm:$0xf]
      %v391 = vld [vmem:[%s3 + $0x20] sm:$0xf]
      %v392 = vld [vmem:[%s3 + $0x24] sm:$0xf]
      %v393 = vld [vmem:[%s3 + $0x28] sm:$0xf]
      %v394 = vld [vmem:[%s3 + $0x2c] sm:$0xf]
      %v395 = vld [vmem:[%s3 + $0x30] sm:$0xf]
      %v396 = vld [vmem:[%s3 + $0x34] sm:$0xf]
      %v397 = vld [vmem:[%s3 + $0x38] sm:$0xf]
      %v398 = vld [vmem:[%s3 + $0x3c] sm:$0xf]
      %v399 = vld [vmem:[%s4] sm:$0x1]
      %v400 = vunpack.c.l.bf16 %v399
      %v401 = vlaneseq
      %v402 = vshrl.u32 %v401, 7
      %v403 = vsub.s32 0, %v402
      %v404 = vrot.slane %v400, %v403
      %v421 = vunpack.c.l.b16 %v383
      %v422 = vunpack.c.l.b16 %v384
      %v423 = vunpack.c.l.b16 %v385
      %v424 = vunpack.c.l.b16 %v386
      %v425 = vunpack.c.l.b16 %v387
      %v426 = vunpack.c.l.b16 %v388
      %v427 = vunpack.c.l.b16 %v389
      %v428 = vunpack.c.l.b16 %v390
      %v429 = vunpack.c.l.b16 %v391
      %v430 = vunpack.c.l.b16 %v392
      %v431 = vunpack.c.l.b16 %v393
      %v432 = vunpack.c.l.b16 %v394
      %v433 = vunpack.c.l.b16 %v395
      %v434 = vunpack.c.l.b16 %v396
      %v435 = vunpack.c.l.b16 %v397
      %v436 = vunpack.c.l.b16 %v398
      %v437 = vpack.c.b16 %v422, %v421
      %v438 = vpack.c.b16 %v424, %v423
      %v439 = vpack.c.b16 %v426, %v425
      %v440 = vpack.c.b16 %v428, %v427
      %v441 = vpack.c.b16 %v430, %v429
      %v442 = vpack.c.b16 %v432, %v431
      %v443 = vpack.c.b16 %v434, %v433
      %v444 = vpack.c.b16 %v436, %v435
      %453 = vmatprep.subr.bf16.mxu0 0
      %454 = vmatpush1.bf16.msra.mxu0 %v437
      %455 = vmatprep.subr.bf16.mxu0 0
      %456 = vmatpush1.bf16.msra.mxu0 %v438
      %457 = vmatprep.subr.bf16.mxu0 0
      %458 = vmatpush1.bf16.msra.mxu0 %v439
      %459 = vmatprep.subr.bf16.mxu0 0
      %460 = vmatpush1.bf16.msra.mxu0 %v440
      %461 = vmatprep.subr.bf16.mxu0 0
      %462 = vmatpush1.bf16.msra.mxu0 %v441
      %463 = vmatprep.subr.bf16.mxu0 0
      %464 = vmatpush1.bf16.msra.mxu0 %v442
      %465 = vmatprep.subr.bf16.mxu0 0
      %466 = vmatpush1.bf16.msra.mxu0 %v443
      %467 = vmatprep.subr.bf16.mxu0 0
      %468 = vmatpush1.bf16.msra.mxu0 %v444
      %469 = vmatprep.subr.bf16.mxu0 0
      %470 = vmatpush1.bf16.msra.mxu0 0
      %471 = vmatprep.subr.bf16.mxu0 0
      %472 = vmatpush1.bf16.msra.mxu0 0
      %473 = vmatprep.subr.bf16.mxu0 0
      %474 = vmatpush1.bf16.msra.mxu0 0
      %475 = vmatprep.subr.bf16.mxu0 0
      %476 = vmatpush1.bf16.msra.mxu0 0
      %477 = vmatprep.subr.bf16.mxu0 0
      %478 = vmatpush1.bf16.msra.mxu0 0
      %479 = vmatprep.subr.bf16.mxu0 0
      %480 = vmatpush1.bf16.msra.mxu0 0
      %481 = vmatprep.subr.bf16.mxu0 0
      %482 = vmatpush1.bf16.msra.mxu0 0
      %483 = vmatprep.subr.bf16.mxu0 0
      %484 = vmatpush1.bf16.msra.mxu0 0
      %485 = vmatprep.mubr.bf16.mxu0 0
      %486 = vmatmul.mubr.bf16.gmra.mrb[0].mxu0 %v382
      %v487 = vpop.f32.mrb[0].mxu0
      %v488 = vadd.f32 %v404, %v487
      %v489 = vpop.f32.mrb[0].mxu0
      %v490 = vpop.f32.mrb[0].mxu0
      %v491 = vpop.f32.mrb[0].mxu0
      %492 = vdwg.mxu0
      %v493 = vunpack.c.l.bf16 %v306
      %v494 = vadd.f32 %v488, %v493
      %v495 = vsel %vm329, %v494, 0.0
      %496 = vadd.xlane.f32.xlu0 %v495
      %v497 = vpop.xlane.xlu0 %496
      %v498 = vrcp.pop 32.0
      %v499 = vmul.f32 %v497, %v498
      %v500 = vsub.f32 %v494, %v499
      %v501 = vmul.f32 %v500, %v500
      %v502 = vsel %vm329, %v501, 0.0
      %503 = vadd.xlane.f32.xlu0 %v502
      %v504 = vpop.xlane.xlu0 %503
      %v505 = vmul.f32 %v504, %v498
      %v506 = vadd.f32 %v505, 1e-05
      %v507 = vrsqrt.pop %v506
      %v508 = vmul.f32 %v500, %v507
      %v509 = vld [vmem:[%s5] sm:$0x1]
      %v510 = vunpack.c.l.bf16 %v509
      %v511 = vlaneseq
      %v512 = vshrl.u32 %v511, 7
      %v513 = vsub.s32 0, %v512
      %v514 = vrot.slane %v510, %v513
      %v515 = vmul.f32 %v508, %v514
      %v516 = vld [vmem:[%s6] sm:$0x1]
      %v517 = vunpack.c.l.bf16 %v516
      %v518 = vlaneseq
      %v519 = vshrl.u32 %v518, 7
      %v520 = vsub.s32 0, %v519
      %v521 = vrot.slane %v517, %v520
      %v522 = vadd.f32 %v515, %v521
      %v523 = vpack.c.bf16 %v522, %v522
      %vm524 = vcmask 257024
      %525 = vst.msk [vmem:[%s304] sm:$0xf] %vm524, %v523
      %p526 = scmp.lt.s32.totalorder %s22, 1
      %s527 = scalar_select %p526, %s22, 1
      %p528 = scmp.lt.s32.totalorder %s23, 0
      %s529 = scalar_select %p528, %s23, 0
      %s530 = sadd.s32 %s529, %s527
      %s531 = smul.addr %s530, 4
      %s532 = scalar_lea.vmem %s7, %s531
      // Predicated region
      $region49: #{encoder_forward.7} parent=47 // pred_check
        %p533 = pneg %p204
      $region50: #{encoder_forward.7} parent=47 // pred_check_branch
        %535 = sbr.rel (%p533) target = $region52
      $region51: #{encoder_forward.7} parent=47 // pred_region
        _
      $region52: #{encoder_forward.7} parent=47 // pred_fallthru
        _
    $region48: #{encoder_forward.7} parent=5 // pred_fallthru
      _
    %p536 = scmp.le.s32.totalorder 2, %s13
    // Predicated region
    $region53: #{encoder_forward.7} parent=5 // pred_check
      %p537 = pneg %p536
    $region54: #{encoder_forward.7} parent=5 // pred_check_branch
      %539 = sbr.rel (%p537) target = $region56
    $region55: #{encoder_forward.7} parent=5 // pred_region
      %s540 = ssub.s32 %s13, 2
      // Predicated region
      $region57: #{encoder_forward.7} parent=55 // pred_check
        %p541 = pneg %p210
      $region58: #{encoder_forward.7} parent=55 // pred_check_branch
        %543 = sbr.rel (%p541) target = $region60
      $region59: #{encoder_forward.7} parent=55 // pred_region
        %p544 = scmp.lt.s32.totalorder %s24, 1
        %s545 = scalar_select %p544, %s24, 1
        %p546 = scmp.lt.s32.totalorder %s25, 0
        %s547 = scalar_select %p546, %s25, 0
        %s548 = sadd.s32 %s547, %s545
        %s549 = smul.addr %s548, 4
        %s550 = scalar_lea.vmem %s7, %s549
      $region60: #{encoder_forward.7} parent=55 // pred_fallthru
        _
    $region56: #{encoder_forward.7} parent=5 // pred_fallthru
      _
  $region6: #{encoder_forward.7} parent=0 // loop_footer
    %s17 = sadd.s32 1, %s13
  $region7: #{encoder_forward.7} parent=0 // loop_footer_branch
    %12 = sbr.rel target = $region3
  $region8: #{encoder_forward.7} parent=0 // loop_exit
    _

// kernel: encoder_forward.6
$region0: #{encoder_forward.6}
  #allocation0 [shape = 'u32[]', space=smem, size = 0x4, offset = 0x4, fixed_abs, tag = 'smem constant byte address 0x4 - core index']
  #allocation1 [shape = 'u32[144,128]{1,0:T(1,128)}', space=vmem, size = 0x12000, scoped, tag = 'internal scratch']
  %s0 = inlined_call_operand.vmem [shape: bf16[2,8,32], index: 0, kind: input, shape index: {}, may-alias: {0,1}]
  %s1 = inlined_call_operand.vmem [shape: bf16[2,8,32], index: 1, kind: input, shape index: {}, may-alias: {0,1}]
  %s2 = inlined_call_operand.vmem [shape: bf16[4,32,8], index: 2, kind: input, shape index: {}]
  %s3 = inlined_call_operand.vmem [shape: bf16[4,32,8], index: 3, kind: input, shape index: {}]
  %s4 = inlined_call_operand.vmem [shape: bf16[4,32,8], index: 4, kind: input, shape index: {}]
  %s5 = inlined_call_operand.vmem [shape: bf16[4,1,8], index: 5, kind: input, shape index: {}]
  %s6 = inlined_call_operand.vmem [shape: bf16[4,1,8], index: 6, kind: input, shape index: {}]
  %s7 = inlined_call_operand.vmem [shape: bf16[4,1,8], index: 7, kind: input, shape index: {}]
  %s8 = inlined_call_operand.vmem [shape: bf16[4,8,32], index: 8, kind: input, shape index: {}]
  %s9 = inlined_call_operand.vmem [shape: bf16[1,32], index: 9, kind: input, shape index: {}]
  %s10 = inlined_call_operand.vmem [shape: bf16[1,32], index: 10, kind: input, shape index: {}]
  %s11 = inlined_call_operand.vmem [shape: bf16[1,32], index: 11, kind: input, shape index: {}]
  %s12 = inlined_call_operand.vmem [shape: bf16[2,8,32], index: 12, kind: output, shape index: {}]
  %s13 = sld [smem:[#allocation0]]
  $region81: #{encoder_forward.6} parent=0
    _
  %s15 = ssub.s32 1, %s13
  %s16 = scalar_select 0, %s15, %s13
  loop: start=0, step=1, limit=4
  $region2: #{encoder_forward.6} parent=0 // loop_pre_header
    _
  $region3: #{encoder_forward.6} parent=0 // loop_header
    %s18 = sphi 0, %s22
    %p19 = scmp.ge.s32.totalorder %s18, 4
    %s25 = sphi 0, %s37
    %s26 = sphi 0, %s33
    %s27 = sphi 0, %s25
    %s28 = sphi 0, %s26
    %s29 = sphi 0, %s27
    %s30 = sphi 0, %s28
    %s42 = sphi 0, %s44
    %s45 = sphi 0, %s42
    %s46 = sphi 0, %s45
    %s62 = sphi 0, %s46
    %s68 = sphi 0, %s70
    %s71 = sphi 0, %s68
    %s72 = sphi 0, %s71
    %s88 = sphi 0, %s72
    %s92 = sphi 0, %s92
    %s94 = sphi 0, %s92
    %s95 = sphi 0, %s94
    %s109 = sphi 0, %s95
    %s113 = sphi 0, %s113
    %s115 = sphi 0, %s113
    %s116 = sphi 0, %s115
    %s130 = sphi 0, %s116
    %s134 = sphi 0, %s134
    %s136 = sphi 0, %s134
    %s137 = sphi 0, %s136
    %s151 = sphi 0, %s137
    %s155 = sphi 0, %s155
    %s157 = sphi 0, %s155
    %s158 = sphi 0, %s157
    %s172 = sphi 0, %s158
    %s176 = sphi 0, %s176
    %s178 = sphi 0, %s176
    %s179 = sphi 0, %s178
    %s193 = sphi 0, %s179
    %s197 = sphi 0, %s197
    %s199 = sphi 0, %s197
    %s200 = sphi 0, %s199
    %s214 = sphi 0, %s200
    %s218 = sphi 0, %s218
    %s220 = sphi 0, %s218
    %s221 = sphi 0, %s220
    %s235 = sphi 0, %s221
    %s239 = sphi 0, %s239
    %s241 = sphi 0, %s239
    %s242 = sphi 0, %s241
    %s256 = sphi 0, %s242
    %s260 = sphi 0, %s260
    %s262 = sphi 0, %s260
    %s263 = sphi 0, %s262
    %s277 = sphi 0, %s263
    %s281 = sphi 0, %s281
    %s283 = sphi 0, %s281
    %s284 = sphi 0, %s283
    %s298 = sphi 0, %s284
    %s306 = sphi 0, %s308
    %s309 = sphi 0, %s306
    %s310 = sphi 0, %s309
    %s326 = sphi 0, %s310
  $region4: #{encoder_forward.6} parent=0 // loop_header_branch
    %21 = sbr.rel (%p19) target = $region8
  $region5: #{encoder_forward.6} parent=0 // loop_body
    %s23 = ssub.s32 %s18, 1
    %s24 = ssub.s32 %s18, 2
    %s31 = sadd.s32 1, %s26
    %p32 = scmp.ge.s32.totalorder %s31, 1
    %s33 = scalar_select %p32, 0, %s31
    %s34 = sadd.s32 1, %s25
    %s35 = scalar_select %p32, %s34, %s25
    %p36 = scmp.ge.s32.totalorder %s35, 2
    %s37 = scalar_select %p36, 0, %s35
    %s38 = ssub.s32 %s25, %s37
    %s39 = ssub.s32 %s26, %s33
    %s40 = sor.u32 %s38, %s39
    %p41 = scmp.eq.s32.totalorder %s40, 0
    %s43 = sadd.s32 %s42, 1
    %s44 = scalar_select %p41, %s42, %s43
    %p47 = pneg %p41
    %p48 = scmp.eq.s32.totalorder %s18, 1
    %p49 = por %p47, %p48
    %p50 = scmp.ne.s32.totalorder %s42, %s45
    %p51 = scmp.eq.s32.totalorder %s18, 0
    %p52 = por %p50, %p51
    %p53 = scmp.ne.s32.totalorder %s42, %s45
    %p54 = scmp.eq.s32.totalorder %s23, 1
    %p55 = por %p53, %p54
    %p56 = scmp.ne.s32.totalorder %s45, %s46
    %p57 = scmp.eq.s32.totalorder %s23, 0
    %p58 = por %p56, %p57
    %p59 = scmp.ne.s32.totalorder %s45, %s46
    %p60 = scmp.eq.s32.totalorder %s24, 1
    %p61 = por %p59, %p60
    %p63 = scmp.ne.s32.totalorder %s46, %s62
    %p64 = scmp.eq.s32.totalorder %s24, 0
    %p65 = por %p63, %p64
    %s66 = ssub.s32 %s25, %s37
    %p67 = scmp.eq.s32.totalorder %s66, 0
    %s69 = sadd.s32 %s68, 1
    %s70 = scalar_select %p67, %s68, %s69
    %p73 = pneg %p67
    %p74 = scmp.eq.s32.totalorder %s18, 1
    %p75 = por %p73, %p74
    %p76 = scmp.ne.s32.totalorder %s68, %s71
    %p77 = scmp.eq.s32.totalorder %s18, 0
    %p78 = por %p76, %p77
    %p79 = scmp.ne.s32.totalorder %s68, %s71
    %p80 = scmp.eq.s32.totalorder %s23, 1
    %p81 = por %p79, %p80
    %p82 = scmp.ne.s32.totalorder %s71, %s72
    %p83 = scmp.eq.s32.totalorder %s23, 0
    %p84 = por %p82, %p83
    %p85 = scmp.ne.s32.totalorder %s71, %s72
    %p86 = scmp.eq.s32.totalorder %s24, 1
    %p87 = por %p85, %p86
    %p89 = scmp.ne.s32.totalorder %s72, %s88
    %p90 = scmp.eq.s32.totalorder %s24, 0
    %p91 = por %p89, %p90
    %s93 = sadd.s32 %s92, 1
    %p96 = scmp.eq.s32.totalorder %s18, 1
    %p97 = scmp.ne.s32.totalorder %s92, %s94
    %p98 = scmp.eq.s32.totalorder %s18, 0
    %p99 = por %p97, %p98
    %p100 = scmp.ne.s32.totalorder %s92, %s94
    %p101 = scmp.eq.s32.totalorder %s23, 1
    %p102 = por %p100, %p101
    %p103 = scmp.ne.s32.totalorder %s94, %s95
    %p104 = scmp.eq.s32.totalorder %s23, 0
    %p105 = por %p103, %p104
    %p106 = scmp.ne.s32.totalorder %s94, %s95
    %p107 = scmp.eq.s32.totalorder %s24, 1
    %p108 = por %p106, %p107
    %p110 = scmp.ne.s32.totalorder %s95, %s109
    %p111 = scmp.eq.s32.totalorder %s24, 0
    %p112 = por %p110, %p111
    %s114 = sadd.s32 %s113, 1
    %p117 = scmp.eq.s32.totalorder %s18, 1
    %p118 = scmp.ne.s32.totalorder %s113, %s115
    %p119 = scmp.eq.s32.totalorder %s18, 0
    %p120 = por %p118, %p119
    %p121 = scmp.ne.s32.totalorder %s113, %s115
    %p122 = scmp.eq.s32.totalorder %s23, 1
    %p123 = por %p121, %p122
    %p124 = scmp.ne.s32.totalorder %s115, %s116
    %p125 = scmp.eq.s32.totalorder %s23, 0
    %p126 = por %p124, %p125
    %p127 = scmp.ne.s32.totalorder %s115, %s116
    %p128 = scmp.eq.s32.totalorder %s24, 1
    %p129 = por %p127, %p128
    %p131 = scmp.ne.s32.totalorder %s116, %s130
    %p132 = scmp.eq.s32.totalorder %s24, 0
    %p133 = por %p131, %p132
    %s135 = sadd.s32 %s134, 1
    %p138 = scmp.eq.s32.totalorder %s18, 1
    %p139 = scmp.ne.s32.totalorder %s134, %s136
    %p140 = scmp.eq.s32.totalorder %s18, 0
    %p141 = por %p139, %p140
    %p142 = scmp.ne.s32.totalorder %s134, %s136
    %p143 = scmp.eq.s32.totalorder %s23, 1
    %p144 = por %p142, %p143
    %p145 = scmp.ne.s32.totalorder %s136, %s137
    %p146 = scmp.eq.s32.totalorder %s23, 0
    %p147 = por %p145, %p146
    %p148 = scmp.ne.s32.totalorder %s136, %s137
    %p149 = scmp.eq.s32.totalorder %s24, 1
    %p150 = por %p148, %p149
    %p152 = scmp.ne.s32.totalorder %s137, %s151
    %p153 = scmp.eq.s32.totalorder %s24, 0
    %p154 = por %p152, %p153
    %s156 = sadd.s32 %s155, 1
    %p159 = scmp.eq.s32.totalorder %s18, 1
    %p160 = scmp.ne.s32.totalorder %s155, %s157
    %p161 = scmp.eq.s32.totalorder %s18, 0
    %p162 = por %p160, %p161
    %p163 = scmp.ne.s32.totalorder %s155, %s157
    %p164 = scmp.eq.s32.totalorder %s23, 1
    %p165 = por %p163, %p164
    %p166 = scmp.ne.s32.totalorder %s157, %s158
    %p167 = scmp.eq.s32.totalorder %s23, 0
    %p168 = por %p166, %p167
    %p169 = scmp.ne.s32.totalorder %s157, %s158
    %p170 = scmp.eq.s32.totalorder %s24, 1
    %p171 = por %p169, %p170
    %p173 = scmp.ne.s32.totalorder %s158, %s172
    %p174 = scmp.eq.s32.totalorder %s24, 0
    %p175 = por %p173, %p174
    %s177 = sadd.s32 %s176, 1
    %p180 = scmp.eq.s32.totalorder %s18, 1
    %p181 = scmp.ne.s32.totalorder %s176, %s178
    %p182 = scmp.eq.s32.totalorder %s18, 0
    %p183 = por %p181, %p182
    %p184 = scmp.ne.s32.totalorder %s176, %s178
    %p185 = scmp.eq.s32.totalorder %s23, 1
    %p186 = por %p184, %p185
    %p187 = scmp.ne.s32.totalorder %s178, %s179
    %p188 = scmp.eq.s32.totalorder %s23, 0
    %p189 = por %p187, %p188
    %p190 = scmp.ne.s32.totalorder %s178, %s179
    %p191 = scmp.eq.s32.totalorder %s24, 1
    %p192 = por %p190, %p191
    %p194 = scmp.ne.s32.totalorder %s179, %s193
    %p195 = scmp.eq.s32.totalorder %s24, 0
    %p196 = por %p194, %p195
    %s198 = sadd.s32 %s197, 1
    %p201 = scmp.eq.s32.totalorder %s18, 1
    %p202 = scmp.ne.s32.totalorder %s197, %s199
    %p203 = scmp.eq.s32.totalorder %s18, 0
    %p204 = por %p202, %p203
    %p205 = scmp.ne.s32.totalorder %s197, %s199
    %p206 = scmp.eq.s32.totalorder %s23, 1
    %p207 = por %p205, %p206
    %p208 = scmp.ne.s32.totalorder %s199, %s200
    %p209 = scmp.eq.s32.totalorder %s23, 0
    %p210 = por %p208, %p209
    %p211 = scmp.ne.s32.totalorder %s199, %s200
    %p212 = scmp.eq.s32.totalorder %s24, 1
    %p213 = por %p211, %p212
    %p215 = scmp.ne.s32.totalorder %s200, %s214
    %p216 = scmp.eq.s32.totalorder %s24, 0
    %p217 = por %p215, %p216
    %s219 = sadd.s32 %s218, 1
    %p222 = scmp.eq.s32.totalorder %s18, 1
    %p223 = scmp.ne.s32.totalorder %s218, %s220
    %p224 = scmp.eq.s32.totalorder %s18, 0
    %p225 = por %p223, %p224
    %p226 = scmp.ne.s32.totalorder %s218, %s220
    %p227 = scmp.eq.s32.totalorder %s23, 1
    %p228 = por %p226, %p227
    %p229 = scmp.ne.s32.totalorder %s220, %s221
    %p230 = scmp.eq.s32.totalorder %s23, 0
    %p231 = por %p229, %p230
    %p232 = scmp.ne.s32.totalorder %s220, %s221
    %p233 = scmp.eq.s32.totalorder %s24, 1
    %p234 = por %p232, %p233
    %p236 = scmp.ne.s32.totalorder %s221, %s235
    %p237 = scmp.eq.s32.totalorder %s24, 0
    %p238 = por %p236, %p237
    %s240 = sadd.s32 %s239, 1
    %p243 = scmp.eq.s32.totalorder %s18, 1
    %p244 = scmp.ne.s32.totalorder %s239, %s241
    %p245 = scmp.eq.s32.totalorder %s18, 0
    %p246 = por %p244, %p245
    %p247 = scmp.ne.s32.totalorder %s239, %s241
    %p248 = scmp.eq.s32.totalorder %s23, 1
    %p249 = por %p247, %p248
    %p250 = scmp.ne.s32.totalorder %s241, %s242
    %p251 = scmp.eq.s32.totalorder %s23, 0
    %p252 = por %p250, %p251
    %p253 = scmp.ne.s32.totalorder %s241, %s242
    %p254 = scmp.eq.s32.totalorder %s24, 1
    %p255 = por %p253, %p254
    %p257 = scmp.ne.s32.totalorder %s242, %s256
    %p258 = scmp.eq.s32.totalorder %s24, 0
    %p259 = por %p257, %p258
    %s261 = sadd.s32 %s260, 1
    %p264 = scmp.eq.s32.totalorder %s18, 1
    %p265 = scmp.ne.s32.totalorder %s260, %s262
    %p266 = scmp.eq.s32.totalorder %s18, 0
    %p267 = por %p265, %p266
    %p268 = scmp.ne.s32.totalorder %s260, %s262
    %p269 = scmp.eq.s32.totalorder %s23, 1
    %p270 = por %p268, %p269
    %p271 = scmp.ne.s32.totalorder %s262, %s263
    %p272 = scmp.eq.s32.totalorder %s23, 0
    %p273 = por %p271, %p272
    %p274 = scmp.ne.s32.totalorder %s262, %s263
    %p275 = scmp.eq.s32.totalorder %s24, 1
    %p276 = por %p274, %p275
    %p278 = scmp.ne.s32.totalorder %s263, %s277
    %p279 = scmp.eq.s32.totalorder %s24, 0
    %p280 = por %p278, %p279
    %s282 = sadd.s32 %s281, 1
    %p285 = scmp.eq.s32.totalorder %s18, 1
    %p286 = scmp.ne.s32.totalorder %s281, %s283
    %p287 = scmp.eq.s32.totalorder %s18, 0
    %p288 = por %p286, %p287
    %p289 = scmp.ne.s32.totalorder %s281, %s283
    %p290 = scmp.eq.s32.totalorder %s23, 1
    %p291 = por %p289, %p290
    %p292 = scmp.ne.s32.totalorder %s283, %s284
    %p293 = scmp.eq.s32.totalorder %s23, 0
    %p294 = por %p292, %p293
    %p295 = scmp.ne.s32.totalorder %s283, %s284
    %p296 = scmp.eq.s32.totalorder %s24, 1
    %p297 = por %p295, %p296
    %p299 = scmp.ne.s32.totalorder %s284, %s298
    %p300 = scmp.eq.s32.totalorder %s24, 0
    %p301 = por %p299, %p300
    %s302 = ssub.s32 %s25, %s37
    %s303 = ssub.s32 %s26, %s33
    %s304 = sor.u32 %s302, %s303
    %p305 = scmp.eq.s32.totalorder %s304, 0
    %s307 = sadd.s32 %s306, 1
    %s308 = scalar_select %p305, %s306, %s307
    %p311 = pneg %p305
    %p312 = scmp.eq.s32.totalorder %s18, 1
    %p313 = por %p311, %p312
    %p314 = scmp.ne.s32.totalorder %s306, %s309
    %p315 = scmp.eq.s32.totalorder %s18, 0
    %p316 = por %p314, %p315
    %p317 = scmp.ne.s32.totalorder %s306, %s309
    %p318 = scmp.eq.s32.totalorder %s23, 1
    %p319 = por %p317, %p318
    %p320 = scmp.ne.s32.totalorder %s309, %s310
    %p321 = scmp.eq.s32.totalorder %s23, 0
    %p322 = por %p320, %p321
    %p323 = scmp.ne.s32.totalorder %s309, %s310
    %p324 = scmp.eq.s32.totalorder %s24, 1
    %p325 = por %p323, %p324
    %p327 = scmp.ne.s32.totalorder %s310, %s326
    %p328 = scmp.eq.s32.totalorder %s24, 0
    %p329 = por %p327, %p328
    %p330 = scmp.le.s32.totalorder 1, %s18
    %p331 = scmp.lt.s32.totalorder %s18, 3
    %p332 = pnand %p330, %p331
    %p333 = pneg %p332
    // Predicated region
    $region9: #{encoder_forward.6} parent=5 // pred_check
      _
    $region10: #{encoder_forward.6} parent=5 // pred_check_branch
      %335 = sbr.rel (%p332) target = $region12
    $region11: #{encoder_forward.6} parent=5 // pred_region
      %s336 = ssub.s32 %s18, 1
      // Predicated region
      $region13: #{encoder_forward.6} parent=11 // pred_check
        %p337 = pneg %p105
      $region14: #{encoder_forward.6} parent=11 // pred_check_branch
        %339 = sbr.rel (%p337) target = $region16
      $region15: #{encoder_forward.6} parent=11 // pred_region
        _
      $region16: #{encoder_forward.6} parent=11 // pred_fallthru
        _
      // Predicated region
      $region17: #{encoder_forward.6} parent=11 // pred_check
        %p340 = pneg %p126
      $region18: #{encoder_forward.6} parent=11 // pred_check_branch
        %342 = sbr.rel (%p340) target = $region20
      $region19: #{encoder_forward.6} parent=11 // pred_region
        _
      $region20: #{encoder_forward.6} parent=11 // pred_fallthru
        _
      // Predicated region
      $region21: #{encoder_forward.6} parent=11 // pred_check
        %p343 = pneg %p147
      $region22: #{encoder_forward.6} parent=11 // pred_check_branch
        %345 = sbr.rel (%p343) target = $region24
      $region23: #{encoder_forward.6} parent=11 // pred_region
        _
      $region24: #{encoder_forward.6} parent=11 // pred_fallthru
        _
      // Predicated region
      $region25: #{encoder_forward.6} parent=11 // pred_check
        %p346 = pneg %p168
      $region26: #{encoder_forward.6} parent=11 // pred_check_branch
        %348 = sbr.rel (%p346) target = $region28
      $region27: #{encoder_forward.6} parent=11 // pred_region
        _
      $region28: #{encoder_forward.6} parent=11 // pred_fallthru
        _
      // Predicated region
      $region29: #{encoder_forward.6} parent=11 // pred_check
        %p349 = pneg %p189
      $region30: #{encoder_forward.6} parent=11 // pred_check_branch
        %351 = sbr.rel (%p349) target = $region32
      $region31: #{encoder_forward.6} parent=11 // pred_region
        _
      $region32: #{encoder_forward.6} parent=11 // pred_fallthru
        _
      // Predicated region
      $region33: #{encoder_forward.6} parent=11 // pred_check
        %p352 = pneg %p210
      $region34: #{encoder_forward.6} parent=11 // pred_check_branch
        %354 = sbr.rel (%p352) target = $region36
      $region35: #{encoder_forward.6} parent=11 // pred_region
        _
      $region36: #{encoder_forward.6} parent=11 // pred_fallthru
        _
      // Predicated region
      $region37: #{encoder_forward.6} parent=11 // pred_check
        %p355 = pneg %p231
      $region38: #{encoder_forward.6} parent=11 // pred_check_branch
        %357 = sbr.rel (%p355) target = $region40
      $region39: #{encoder_forward.6} parent=11 // pred_region
        _
      $region40: #{encoder_forward.6} parent=11 // pred_fallthru
        _
      // Predicated region
      $region41: #{encoder_forward.6} parent=11 // pred_check
        %p358 = pneg %p252
      $region42: #{encoder_forward.6} parent=11 // pred_check_branch
        %360 = sbr.rel (%p358) target = $region44
      $region43: #{encoder_forward.6} parent=11 // pred_region
        _
      $region44: #{encoder_forward.6} parent=11 // pred_fallthru
        _
      // Predicated region
      $region45: #{encoder_forward.6} parent=11 // pred_check
        %p361 = pneg %p273
      $region46: #{encoder_forward.6} parent=11 // pred_check_branch
        %363 = sbr.rel (%p361) target = $region48
      $region47: #{encoder_forward.6} parent=11 // pred_region
        _
      $region48: #{encoder_forward.6} parent=11 // pred_fallthru
        _
      // Predicated region
      $region49: #{encoder_forward.6} parent=11 // pred_check
        %p364 = pneg %p294
      $region50: #{encoder_forward.6} parent=11 // pred_check_branch
        %366 = sbr.rel (%p364) target = $region52
      $region51: #{encoder_forward.6} parent=11 // pred_region
        _
      $region52: #{encoder_forward.6} parent=11 // pred_fallthru
        _
    $region12: #{encoder_forward.6} parent=5 // pred_fallthru
      _
    %p367 = scmp.lt.s32.totalorder %s18, 2
    // Predicated region
    $region53: #{encoder_forward.6} parent=5 // pred_check
      %p368 = pneg %p367
    $region54: #{encoder_forward.6} parent=5 // pred_check_branch
      %370 = sbr.rel (%p368) target = $region56
    $region55: #{encoder_forward.6} parent=5 // pred_region
      // Predicated region
      $region57: #{encoder_forward.6} parent=55 // pred_check
        %p371 = pneg %p52
      $region58: #{encoder_forward.6} parent=55 // pred_check_branch
        %373 = sbr.rel (%p371) target = $region60
      $region59: #{encoder_forward.6} parent=55 // pred_region
        %p374 = scmp.lt.s32.totalorder %s25, 1
        %s375 = scalar_select %p374, %s25, 1
        %p376 = scmp.lt.s32.totalorder %s26, 0
        %s377 = scalar_select %p376, %s26, 0
        %s378 = sadd.s32 %s377, %s375
        %s379 = smul.addr %s378, 4
        %s380 = scalar_lea.vmem %s0, %s379
      $region60: #{encoder_forward.6} parent=55 // pred_fallthru
        _
      // Predicated region
      $region61: #{encoder_forward.6} parent=55 // pred_check
        %p381 = pneg %p78
      $region62: #{encoder_forward.6} parent=55 // pred_check_branch
        %383 = sbr.rel (%p381) target = $region64
      $region63: #{encoder_forward.6} parent=55 // pred_region
        %p384 = scmp.lt.s32.totalorder %s25, 1
        %s385 = scalar_select %p384, %s25, 1
        %s386 = smul.addr %s385, 4
        %s387 = scalar_lea.vmem %s1, %s386
      $region64: #{encoder_forward.6} parent=55 // pred_fallthru
        _
    $region56: #{encoder_forward.6} parent=5 // pred_fallthru
      _
    %p388 = scmp.le.s32.totalorder 1, %s18
    %p389 = scmp.lt.s32.totalorder %s18, 3
    %p390 = pnand %p388, %p389
    %p391 = pneg %p390
    // Predicated region
    $region65: #{encoder_forward.6} parent=5 // pred_check
      _
    $region66: #{encoder_forward.6} parent=5 // pred_check_branch
      %393 = sbr.rel (%p390) target = $region68
    $region67: #{encoder_forward.6} parent=5 // pred_region
      %s394 = ssub.s32 %s18, 1
      %p395 = scmp.lt.s32.totalorder %s27, 1
      %s396 = scalar_select %p395, %s27, 1
      %p397 = scmp.lt.s32.totalorder %s28, 0
      %s398 = scalar_select %p397, %s28, 0
      %s399 = sadd.s32 %s398, %s396
      %s400 = smul.addr %s399, 4
      %s401 = scalar_lea.vmem %s0, %s400
      %p402 = pneg %p58
      %p403 = pneg %p55
      %p404 = scmp.lt.s32.totalorder %s27, 1
      %s405 = scalar_select %p404, %s27, 1
      %s406 = smul.addr %s405, 4
      %s407 = scalar_lea.vmem %s1, %s406
      %p408 = pneg %p84
      %p409 = pneg %p81
      %p410 = pneg %p105
      %p411 = pneg %p102
      %p412 = pneg %p126
      %p413 = pneg %p123
      %p414 = pneg %p147
      %p415 = pneg %p144
      %p416 = pneg %p168
      %p417 = pneg %p165
      %p418 = pneg %p189
      %p419 = pneg %p186
      %p420 = pneg %p210
      %p421 = pneg %p207
      %p422 = pneg %p231
      %p423 = pneg %p228
      %p424 = pneg %p252
      %p425 = pneg %p249
      %p426 = pneg %p273
      %p427 = pneg %p270
      %p428 = pneg %p294
      %p429 = pneg %p291
      %p430 = pneg %p322
      %p431 = pneg %p319
      %p432 = scmp.lt.s32.totalorder %s27, 1
      %s433 = scalar_select %p432, %s27, 1
      %p434 = scmp.lt.s32.totalorder %s28, 0
      %s435 = scalar_select %p434, %s28, 0
      %s436 = sadd.s32 %s435, %s433
      %s437 = smul.addr %s436, 4
      %s438 = scalar_lea.vmem %s12, %s437
      %p439 = scmp.lt.s32.totalorder %s27, 1
      %s440 = scalar_select %p439, %s27, 1
      %p441 = scmp.lt.s32.totalorder %s28, 0
      %s442 = scalar_select %p441, %s28, 0
      %s443 = sadd.s32 %s442, %s440
      %s444 = smul.addr %s443, 4
      %s445 = scalar_lea.vmem %s0, %s444
      %p446 = scmp.lt.s32.totalorder %s27, 1
      %s447 = scalar_select %p446, %s27, 1
      %s448 = smul.addr %s447, 4
      %s449 = scalar_lea.vmem %s1, %s448
      %p450 = scmp.lt.s32.totalorder %s27, 1
      %s451 = scalar_select %p450, %s27, 1
      %p452 = scmp.lt.s32.totalorder %s28, 0
      %s453 = scalar_select %p452, %s28, 0
      %s454 = sadd.s32 %s453, %s451
      %s455 = smul.addr %s454, 4
      %s456 = scalar_lea.vmem %s12, %s455
      %v458 = vld [vmem:[%s445] sm:$0xf]
      %v459 = vld [vmem:[%s449] sm:$0xf]
      %v460 = vld [vmem:[%s2] sm:$0xf]
      %v461 = vld [vmem:[%s2 + $0x4] sm:$0xf]
      %v462 = vld [vmem:[%s2 + $0x8] sm:$0xf]
      %v463 = vld [vmem:[%s2 + $0xc] sm:$0xf]
      %v464 = vld [vmem:[%s5] sm:$0x1]
      %v465 = vunpack.c.l.bf16 %v464
      %v466 = vlaneseq
      %v467 = vshrl.u32 %v466, 7
      %v468 = vsub.s32 0, %v467
      %v469 = vrot.slane %v465, %v468
      %v474 = vunpack.c.l.b16 %v460
      %v475 = vunpack.c.l.b16 %v461
      %v476 = vunpack.c.l.b16 %v462
      %v477 = vunpack.c.l.b16 %v463
      %v478 = vpack.c.b16 %v475, %v474
      %v479 = vpack.c.b16 %v477, %v476
      %vm482 = vcmask 261120
      %v484 = vsel %vm482, %v458, 0
      %486 = vmatprep.subr.bf16.mxu0 0
      %487 = vmatpush1.bf16.msra.mxu0 %v478
      %488 = vmatprep.subr.bf16.mxu0 0
      %489 = vmatpush1.bf16.msra.mxu0 %v479
      %490 = vmatprep.subr.bf16.mxu0 0
      %491 = vmatpush1.bf16.msra.mxu0 0
      %492 = vmatprep.subr.bf16.mxu0 0
      %493 = vmatpush1.bf16.msra.mxu0 0
      %494 = vmatprep.subr.bf16.mxu0 0
      %495 = vmatpush1.bf16.msra.mxu0 0
      %496 = vmatprep.subr.bf16.mxu0 0
      %497 = vmatpush1.bf16.msra.mxu0 0
      %498 = vmatprep.subr.bf16.mxu0 0
      %499 = vmatpush1.bf16.msra.mxu0 0
      %500 = vmatprep.subr.bf16.mxu0 0
      %501 = vmatpush1.bf16.msra.mxu0 0
      %502 = vmatprep.subr.bf16.mxu0 0
      %503 = vmatpush1.bf16.msra.mxu0 0
      %504 = vmatprep.subr.bf16.mxu0 0
      %505 = vmatpush1.bf16.msra.mxu0 0
      %506 = vmatprep.subr.bf16.mxu0 0
      %507 = vmatpush1.bf16.msra.mxu0 0
      %508 = vmatprep.subr.bf16.mxu0 0
      %509 = vmatpush1.bf16.msra.mxu0 0
      %510 = vmatprep.subr.bf16.mxu0 0
      %511 = vmatpush1.bf16.msra.mxu0 0
      %512 = vmatprep.subr.bf16.mxu0 0
      %513 = vmatpush1.bf16.msra.mxu0 0
      %514 = vmatprep.subr.bf16.mxu0 0
      %515 = vmatpush1.bf16.msra.mxu0 0
      %516 = vmatprep.subr.bf16.mxu0 0
      %517 = vmatpush1.bf16.msra.mxu0 0
      %518 = vmatprep.mubr.bf16.mxu0 0
      %519 = vmatmul.mubr.bf16.gmra.mrb[0].mxu0 %v484
      %v520 = vpop.f32.mrb[0].mxu0
      %v521 = vadd.f32 %v469, %v520
      %v522 = vpop.f32.mrb[0].mxu0
      %v523 = vpop.f32.mrb[0].mxu0
      %v524 = vpop.f32.mrb[0].mxu0
      %525 = vdwg.mxu0
      %v526 = vld [vmem:[%s3] sm:$0xf]
      %v527 = vld [vmem:[%s3 + $0x4] sm:$0xf]
      %v528 = vld [vmem:[%s3 + $0x8] sm:$0xf]
      %v529 = vld [vmem:[%s3 + $0xc] sm:$0xf]
      %v530 = vld [vmem:[%s6] sm:$0x1]
      %v531 = vunpack.c.l.bf16 %v530
      %v532 = vlaneseq
      %v533 = vshrl.u32 %v532, 7
      %v534 = vsub.s32 0, %v533
      %v535 = vrot.slane %v531, %v534
      %v540 = vunpack.c.l.b16 %v526
      %v541 = vunpack.c.l.b16 %v527
      %v542 = vunpack.c.l.b16 %v528
      %v543 = vunpack.c.l.b16 %v529
      %v544 = vpack.c.b16 %v541, %v540
      %v545 = vpack.c.b16 %v543, %v542
      %v549 = vsel %vm482, %v459, 0
      %551 = vmatprep.subr.bf16.mxu0 0
      %552 = vmatpush1.bf16.msra.mxu0 %v544
      %553 = vmatprep.subr.bf16.mxu0 0
      %554 = vmatpush1.bf16.msra.mxu0 %v545
      %555 = vmatprep.subr.bf16.mxu0 0
      %556 = vmatpush1.bf16.msra.mxu0 0
      %557 = vmatprep.subr.bf16.mxu0 0
      %558 = vmatpush1.bf16.msra.mxu0 0
      %559 = vmatprep.subr.bf16.mxu0 0
      %560 = vmatpush1.bf16.msra.mxu0 0
      %561 = vmatprep.subr.bf16.mxu0 0
      %562 = vmatpush1.bf16.msra.mxu0 0
      %563 = vmatprep.subr.bf16.mxu0 0
      %564 = vmatpush1.bf16.msra.mxu0 0
      %565 = vmatprep.subr.bf16.mxu0 0
      %566 = vmatpush1.bf16.msra.mxu0 0
      %567 = vmatprep.subr.bf16.mxu0 0
      %568 = vmatpush1.bf16.msra.mxu0 0
      %569 = vmatprep.subr.bf16.mxu0 0
      %570 = vmatpush1.bf16.msra.mxu0 0
      %571 = vmatprep.subr.bf16.mxu0 0
      %572 = vmatpush1.bf16.msra.mxu0 0
      %573 = vmatprep.subr.bf16.mxu0 0
      %574 = vmatpush1.bf16.msra.mxu0 0
      %575 = vmatprep.subr.bf16.mxu0 0
      %576 = vmatpush1.bf16.msra.mxu0 0
      %577 = vmatprep.subr.bf16.mxu0 0
      %578 = vmatpush1.bf16.msra.mxu0 0
      %579 = vmatprep.subr.bf16.mxu0 0
      %580 = vmatpush1.bf16.msra.mxu0 0
      %581 = vmatprep.subr.bf16.mxu0 0
      %582 = vmatpush1.bf16.msra.mxu0 0
      %583 = vmatprep.mubr.bf16.mxu0 0
      %584 = vmatmul.mubr.bf16.gmra.mrb[0].mxu0 %v549
      %v585 = vpop.f32.mrb[0].mxu0
      %v586 = vadd.f32 %v535, %v585
      %v587 = vpop.f32.mrb[0].mxu0
      %v588 = vpop.f32.mrb[0].mxu0
      %v589 = vpop.f32.mrb[0].mxu0
      %590 = vdwg.mxu0
      %v591 = vld [vmem:[%s4] sm:$0xf]
      %v592 = vld [vmem:[%s4 + $0x4] sm:$0xf]
      %v593 = vld [vmem:[%s4 + $0x8] sm:$0xf]
      %v594 = vld [vmem:[%s4 + $0xc] sm:$0xf]
      %v595 = vld [vmem:[%s7] sm:$0x1]
      %v596 = vunpack.c.l.bf16 %v595
      %v597 = vlaneseq
      %v598 = vshrl.u32 %v597, 7
      %v599 = vsub.s32 0, %v598
      %v600 = vrot.slane %v596, %v599
      %v605 = vunpack.c.l.b16 %v591
      %v606 = vunpack.c.l.b16 %v592
      %v607 = vunpack.c.l.b16 %v593
      %v608 = vunpack.c.l.b16 %v594
      %v609 = vpack.c.b16 %v606, %v605
      %v610 = vpack.c.b16 %v608, %v607
      %613 = vmatprep.subr.bf16.mxu0 0
      %614 = vmatpush1.bf16.msra.mxu0 %v609
      %615 = vmatprep.subr.bf16.mxu0 0
      %616 = vmatpush1.bf16.msra.mxu0 %v610
      %617 = vmatprep.subr.bf16.mxu0 0
      %618 = vmatpush1.bf16.msra.mxu0 0
      %619 = vmatprep.subr.bf16.mxu0 0
      %620 = vmatpush1.bf16.msra.mxu0 0
      %621 = vmatprep.subr.bf16.mxu0 0
      %622 = vmatpush1.bf16.msra.mxu0 0
      %623 = vmatprep.subr.bf16.mxu0 0
      %624 = vmatpush1.bf16.msra.mxu0 0
      %625 = vmatprep.subr.bf16.mxu0 0
      %626 = vmatpush1.bf16.msra.mxu0 0
      %627 = vmatprep.subr.bf16.mxu0 0
      %628 = vmatpush1.bf16.msra.mxu0 0
      %629 = vmatprep.subr.bf16.mxu0 0
      %630 = vmatpush1.bf16.msra.mxu0 0
      %631 = vmatprep.subr.bf16.mxu0 0
      %632 = vmatpush1.bf16.msra.mxu0 0
      %633 = vmatprep.subr.bf16.mxu0 0
      %634 = vmatpush1.bf16.msra.mxu0 0
      %635 = vmatprep.subr.bf16.mxu0 0
      %636 = vmatpush1.bf16.msra.mxu0 0
      %637 = vmatprep.subr.bf16.mxu0 0
      %638 = vmatpush1.bf16.msra.mxu0 0
      %639 = vmatprep.subr.bf16.mxu0 0
      %640 = vmatpush1.bf16.msra.mxu0 0
      %641 = vmatprep.subr.bf16.mxu0 0
      %642 = vmatpush1.bf16.msra.mxu0 0
      %643 = vmatprep.subr.bf16.mxu0 0
      %644 = vmatpush1.bf16.msra.mxu0 0
      %645 = vmatprep.mubr.bf16.mxu0 0
      %646 = vmatmul.mubr.bf16.gmra.mrb[0].mxu0 %v549
      %v647 = vpop.f32.mrb[0].mxu0
      %v648 = vadd.f32 %v600, %v647
      %v649 = vpop.f32.mrb[0].mxu0
      %v650 = vpop.f32.mrb[0].mxu0
      %v651 = vpop.f32.mrb[0].mxu0
      %652 = vdwg.mxu0
      %v653 = vpack.c.bf16 %v521, %v521
      %v654 = vpack.c.bf16 %v586, %v586
      %vm655 = vcmask 64512
      %v657 = vsel %vm655, %v653, 0
      %v660 = vsel %vm655, %v654, 0
      %662 = vmatprep.subr.bf16.mxu0 0
      %663 = vmatpush1.bf16.xpose.msra.mxu0 %v660
      %664 = vmatprep.subr.bf16.mxu0 0
      %665 = vmatpush1.bf16.xpose.msra.mxu0 0
      %666 = vmatprep.subr.bf16.mxu0 0
      %667 = vmatpush1.bf16.xpose.msra.mxu0 0
      %668 = vmatprep.subr.bf16.mxu0 0
      %669 = vmatpush1.bf16.xpose.msra.mxu0 0
      %670 = vmatprep.subr.bf16.mxu0 0
      %671 = vmatpush1.bf16.xpose.msra.mxu0 0
      %672 = vmatprep.subr.bf16.mxu0 0
      %673 = vmatpush1.bf16.xpose.msra.mxu0 0
      %674 = vmatprep.subr.bf16.mxu0 0
      %675 = vmatpush1.bf16.xpose.msra.mxu0 0
      %676 = vmatprep.subr.bf16.mxu0 0
      %677 = vmatpush1.bf16.xpose.msra.mxu0 0
      %678 = vmatprep.subr.bf16.mxu0 0
      %679 = vmatpush1.bf16.xpose.msra.mxu0 0
      %680 = vmatprep.subr.bf16.mxu0 0
      %681 = vmatpush1.bf16.xpose.msra.mxu0 0
      %682 = vmatprep.subr.bf16.mxu0 0
      %683 = vmatpush1.bf16.xpose.msra.mxu0 0
      %684 = vmatprep.subr.bf16.mxu0 0
      %685 = vmatpush1.bf16.xpose.msra.mxu0 0
      %686 = vmatprep.subr.bf16.mxu0 0
      %687 = vmatpush1.bf16.xpose.msra.mxu0 0
      %688 = vmatprep.subr.bf16.mxu0 0
      %689 = vmatpush1.bf16.xpose.msra.mxu0 0
      %690 = vmatprep.subr.bf16.mxu0 0
      %691 = vmatpush1.bf16.xpose.msra.mxu0 0
      %692 = vmatprep.subr.bf16.mxu0 0
      %693 = vmatpush1.bf16.xpose.msra.mxu0 0
      %694 = vmatprep.mubr.bf16.mxu0 0
      %695 = vmatmul.mubr.bf16.gmra.mrb[0].mxu0 %v657
      %v696 = vpop.f32.mrb[0].mxu0
      %v697 = vadd.f32 0.0, %v696
      %v698 = vpop.f32.mrb[0].mxu0
      %v699 = vpop.f32.mrb[0].mxu0
      %v700 = vpop.f32.mrb[0].mxu0
      %701 = vdwg.mxu0
      %v702 = vmul.f32 %v697, 0.35355338
      %v703 = vsel %vm655, %v702, -inf
      %704 = vmax.xlane.f32.xlu0 %v703
      %v705 = vpop.xlane.xlu0 %704
      %v706 = vsub.f32 %v702, %v705
      %v707 = vmul.f32 %v706, 1.442695
      %v708 = vpow.pop %v707
      %v709 = vsel %vm655, %v708, 0.0
      %710 = vadd.xlane.f32.xlu0 %v709
      %v711 = vpop.xlane.xlu0 %710
      %v712 = vrcp.pop %v711
      %v713 = vmul.f32 %v708, %v712
      %v714 = vpack.c.bf16 %v713, %v713
      %v715 = vpack.c.bf16 %v648, %v648
      %v717 = vsel %vm655, %v714, 0
      %vm719 = vcmask 1043456
      %v721 = vsel %vm719, %v715, 0
      %723 = vmatprep.subr.bf16.mxu0 0
      %724 = vmatpush1.bf16.msra.mxu0 %v721
      %725 = vmatprep.subr.bf16.mxu0 0
      %726 = vmatpush1.bf16.msra.mxu0 0
      %727 = vmatprep.subr.bf16.mxu0 0
      %728 = vmatpush1.bf16.msra.mxu0 0
      %729 = vmatprep.subr.bf16.mxu0 0
      %730 = vmatpush1.bf16.msra.mxu0 0
      %731 = vmatprep.subr.bf16.mxu0 0
      %732 = vmatpush1.bf16.msra.mxu0 0
      %733 = vmatprep.subr.bf16.mxu0 0
      %734 = vmatpush1.bf16.msra.mxu0 0
      %735 = vmatprep.subr.bf16.mxu0 0
      %736 = vmatpush1.bf16.msra.mxu0 0
      %737 = vmatprep.subr.bf16.mxu0 0
      %738 = vmatpush1.bf16.msra.mxu0 0
      %739 = vmatprep.subr.bf16.mxu0 0
      %740 = vmatpush1.bf16.msra.mxu0 0
      %741 = vmatprep.subr.bf16.mxu0 0
      %742 = vmatpush1.bf16.msra.mxu0 0
      %743 = vmatprep.subr.bf16.mxu0 0
      %744 = vmatpush1.bf16.msra.mxu0 0
      %745 = vmatprep.subr.bf16.mxu0 0
      %746 = vmatpush1.bf16.msra.mxu0 0
      %747 = vmatprep.subr.bf16.mxu0 0
      %748 = vmatpush1.bf16.msra.mxu0 0
      %749 = vmatprep.subr.bf16.mxu0 0
      %750 = vmatpush1.bf16.msra.mxu0 0
      %751 = vmatprep.subr.bf16.mxu0 0
      %752 = vmatpush1.bf16.msra.mxu0 0
      %753 = vmatprep.subr.bf16.mxu0 0
      %754 = vmatpush1.bf16.msra.mxu0 0
      %755 = vmatprep.mubr.bf16.mxu0 0
      %756 = vmatmul.mubr.bf16.gmra.mrb[0].mxu0 %v717
      %v757 = vpop.f32.mrb[0].mxu0
      %v758 = vadd.f32 0.0, %v757
      %v759 = vpop.f32.mrb[0].mxu0
      %v760 = vpop.f32.mrb[0].mxu0
      %v761 = vpop.f32.mrb[0].mxu0
      %762 = vdwg.mxu0
      %v763 = vpack.c.bf16 %v758, %v758
      %v764 = vld [vmem:[%s8] sm:$0xf]
      %s765 = scalar_lea.vmem %s2, 16
      %v766 = vld [vmem:[%s765] sm:$0xf]
      %v767 = vld [vmem:[%s765 + $0x4] sm:$0xf]
      %v768 = vld [vmem:[%s765 + $0x8] sm:$0xf]
      %v769 = vld [vmem:[%s765 + $0xc] sm:$0xf]
      %s770 = scalar_lea.vmem %s5, 1
      %v771 = vld [vmem:[%s770] sm:$0x1]
      %v772 = vunpack.c.l.bf16 %v771
      %v773 = vlaneseq
      %v774 = vshrl.u32 %v773, 7
      %v775 = vsub.s32 0, %v774
      %v776 = vrot.slane %v772, %v775
      %v781 = vunpack.c.l.b16 %v766
      %v782 = vunpack.c.l.b16 %v767
      %v783 = vunpack.c.l.b16 %v768
      %v784 = vunpack.c.l.b16 %v769
      %v785 = vpack.c.b16 %v782, %v781
      %v786 = vpack.c.b16 %v784, %v783
      %789 = vmatprep.subr.bf16.mxu0 0
      %790 = vmatpush1.bf16.msra.mxu0 %v785
      %791 = vmatprep.subr.bf16.mxu0 0
      %792 = vmatpush1.bf16.msra.mxu0 %v786
      %793 = vmatprep.subr.bf16.mxu0 0
      %794 = vmatpush1.bf16.msra.mxu0 0
      %795 = vmatprep.subr.bf16.mxu0 0
      %796 = vmatpush1.bf16.msra.mxu0 0
      %797 = vmatprep.subr.bf16.mxu0 0
      %798 = vmatpush1.bf16.msra.mxu0 0
      %799 = vmatprep.subr.bf16.mxu0 0
      %800 = vmatpush1.bf16.msra.mxu0 0
      %801 = vmatprep.subr.bf16.mxu0 0
      %802 = vmatpush1.bf16.msra.mxu0 0
      %803 = vmatprep.subr.bf16.mxu0 0
      %804 = vmatpush1.bf16.msra.mxu0 0
      %805 = vmatprep.subr.bf16.mxu0 0
      %806 = vmatpush1.bf16.msra.mxu0 0
      %807 = vmatprep.subr.bf16.mxu0 0
      %808 = vmatpush1.bf16.msra.mxu0 0
      %809 = vmatprep.subr.bf16.mxu0 0
      %810 = vmatpush1.bf16.msra.mxu0 0
      %811 = vmatprep.subr.bf16.mxu0 0
      %812 = vmatpush1.bf16.msra.mxu0 0
      %813 = vmatprep.subr.bf16.mxu0 0
      %814 = vmatpush1.bf16.msra.mxu0 0
      %815 = vmatprep.subr.bf16.mxu0 0
      %816 = vmatpush1.bf16.msra.mxu0 0
      %817 = vmatprep.subr.bf16.mxu0 0
      %818 = vmatpush1.bf16.msra.mxu0 0
      %819 = vmatprep.subr.bf16.mxu0 0
      %820 = vmatpush1.bf16.msra.mxu0 0
      %821 = vmatprep.mubr.bf16.mxu0 0
      %822 = vmatmul.mubr.bf16.gmra.mrb[0].mxu0 %v484
      %v823 = vpop.f32.mrb[0].mxu0
      %v824 = vadd.f32 %v776, %v823
      %v825 = vpop.f32.mrb[0].mxu0
      %v826 = vpop.f32.mrb[0].mxu0
      %v827 = vpop.f32.mrb[0].mxu0
      %828 = vdwg.mxu0
      %s829 = scalar_lea.vmem %s3, 16
      %v830 = vld [vmem:[%s829] sm:$0xf]
      %v831 = vld [vmem:[%s829 + $0x4] sm:$0xf]
      %v832 = vld [vmem:[%s829 + $0x8] sm:$0xf]
      %v833 = vld [vmem:[%s829 + $0xc] sm:$0xf]
      %s834 = scalar_lea.vmem %s6, 1
      %v835 = vld [vmem:[%s834] sm:$0x1]
      %v836 = vunpack.c.l.bf16 %v835
      %v837 = vlaneseq
      %v838 = vshrl.u32 %v837, 7
      %v839 = vsub.s32 0, %v838
      %v840 = vrot.slane %v836, %v839
      %v845 = vunpack.c.l.b16 %v830
      %v846 = vunpack.c.l.b16 %v831
      %v847 = vunpack.c.l.b16 %v832
      %v848 = vunpack.c.l.b16 %v833
      %v849 = vpack.c.b16 %v846, %v845
      %v850 = vpack.c.b16 %v848, %v847
      %853 = vmatprep.subr.bf16.mxu0 0
      %854 = vmatpush1.bf16.msra.mxu0 %v849
      %855 = vmatprep.subr.bf16.mxu0 0
      %856 = vmatpush1.bf16.msra.mxu0 %v850
      %857 = vmatprep.subr.bf16.mxu0 0
      %858 = vmatpush1.bf16.msra.mxu0 0
      %859 = vmatprep.subr.bf16.mxu0 0
      %860 = vmatpush1.bf16.msra.mxu0 0
      %861 = vmatprep.subr.bf16.mxu0 0
      %862 = vmatpush1.bf16.msra.mxu0 0
      %863 = vmatprep.subr.bf16.mxu0 0
      %864 = vmatpush1.bf16.msra.mxu0 0
      %865 = vmatprep.subr.bf16.mxu0 0
      %866 = vmatpush1.bf16.msra.mxu0 0
      %867 = vmatprep.subr.bf16.mxu0 0
      %868 = vmatpush1.bf16.msra.mxu0 0
      %869 = vmatprep.subr.bf16.mxu0 0
      %870 = vmatpush1.bf16.msra.mxu0 0
      %871 = vmatprep.subr.bf16.mxu0 0
      %872 = vmatpush1.bf16.msra.mxu0 0
      %873 = vmatprep.subr.bf16.mxu0 0
      %874 = vmatpush1.bf16.msra.mxu0 0
      %875 = vmatprep.subr.bf16.mxu0 0
      %876 = vmatpush1.bf16.msra.mxu0 0
      %877 = vmatprep.subr.bf16.mxu0 0
      %878 = vmatpush1.bf16.msra.mxu0 0
      %879 = vmatprep.subr.bf16.mxu0 0
      %880 = vmatpush1.bf16.msra.mxu0 0
      %881 = vmatprep.subr.bf16.mxu0 0
      %882 = vmatpush1.bf16.msra.mxu0 0
      %883 = vmatprep.subr.bf16.mxu0 0
      %884 = vmatpush1.bf16.msra.mxu0 0
      %885 = vmatprep.mubr.bf16.mxu0 0
      %886 = vmatmul.mubr.bf16.gmra.mrb[0].mxu0 %v549
      %v887 = vpop.f32.mrb[0].mxu0
      %v888 = vadd.f32 %v840, %v887
      %v889 = vpop.f32.mrb[0].mxu0
      %v890 = vpop.f32.mrb[0].mxu0
      %v891 = vpop.f32.mrb[0].mxu0
      %892 = vdwg.mxu0
      %s893 = scalar_lea.vmem %s4, 16
      %v894 = vld [vmem:[%s893] sm:$0xf]
      %v895 = vld [vmem:[%s893 + $0x4] sm:$0xf]
      %v896 = vld [vmem:[%s893 + $0x8] sm:$0xf]
      %v897 = vld [vmem:[%s893 + $0xc] sm:$0xf]
      %s898 = scalar_lea.vmem %s7, 1
      %v899 = vld [vmem:[%s898] sm:$0x1]
      %v900 = vunpack.c.l.bf16 %v899
      %v901 = vlaneseq
      %v902 = vshrl.u32 %v901, 7
      %v903 = vsub.s32 0, %v902
      %v904 = vrot.slane %v900, %v903
      %v909 = vunpack.c.l.b16 %v894
      %v910 = vunpack.c.l.b16 %v895
      %v911 = vunpack.c.l.b16 %v896
      %v912 = vunpack.c.l.b16 %v897
      %v913 = vpack.c.b16 %v910, %v909
      %v914 = vpack.c.b16 %v912, %v911
      %917 = vmatprep.subr.bf16.mxu0 0
      %918 = vmatpush1.bf16.msra.mxu0 %v913
      %919 = vmatprep.subr.bf16.mxu0 0
      %920 = vmatpush1.bf16.msra.mxu0 %v914
      %921 = vmatprep.subr.bf16.mxu0 0
      %922 = vmatpush1.bf16.msra.mxu0 0
      %923 = vmatprep.subr.bf16.mxu0 0
      %924 = vmatpush1.bf16.msra.mxu0 0
      %925 = vmatprep.subr.bf16.mxu0 0
      %926 = vmatpush1.bf16.msra.mxu0 0
      %927 = vmatprep.subr.bf16.mxu0 0
      %928 = vmatpush1.bf16.msra.mxu0 0
      %929 = vmatprep.subr.bf16.mxu0 0
      %930 = vmatpush1.bf16.msra.mxu0 0
      %931 = vmatprep.subr.bf16.mxu0 0
      %932 = vmatpush1.bf16.msra.mxu0 0
      %933 = vmatprep.subr.bf16.mxu0 0
      %934 = vmatpush1.bf16.msra.mxu0 0
      %935 = vmatprep.subr.bf16.mxu0 0
      %936 = vmatpush1.bf16.msra.mxu0 0
      %937 = vmatprep.subr.bf16.mxu0 0
      %938 = vmatpush1.bf16.msra.mxu0 0
      %939 = vmatprep.subr.bf16.mxu0 0
      %940 = vmatpush1.bf16.msra.mxu0 0
      %941 = vmatprep.subr.bf16.mxu0 0
      %942 = vmatpush1.bf16.msra.mxu0 0
      %943 = vmatprep.subr.bf16.mxu0 0
      %944 = vmatpush1.bf16.msra.mxu0 0
      %945 = vmatprep.subr.bf16.mxu0 0
      %946 = vmatpush1.bf16.msra.mxu0 0
      %947 = vmatprep.subr.bf16.mxu0 0
      %948 = vmatpush1.bf16.msra.mxu0 0
      %949 = vmatprep.mubr.bf16.mxu0 0
      %950 = vmatmul.mubr.bf16.gmra.mrb[0].mxu0 %v549
      %v951 = vpop.f32.mrb[0].mxu0
      %v952 = vadd.f32 %v904, %v951
      %v953 = vpop.f32.mrb[0].mxu0
      %v954 = vpop.f32.mrb[0].mxu0
      %v955 = vpop.f32.mrb[0].mxu0
      %956 = vdwg.mxu0
      %v957 = vpack.c.bf16 %v824, %v824
      %v958 = vpack.c.bf16 %v888, %v888
      %v960 = vsel %vm655, %v957, 0
      %v963 = vsel %vm655, %v958, 0
      %965 = vmatprep.subr.bf16.mxu0 0
      %966 = vmatpush1.bf16.xpose.msra.mxu0 %v963
      %967 = vmatprep.subr.bf16.mxu0 0
      %968 = vmatpush1.bf16.xpose.msra.mxu0 0
      %969 = vmatprep.subr.bf16.mxu0 0
      %970 = vmatpush1.bf16.xpose.msra.mxu0 0
      %971 = vmatprep.subr.bf16.mxu0 0
      %972 = vmatpush1.bf16.xpose.msra.mxu0 0
      %973 = vmatprep.subr.bf16.mxu0 0
      %974 = vmatpush1.bf16.xpose.msra.mxu0 0
      %975 = vmatprep.subr.bf16.mxu0 0
      %976 = vmatpush1.bf16.xpose.msra.mxu0 0
      %977 = vmatprep.subr.bf16.mxu0 0
      %978 = vmatpush1.bf16.xpose.msra.mxu0 0
      %979 = vmatprep.subr.bf16.mxu0 0
      %980 = vmatpush1.bf16.xpose.msra.mxu0 0
      %981 = vmatprep.subr.bf16.mxu0 0
      %982 = vmatpush1.bf16.xpose.msra.mxu0 0
      %983 = vmatprep.subr.bf16.mxu0 0
      %984 = vmatpush1.bf16.xpose.msra.mxu0 0
      %985 = vmatprep.subr.bf16.mxu0 0
      %986 = vmatpush1.bf16.xpose.msra.mxu0 0
      %987 = vmatprep.subr.bf16.mxu0 0
      %988 = vmatpush1.bf16.xpose.msra.mxu0 0
      %989 = vmatprep.subr.bf16.mxu0 0
      %990 = vmatpush1.bf16.xpose.msra.mxu0 0
      %991 = vmatprep.subr.bf16.mxu0 0
      %992 = vmatpush1.bf16.xpose.msra.mxu0 0
      %993 = vmatprep.subr.bf16.mxu0 0
      %994 = vmatpush1.bf16.xpose.msra.mxu0 0
      %995 = vmatprep.subr.bf16.mxu0 0
      %996 = vmatpush1.bf16.xpose.msra.mxu0 0
      %997 = vmatprep.mubr.bf16.mxu0 0
      %998 = vmatmul.mubr.bf16.gmra.mrb[0].mxu0 %v960
      %v999 = vpop.f32.mrb[0].mxu0
      %v1000 = vadd.f32 0.0, %v999
      %v1001 = vpop.f32.mrb[0].mxu0
      %v1002 = vpop.f32.mrb[0].mxu0
      %v1003 = vpop.f32.mrb[0].mxu0
      %1004 = vdwg.mxu0
      %v1005 = vmul.f32 %v1000, 0.35355338
      %v1006 = vsel %vm655, %v1005, -inf
      %1007 = vmax.xlane.f32.xlu0 %v1006
      %v1008 = vpop.xlane.xlu0 %1007
      %v1009 = vsub.f32 %v1005, %v1008
      %v1010 = vmul.f32 %v1009, 1.442695
      %v1011 = vpow.pop %v1010
      %v1012 = vsel %vm655, %v1011, 0.0
      %1013 = vadd.xlane.f32.xlu0 %v1012
      %v1014 = vpop.xlane.xlu0 %1013
      %v1015 = vrcp.pop %v1014
      %v1016 = vmul.f32 %v1011, %v1015
      %v1017 = vpack.c.bf16 %v1016, %v1016
      %v1018 = vpack.c.bf16 %v952, %v952
      %v1020 = vsel %vm655, %v1017, 0
      %v1023 = vsel %vm719, %v1018, 0
      %1025 = vmatprep.subr.bf16.mxu0 0
      %1026 = vmatpush1.bf16.msra.mxu0 %v1023
      %1027 = vmatprep.subr.bf16.mxu0 0
      %1028 = vmatpush1.bf16.msra.mxu0 0
      %1029 = vmatprep.subr.bf16.mxu0 0
      %1030 = vmatpush1.bf16.msra.mxu0 0
      %1031 = vmatprep.subr.bf16.mxu0 0
      %1032 = vmatpush1.bf16.msra.mxu0 0
      %1033 = vmatprep.subr.bf16.mxu0 0
      %1034 = vmatpush1.bf16.msra.mxu0 0
      %1035 = vmatprep.subr.bf16.mxu0 0
      %1036 = vmatpush1.bf16.msra.mxu0 0
      %1037 = vmatprep.subr.bf16.mxu0 0
      %1038 = vmatpush1.bf16.msra.mxu0 0
      %1039 = vmatprep.subr.bf16.mxu0 0
      %1040 = vmatpush1.bf16.msra.mxu0 0
      %1041 = vmatprep.subr.bf16.mxu0 0
      %1042 = vmatpush1.bf16.msra.mxu0 0
      %1043 = vmatprep.subr.bf16.mxu0 0
      %1044 = vmatpush1.bf16.msra.mxu0 0
      %1045 = vmatprep.subr.bf16.mxu0 0
      %1046 = vmatpush1.bf16.msra.mxu0 0
      %1047 = vmatprep.subr.bf16.mxu0 0
      %1048 = vmatpush1.bf16.msra.mxu0 0
      %1049 = vmatprep.subr.bf16.mxu0 0
      %1050 = vmatpush1.bf16.msra.mxu0 0
      %1051 = vmatprep.subr.bf16.mxu0 0
      %1052 = vmatpush1.bf16.msra.mxu0 0
      %1053 = vmatprep.subr.bf16.mxu0 0
      %1054 = vmatpush1.bf16.msra.mxu0 0
      %1055 = vmatprep.subr.bf16.mxu0 0
      %1056 = vmatpush1.bf16.msra.mxu0 0
      %1057 = vmatprep.mubr.bf16.mxu0 0
      %1058 = vmatmul.mubr.bf16.gmra.mrb[0].mxu0 %v1020
      %v1059 = vpop.f32.mrb[0].mxu0
      %v1060 = vadd.f32 0.0, %v1059
      %v1061 = vpop.f32.mrb[0].mxu0
      %v1062 = vpop.f32.mrb[0].mxu0
      %v1063 = vpop.f32.mrb[0].mxu0
      %1064 = vdwg.mxu0
      %v1065 = vpack.c.bf16 %v1060, %v1060
      %s1066 = scalar_lea.vmem %s8, 4
      %v1067 = vld [vmem:[%s1066] sm:$0xf]
      %v1069 = vsel %vm655, %v1065, 0
      %v1072 = vsel %vm719, %v1067, 0
      %1074 = vmatprep.subr.bf16.mxu0 0
      %1075 = vmatpush1.bf16.msra.mxu0 %v1072
      %1076 = vmatprep.subr.bf16.mxu0 0
      %1077 = vmatpush1.bf16.msra.mxu0 0
      %1078 = vmatprep.subr.bf16.mxu0 0
      %1079 = vmatpush1.bf16.msra.mxu0 0
      %1080 = vmatprep.subr.bf16.mxu0 0
      %1081 = vmatpush1.bf16.msra.mxu0 0
      %1082 = vmatprep.subr.bf16.mxu0 0
      %1083 = vmatpush1.bf16.msra.mxu0 0
      %1084 = vmatprep.subr.bf16.mxu0 0
      %1085 = vmatpush1.bf16.msra.mxu0 0
      %1086 = vmatprep.subr.bf16.mxu0 0
      %1087 = vmatpush1.bf16.msra.mxu0 0
      %1088 = vmatprep.subr.bf16.mxu0 0
      %1089 = vmatpush1.bf16.msra.mxu0 0
      %1090 = vmatprep.subr.bf16.mxu0 0
      %1091 = vmatpush1.bf16.msra.mxu0 0
      %1092 = vmatprep.subr.bf16.mxu0 0
      %1093 = vmatpush1.bf16.msra.mxu0 0
      %1094 = vmatprep.subr.bf16.mxu0 0
      %1095 = vmatpush1.bf16.msra.mxu0 0
      %1096 = vmatprep.subr.bf16.mxu0 0
      %1097 = vmatpush1.bf16.msra.mxu0 0
      %1098 = vmatprep.subr.bf16.mxu0 0
      %1099 = vmatpush1.bf16.msra.mxu0 0
      %1100 = vmatprep.subr.bf16.mxu0 0
      %1101 = vmatpush1.bf16.msra.mxu0 0
      %1102 = vmatprep.subr.bf16.mxu0 0
      %1103 = vmatpush1.bf16.msra.mxu0 0
      %1104 = vmatprep.subr.bf16.mxu0 0
      %1105 = vmatpush1.bf16.msra.mxu0 0
      %1106 = vmatprep.mubr.bf16.mxu0 0
      %1107 = vmatmul.mubr.bf16.gmra.mrb[0].mxu0 %v1069
      %v1108 = vpop.f32.mrb[0].mxu0
      %v1109 = vadd.f32 0.0, %v1108
      %v1110 = vpop.f32.mrb[0].mxu0
      %v1111 = vpop.f32.mrb[0].mxu0
      %v1112 = vpop.f32.mrb[0].mxu0
      %1113 = vdwg.mxu0
      %v1115 = vsel %vm655, %v763, 0
      %v1118 = vsel %vm719, %v764, 0
      %1120 = vmatprep.subr.bf16.mxu0 0
      %1121 = vmatpush1.bf16.msra.mxu0 %v1118
      %1122 = vmatprep.subr.bf16.mxu0 0
      %1123 = vmatpush1.bf16.msra.mxu0 0
      %1124 = vmatprep.subr.bf16.mxu0 0
      %1125 = vmatpush1.bf16.msra.mxu0 0
      %1126 = vmatprep.subr.bf16.mxu0 0
      %1127 = vmatpush1.bf16.msra.mxu0 0
      %1128 = vmatprep.subr.bf16.mxu0 0
      %1129 = vmatpush1.bf16.msra.mxu0 0
      %1130 = vmatprep.subr.bf16.mxu0 0
      %1131 = vmatpush1.bf16.msra.mxu0 0
      %1132 = vmatprep.subr.bf16.mxu0 0
      %1133 = vmatpush1.bf16.msra.mxu0 0
      %1134 = vmatprep.subr.bf16.mxu0 0
      %1135 = vmatpush1.bf16.msra.mxu0 0
      %1136 = vmatprep.subr.bf16.mxu0 0
      %1137 = vmatpush1.bf16.msra.mxu0 0
      %1138 = vmatprep.subr.bf16.mxu0 0
      %1139 = vmatpush1.bf16.msra.mxu0 0
      %1140 = vmatprep.subr.bf16.mxu0 0
      %1141 = vmatpush1.bf16.msra.mxu0 0
      %1142 = vmatprep.subr.bf16.mxu0 0
      %1143 = vmatpush1.bf16.msra.mxu0 0
      %1144 = vmatprep.subr.bf16.mxu0 0
      %1145 = vmatpush1.bf16.msra.mxu0 0
      %1146 = vmatprep.subr.bf16.mxu0 0
      %1147 = vmatpush1.bf16.msra.mxu0 0
      %1148 = vmatprep.subr.bf16.mxu0 0
      %1149 = vmatpush1.bf16.msra.mxu0 0
      %1150 = vmatprep.subr.bf16.mxu0 0
      %1151 = vmatpush1.bf16.msra.mxu0 0
      %1152 = vmatprep.mubr.bf16.mxu0 0
      %1153 = vmatmul.mubr.bf16.gmra.mrb[0].mxu0 %v1115
      %v1154 = vpop.f32.mrb[0].mxu0
      %v1155 = vadd.f32 %v1109, %v1154
      %v1156 = vpop.f32.mrb[0].mxu0
      %v1157 = vpop.f32.mrb[0].mxu0
      %v1158 = vpop.f32.mrb[0].mxu0
      %1159 = vdwg.mxu0
      %s1160 = scalar_lea.vmem %s2, 32
      %v1161 = vld [vmem:[%s1160] sm:$0xf]
      %v1162 = vld [vmem:[%s1160 + $0x4] sm:$0xf]
      %v1163 = vld [vmem:[%s1160 + $0x8] sm:$0xf]
      %v1164 = vld [vmem:[%s1160 + $0xc] sm:$0xf]
      %s1165 = scalar_lea.vmem %s5, 2
      %v1166 = vld [vmem:[%s1165] sm:$0x1]
      %v1167 = vunpack.c.l.bf16 %v1166
      %v1168 = vlaneseq
      %v1169 = vshrl.u32 %v1168, 7
      %v1170 = vsub.s32 0, %v1169
      %v1171 = vrot.slane %v1167, %v1170
      %v1176 = vunpack.c.l.b16 %v1161
      %v1177 = vunpack.c.l.b16 %v1162
      %v1178 = vunpack.c.l.b16 %v1163
      %v1179 = vunpack.c.l.b16 %v1164
      %v1180 = vpack.c.b16 %v1177, %v1176
      %v1181 = vpack.c.b16 %v1179, %v1178
      %1184 = vmatprep.subr.bf16.mxu0 0
      %1185 = vmatpush1.bf16.msra.mxu0 %v1180
      %1186 = vmatprep.subr.bf16.mxu0 0
      %1187 = vmatpush1.bf16.msra.mxu0 %v1181
      %1188 = vmatprep.subr.bf16.mxu0 0
      %1189 = vmatpush1.bf16.msra.mxu0 0
      %1190 = vmatprep.subr.bf16.mxu0 0
      %1191 = vmatpush1.bf16.msra.mxu0 0
      %1192 = vmatprep.subr.bf16.mxu0 0
      %1193 = vmatpush1.bf16.msra.mxu0 0
      %1194 = vmatprep.subr.bf16.mxu0 0
      %1195 = vmatpush1.bf16.msra.mxu0 0
      %1196 = vmatprep.subr.bf16.mxu0 0
      %1197 = vmatpush1.bf16.msra.mxu0 0
      %1198 = vmatprep.subr.bf16.mxu0 0
      %1199 = vmatpush1.bf16.msra.mxu0 0
      %1200 = vmatprep.subr.bf16.mxu0 0
      %1201 = vmatpush1.bf16.msra.mxu0 0
      %1202 = vmatprep.subr.bf16.mxu0 0
      %1203 = vmatpush1.bf16.msra.mxu0 0
      %1204 = vmatprep.subr.bf16.mxu0 0
      %1205 = vmatpush1.bf16.msra.mxu0 0
      %1206 = vmatprep.subr.bf16.mxu0 0
      %1207 = vmatpush1.bf16.msra.mxu0 0
      %1208 = vmatprep.subr.bf16.mxu0 0
      %1209 = vmatpush1.bf16.msra.mxu0 0
      %1210 = vmatprep.subr.bf16.mxu0 0
      %1211 = vmatpush1.bf16.msra.mxu0 0
      %1212 = vmatprep.subr.bf16.mxu0 0
      %1213 = vmatpush1.bf16.msra.mxu0 0
      %1214 = vmatprep.subr.bf16.mxu0 0
      %1215 = vmatpush1.bf16.msra.mxu0 0
      %1216 = vmatprep.mubr.bf16.mxu0 0
      %1217 = vmatmul.mubr.bf16.gmra.mrb[0].mxu0 %v484
      %v1218 = vpop.f32.mrb[0].mxu0
      %v1219 = vadd.f32 %v1171, %v1218
      %v1220 = vpop.f32.mrb[0].mxu0
      %v1221 = vpop.f32.mrb[0].mxu0
      %v1222 = vpop.f32.mrb[0].mxu0
      %1223 = vdwg.mxu0
      %s1224 = scalar_lea.vmem %s3, 32
      %v1225 = vld [vmem:[%s1224] sm:$0xf]
      %v1226 = vld [vmem:[%s1224 + $0x4] sm:$0xf]
      %v1227 = vld [vmem:[%s1224 + $0x8] sm:$0xf]
      %v1228 = vld [vmem:[%s1224 + $0xc] sm:$0xf]
      %s1229 = scalar_lea.vmem %s6, 2
      %v1230 = vld [vmem:[%s1229] sm:$0x1]
      %v1231 = vunpack.c.l.bf16 %v1230
      %v1232 = vlaneseq
      %v1233 = vshrl.u32 %v1232, 7
      %v1234 = vsub.s32 0, %v1233
      %v1235 = vrot.slane %v1231, %v1234
      %v1240 = vunpack.c.l.b16 %v1225
      %v1241 = vunpack.c.l.b16 %v1226
      %v1242 = vunpack.c.l.b16 %v1227
      %v1243 = vunpack.c.l.b16 %v1228
      %v1244 = vpack.c.b16 %v1241, %v1240
      %v1245 = vpack.c.b16 %v1243, %v1242
      %1248 = vmatprep.subr.bf16.mxu0 0
      %1249 = vmatpush1.bf16.msra.mxu0 %v1244
      %1250 = vmatprep.subr.bf16.mxu0 0
      %1251 = vmatpush1.bf16.msra.mxu0 %v1245
      %1252 = vmatprep.subr.bf16.mxu0 0
      %1253 = vmatpush1.bf16.msra.mxu0 0
      %1254 = vmatprep.subr.bf16.mxu0 0
      %1255 = vmatpush1.bf16.msra.mxu0 0
      %1256 = vmatprep.subr.bf16.mxu0 0
      %1257 = vmatpush1.bf16.msra.mxu0 0
      %1258 = vmatprep.subr.bf16.mxu0 0
      %1259 = vmatpush1.bf16.msra.mxu0 0
      %1260 = vmatprep.subr.bf16.mxu0 0
      %1261 = vmatpush1.bf16.msra.mxu0 0
      %1262 = vmatprep.subr.bf16.mxu0 0
      %1263 = vmatpush1.bf16.msra.mxu0 0
      %1264 = vmatprep.subr.bf16.mxu0 0
      %1265 = vmatpush1.bf16.msra.mxu0 0
      %1266 = vmatprep.subr.bf16.mxu0 0
      %1267 = vmatpush1.bf16.msra.mxu0 0
      %1268 = vmatprep.subr.bf16.mxu0 0
      %1269 = vmatpush1.bf16.msra.mxu0 0
      %1270 = vmatprep.subr.bf16.mxu0 0
      %1271 = vmatpush1.bf16.msra.mxu0 0
      %1272 = vmatprep.subr.bf16.mxu0 0
      %1273 = vmatpush1.bf16.msra.mxu0 0
      %1274 = vmatprep.subr.bf16.mxu0 0
      %1275 = vmatpush1.bf16.msra.mxu0 0
      %1276 = vmatprep.subr.bf16.mxu0 0
      %1277 = vmatpush1.bf16.msra.mxu0 0
      %1278 = vmatprep.subr.bf16.mxu0 0
      %1279 = vmatpush1.bf16.msra.mxu0 0
      %1280 = vmatprep.mubr.bf16.mxu0 0
      %1281 = vmatmul.mubr.bf16.gmra.mrb[0].mxu0 %v549
      %v1282 = vpop.f32.mrb[0].mxu0
      %v1283 = vadd.f32 %v1235, %v1282
      %v1284 = vpop.f32.mrb[0].mxu0
      %v1285 = vpop.f32.mrb[0].mxu0
      %v1286 = vpop.f32.mrb[0].mxu0
      %1287 = vdwg.mxu0
      %s1288 = scalar_lea.vmem %s4, 32
      %v1289 = vld [vmem:[%s1288] sm:$0xf]
      %v1290 = vld [vmem:[%s1288 + $0x4] sm:$0xf]
      %v1291 = vld [vmem:[%s1288 + $0x8] sm:$0xf]
      %v1292 = vld [vmem:[%s1288 + $0xc] sm:$0xf]
      %s1293 = scalar_lea.vmem %s7, 2
      %v1294 = vld [vmem:[%s1293] sm:$0x1]
      %v1295 = vunpack.c.l.bf16 %v1294
      %v1296 = vlaneseq
      %v1297 = vshrl.u32 %v1296, 7
      %v1298 = vsub.s32 0, %v1297
      %v1299 = vrot.slane %v1295, %v1298
      %v1304 = vunpack.c.l.b16 %v1289
      %v1305 = vunpack.c.l.b16 %v1290
      %v1306 = vunpack.c.l.b16 %v1291
      %v1307 = vunpack.c.l.b16 %v1292
      %v1308 = vpack.c.b16 %v1305, %v1304
      %v1309 = vpack.c.b16 %v1307, %v1306
      %1312 = vmatprep.subr.bf16.mxu0 0
      %1313 = vmatpush1.bf16.msra.mxu0 %v1308
      %1314 = vmatprep.subr.bf16.mxu0 0
      %1315 = vmatpush1.bf16.msra.mxu0 %v1309
      %1316 = vmatprep.subr.bf16.mxu0 0
      %1317 = vmatpush1.bf16.msra.mxu0 0
      %1318 = vmatprep.subr.bf16.mxu0 0
      %1319 = vmatpush1.bf16.msra.mxu0 0
      %1320 = vmatprep.subr.bf16.mxu0 0
      %1321 = vmatpush1.bf16.msra.mxu0 0
      %1322 = vmatprep.subr.bf16.mxu0 0
      %1323 = vmatpush1.bf16.msra.mxu0 0
      %1324 = vmatprep.subr.bf16.mxu0 0
      %1325 = vmatpush1.bf16.msra.mxu0 0
      %1326 = vmatprep.subr.bf16.mxu0 0
      %1327 = vmatpush1.bf16.msra.mxu0 0
      %1328 = vmatprep.subr.bf16.mxu0 0
      %1329 = vmatpush1.bf16.msra.mxu0 0
      %1330 = vmatprep.subr.bf16.mxu0 0
      %1331 = vmatpush1.bf16.msra.mxu0 0
      %1332 = vmatprep.subr.bf16.mxu0 0
      %1333 = vmatpush1.bf16.msra.mxu0 0
      %1334 = vmatprep.subr.bf16.mxu0 0
      %1335 = vmatpush1.bf16.msra.mxu0 0
      %1336 = vmatprep.subr.bf16.mxu0 0
      %1337 = vmatpush1.bf16.msra.mxu0 0
      %1338 = vmatprep.subr.bf16.mxu0 0
      %1339 = vmatpush1.bf16.msra.mxu0 0
      %1340 = vmatprep.subr.bf16.mxu0 0
      %1341 = vmatpush1.bf16.msra.mxu0 0
      %1342 = vmatprep.subr.bf16.mxu0 0
      %1343 = vmatpush1.bf16.msra.mxu0 0
      %1344 = vmatprep.mubr.bf16.mxu0 0
      %1345 = vmatmul.mubr.bf16.gmra.mrb[0].mxu0 %v549
      %v1346 = vpop.f32.mrb[0].mxu0
      %v1347 = vadd.f32 %v1299, %v1346
      %v1348 = vpop.f32.mrb[0].mxu0
      %v1349 = vpop.f32.mrb[0].mxu0
      %v1350 = vpop.f32.mrb[0].mxu0
      %1351 = vdwg.mxu0
      %v1352 = vpack.c.bf16 %v1219, %v1219
      %v1353 = vpack.c.bf16 %v1283, %v1283
      %v1355 = vsel %vm655, %v1352, 0
      %v1358 = vsel %vm655, %v1353, 0
      %1360 = vmatprep.subr.bf16.mxu0 0
      %1361 = vmatpush1.bf16.xpose.msra.mxu0 %v1358
      %1362 = vmatprep.subr.bf16.mxu0 0
      %1363 = vmatpush1.bf16.xpose.msra.mxu0 0
      %1364 = vmatprep.subr.bf16.mxu0 0
      %1365 = vmatpush1.bf16.xpose.msra.mxu0 0
      %1366 = vmatprep.subr.bf16.mxu0 0
      %1367 = vmatpush1.bf16.xpose.msra.mxu0 0
      %1368 = vmatprep.subr.bf16.mxu0 0
      %1369 = vmatpush1.bf16.xpose.msra.mxu0 0
      %1370 = vmatprep.subr.bf16.mxu0 0
      %1371 = vmatpush1.bf16.xpose.msra.mxu0 0
      %1372 = vmatprep.subr.bf16.mxu0 0
      %1373 = vmatpush1.bf16.xpose.msra.mxu0 0
      %1374 = vmatprep.subr.bf16.mxu0 0
      %1375 = vmatpush1.bf16.xpose.msra.mxu0 0
      %1376 = vmatprep.subr.bf16.mxu0 0
      %1377 = vmatpush1.bf16.xpose.msra.mxu0 0
      %1378 = vmatprep.subr.bf16.mxu0 0
      %1379 = vmatpush1.bf16.xpose.msra.mxu0 0
      %1380 = vmatprep.subr.bf16.mxu0 0
      %1381 = vmatpush1.bf16.xpose.msra.mxu0 0
      %1382 = vmatprep.subr.bf16.mxu0 0
      %1383 = vmatpush1.bf16.xpose.msra.mxu0 0
      %1384 = vmatprep.subr.bf16.mxu0 0
      %1385 = vmatpush1.bf16.xpose.msra.mxu0 0
      %1386 = vmatprep.subr.bf16.mxu0 0
      %1387 = vmatpush1.bf16.xpose.msra.mxu0 0
      %1388 = vmatprep.subr.bf16.mxu0 0
      %1389 = vmatpush1.bf16.xpose.msra.mxu0 0
      %1390 = vmatprep.subr.bf16.mxu0 0
      %1391 = vmatpush1.bf16.xpose.msra.mxu0 0
      %1392 = vmatprep.mubr.bf16.mxu0 0
      %1393 = vmatmul.mubr.bf16.gmra.mrb[0].mxu0 %v1355
      %v1394 = vpop.f32.mrb[0].mxu0
      %v1395 = vadd.f32 0.0, %v1394
      %v1396 = vpop.f32.mrb[0].mxu0
      %v1397 = vpop.f32.mrb[0].mxu0
      %v1398 = vpop.f32.mrb[0].mxu0
      %1399 = vdwg.mxu0
      %v1400 = vmul.f32 %v1395, 0.35355338
      %v1401 = vsel %vm655, %v1400, -inf
      %1402 = vmax.xlane.f32.xlu0 %v1401
      %v1403 = vpop.xlane.xlu0 %1402
      %v1404 = vsub.f32 %v1400, %v1403
      %v1405 = vmul.f32 %v1404, 1.442695
      %v1406 = vpow.pop %v1405
      %v1407 = vsel %vm655, %v1406, 0.0
      %1408 = vadd.xlane.f32.xlu0 %v1407
      %v1409 = vpop.xlane.xlu0 %1408
      %v1410 = vrcp.pop %v1409
      %v1411 = vmul.f32 %v1406, %v1410
      %v1412 = vpack.c.bf16 %v1411, %v1411
      %v1413 = vpack.c.bf16 %v1347, %v1347
      %v1415 = vsel %vm655, %v1412, 0
      %v1418 = vsel %vm719, %v1413, 0
      %1420 = vmatprep.subr.bf16.mxu0 0
      %1421 = vmatpush1.bf16.msra.mxu0 %v1418
      %1422 = vmatprep.subr.bf16.mxu0 0
      %1423 = vmatpush1.bf16.msra.mxu0 0
      %1424 = vmatprep.subr.bf16.mxu0 0
      %1425 = vmatpush1.bf16.msra.mxu0 0
      %1426 = vmatprep.subr.bf16.mxu0 0
      %1427 = vmatpush1.bf16.msra.mxu0 0
      %1428 = vmatprep.subr.bf16.mxu0 0
      %1429 = vmatpush1.bf16.msra.mxu0 0
      %1430 = vmatprep.subr.bf16.mxu0 0
      %1431 = vmatpush1.bf16.msra.mxu0 0
      %1432 = vmatprep.subr.bf16.mxu0 0
      %1433 = vmatpush1.bf16.msra.mxu0 0
      %1434 = vmatprep.subr.bf16.mxu0 0
      %1435 = vmatpush1.bf16.msra.mxu0 0
      %1436 = vmatprep.subr.bf16.mxu0 0
      %1437 = vmatpush1.bf16.msra.mxu0 0
      %1438 = vmatprep.subr.bf16.mxu0 0
      %1439 = vmatpush1.bf16.msra.mxu0 0
      %1440 = vmatprep.subr.bf16.mxu0 0
      %1441 = vmatpush1.bf16.msra.mxu0 0
      %1442 = vmatprep.subr.bf16.mxu0 0
      %1443 = vmatpush1.bf16.msra.mxu0 0
      %1444 = vmatprep.subr.bf16.mxu0 0
      %1445 = vmatpush1.bf16.msra.mxu0 0
      %1446 = vmatprep.subr.bf16.mxu0 0
      %1447 = vmatpush1.bf16.msra.mxu0 0
      %1448 = vmatprep.subr.bf16.mxu0 0
      %1449 = vmatpush1.bf16.msra.mxu0 0
      %1450 = vmatprep.subr.bf16.mxu0 0
      %1451 = vmatpush1.bf16.msra.mxu0 0
      %1452 = vmatprep.mubr.bf16.mxu0 0
      %1453 = vmatmul.mubr.bf16.gmra.mrb[0].mxu0 %v1415
      %v1454 = vpop.f32.mrb[0].mxu0
      %v1455 = vadd.f32 0.0, %v1454
      %v1456 = vpop.f32.mrb[0].mxu0
      %v1457 = vpop.f32.mrb[0].mxu0
      %v1458 = vpop.f32.mrb[0].mxu0
      %1459 = vdwg.mxu0
      %v1460 = vpack.c.bf16 %v1455, %v1455
      %s1461 = scalar_lea.vmem %s8, 8
      %v1462 = vld [vmem:[%s1461] sm:$0xf]
      %v1464 = vsel %vm655, %v1460, 0
      %v1467 = vsel %vm719, %v1462, 0
      %1469 = vmatprep.subr.bf16.mxu0 0
      %1470 = vmatpush1.bf16.msra.mxu0 %v1467
      %1471 = vmatprep.subr.bf16.mxu0 0
      %1472 = vmatpush1.bf16.msra.mxu0 0
      %1473 = vmatprep.subr.bf16.mxu0 0
      %1474 = vmatpush1.bf16.msra.mxu0 0
      %1475 = vmatprep.subr.bf16.mxu0 0
      %1476 = vmatpush1.bf16.msra.mxu0 0
      %1477 = vmatprep.subr.bf16.mxu0 0
      %1478 = vmatpush1.bf16.msra.mxu0 0
      %1479 = vmatprep.subr.bf16.mxu0 0
      %1480 = vmatpush1.bf16.msra.mxu0 0
      %1481 = vmatprep.subr.bf16.mxu0 0
      %1482 = vmatpush1.bf16.msra.mxu0 0
      %1483 = vmatprep.subr.bf16.mxu0 0
      %1484 = vmatpush1.bf16.msra.mxu0 0
      %1485 = vmatprep.subr.bf16.mxu0 0
      %1486 = vmatpush1.bf16.msra.mxu0 0
      %1487 = vmatprep.subr.bf16.mxu0 0
      %1488 = vmatpush1.bf16.msra.mxu0 0
      %1489 = vmatprep.subr.bf16.mxu0 0
      %1490 = vmatpush1.bf16.msra.mxu0 0
      %1491 = vmatprep.subr.bf16.mxu0 0
      %1492 = vmatpush1.bf16.msra.mxu0 0
      %1493 = vmatprep.subr.bf16.mxu0 0
      %1494 = vmatpush1.bf16.msra.mxu0 0
      %1495 = vmatprep.subr.bf16.mxu0 0
      %1496 = vmatpush1.bf16.msra.mxu0 0
      %1497 = vmatprep.subr.bf16.mxu0 0
      %1498 = vmatpush1.bf16.msra.mxu0 0
      %1499 = vmatprep.subr.bf16.mxu0 0
      %1500 = vmatpush1.bf16.msra.mxu0 0
      %1501 = vmatprep.mubr.bf16.mxu0 0
      %1502 = vmatmul.mubr.bf16.gmra.mrb[0].mxu0 %v1464
      %v1503 = vpop.f32.mrb[0].mxu0
      %v1504 = vadd.f32 0.0, %v1503
      %v1505 = vpop.f32.mrb[0].mxu0
      %v1506 = vpop.f32.mrb[0].mxu0
      %v1507 = vpop.f32.mrb[0].mxu0
      %1508 = vdwg.mxu0
      %v1509 = vadd.f32 %v1155, %v1504
      %s1510 = scalar_lea.vmem %s2, 48
      %v1511 = vld [vmem:[%s1510] sm:$0xf]
      %v1512 = vld [vmem:[%s1510 + $0x4] sm:$0xf]
      %v1513 = vld [vmem:[%s1510 + $0x8] sm:$0xf]
      %v1514 = vld [vmem:[%s1510 + $0xc] sm:$0xf]
      %s1515 = scalar_lea.vmem %s5, 3
      %v1516 = vld [vmem:[%s1515] sm:$0x1]
      %v1517 = vunpack.c.l.bf16 %v1516
      %v1518 = vlaneseq
      %v1519 = vshrl.u32 %v1518, 7
      %v1520 = vsub.s32 0, %v1519
      %v1521 = vrot.slane %v1517, %v1520
      %v1526 = vunpack.c.l.b16 %v1511
      %v1527 = vunpack.c.l.b16 %v1512
      %v1528 = vunpack.c.l.b16 %v1513
      %v1529 = vunpack.c.l.b16 %v1514
      %v1530 = vpack.c.b16 %v1527, %v1526
      %v1531 = vpack.c.b16 %v1529, %v1528
      %1534 = vmatprep.subr.bf16.mxu0 0
      %1535 = vmatpush1.bf16.msra.mxu0 %v1530
      %1536 = vmatprep.subr.bf16.mxu0 0
      %1537 = vmatpush1.bf16.msra.mxu0 %v1531
      %1538 = vmatprep.subr.bf16.mxu0 0
      %1539 = vmatpush1.bf16.msra.mxu0 0
      %1540 = vmatprep.subr.bf16.mxu0 0
      %1541 = vmatpush1.bf16.msra.mxu0 0
      %1542 = vmatprep.subr.bf16.mxu0 0
      %1543 = vmatpush1.bf16.msra.mxu0 0
      %1544 = vmatprep.subr.bf16.mxu0 0
      %1545 = vmatpush1.bf16.msra.mxu0 0
      %1546 = vmatprep.subr.bf16.mxu0 0
      %1547 = vmatpush1.bf16.msra.mxu0 0
      %1548 = vmatprep.subr.bf16.mxu0 0
      %1549 = vmatpush1.bf16.msra.mxu0 0
      %1550 = vmatprep.subr.bf16.mxu0 0
      %1551 = vmatpush1.bf16.msra.mxu0 0
      %1552 = vmatprep.subr.bf16.mxu0 0
      %1553 = vmatpush1.bf16.msra.mxu0 0
      %1554 = vmatprep.subr.bf16.mxu0 0
      %1555 = vmatpush1.bf16.msra.mxu0 0
      %1556 = vmatprep.subr.bf16.mxu0 0
      %1557 = vmatpush1.bf16.msra.mxu0 0
      %1558 = vmatprep.subr.bf16.mxu0 0
      %1559 = vmatpush1.bf16.msra.mxu0 0
      %1560 = vmatprep.subr.bf16.mxu0 0
      %1561 = vmatpush1.bf16.msra.mxu0 0
      %1562 = vmatprep.subr.bf16.mxu0 0
      %1563 = vmatpush1.bf16.msra.mxu0 0
      %1564 = vmatprep.subr.bf16.mxu0 0
      %1565 = vmatpush1.bf16.msra.mxu0 0
      %1566 = vmatprep.mubr.bf16.mxu0 0
      %1567 = vmatmul.mubr.bf16.gmra.mrb[0].mxu0 %v484
      %v1568 = vpop.f32.mrb[0].mxu0
      %v1569 = vadd.f32 %v1521, %v1568
      %v1570 = vpop.f32.mrb[0].mxu0
      %v1571 = vpop.f32.mrb[0].mxu0
      %v1572 = vpop.f32.mrb[0].mxu0
      %1573 = vdwg.mxu0
      %s1574 = scalar_lea.vmem %s3, 48
      %v1575 = vld [vmem:[%s1574] sm:$0xf]
      %v1576 = vld [vmem:[%s1574 + $0x4] sm:$0xf]
      %v1577 = vld [vmem:[%s1574 + $0x8] sm:$0xf]
      %v1578 = vld [vmem:[%s1574 + $0xc] sm:$0xf]
      %s1579 = scalar_lea.vmem %s6, 3
      %v1580 = vld [vmem:[%s1579] sm:$0x1]
      %v1581 = vunpack.c.l.bf16 %v1580
      %v1582 = vlaneseq
      %v1583 = vshrl.u32 %v1582, 7
      %v1584 = vsub.s32 0, %v1583
      %v1585 = vrot.slane %v1581, %v1584
      %v1590 = vunpack.c.l.b16 %v1575
      %v1591 = vunpack.c.l.b16 %v1576
      %v1592 = vunpack.c.l.b16 %v1577
      %v1593 = vunpack.c.l.b16 %v1578
      %v1594 = vpack.c.b16 %v1591, %v1590
      %v1595 = vpack.c.b16 %v1593, %v1592
      %1598 = vmatprep.subr.bf16.mxu0 0
      %1599 = vmatpush1.bf16.msra.mxu0 %v1594
      %1600 = vmatprep.subr.bf16.mxu0 0
      %1601 = vmatpush1.bf16.msra.mxu0 %v1595
      %1602 = vmatprep.subr.bf16.mxu0 0
      %1603 = vmatpush1.bf16.msra.mxu0 0
      %1604 = vmatprep.subr.bf16.mxu0 0
      %1605 = vmatpush1.bf16.msra.mxu0 0
      %1606 = vmatprep.subr.bf16.mxu0 0
      %1607 = vmatpush1.bf16.msra.mxu0 0
      %1608 = vmatprep.subr.bf16.mxu0 0
      %1609 = vmatpush1.bf16.msra.mxu0 0
      %1610 = vmatprep.subr.bf16.mxu0 0
      %1611 = vmatpush1.bf16.msra.mxu0 0
      %1612 = vmatprep.subr.bf16.mxu0 0
      %1613 = vmatpush1.bf16.msra.mxu0 0
      %1614 = vmatprep.subr.bf16.mxu0 0
      %1615 = vmatpush1.bf16.msra.mxu0 0
      %1616 = vmatprep.subr.bf16.mxu0 0
      %1617 = vmatpush1.bf16.msra.mxu0 0
      %1618 = vmatprep.subr.bf16.mxu0 0
      %1619 = vmatpush1.bf16.msra.mxu0 0
      %1620 = vmatprep.subr.bf16.mxu0 0
      %1621 = vmatpush1.bf16.msra.mxu0 0
      %1622 = vmatprep.subr.bf16.mxu0 0
      %1623 = vmatpush1.bf16.msra.mxu0 0
      %1624 = vmatprep.subr.bf16.mxu0 0
      %1625 = vmatpush1.bf16.msra.mxu0 0
      %1626 = vmatprep.subr.bf16.mxu0 0
      %1627 = vmatpush1.bf16.msra.mxu0 0
      %1628 = vmatprep.subr.bf16.mxu0 0
      %1629 = vmatpush1.bf16.msra.mxu0 0
      %1630 = vmatprep.mubr.bf16.mxu0 0
      %1631 = vmatmul.mubr.bf16.gmra.mrb[0].mxu0 %v549
      %v1632 = vpop.f32.mrb[0].mxu0
      %v1633 = vadd.f32 %v1585, %v1632
      %v1634 = vpop.f32.mrb[0].mxu0
      %v1635 = vpop.f32.mrb[0].mxu0
      %v1636 = vpop.f32.mrb[0].mxu0
      %1637 = vdwg.mxu0
      %s1638 = scalar_lea.vmem %s4, 48
      %v1639 = vld [vmem:[%s1638] sm:$0xf]
      %v1640 = vld [vmem:[%s1638 + $0x4] sm:$0xf]
      %v1641 = vld [vmem:[%s1638 + $0x8] sm:$0xf]
      %v1642 = vld [vmem:[%s1638 + $0xc] sm:$0xf]
      %s1643 = scalar_lea.vmem %s7, 3
      %v1644 = vld [vmem:[%s1643] sm:$0x1]
      %v1645 = vunpack.c.l.bf16 %v1644
      %v1646 = vlaneseq
      %v1647 = vshrl.u32 %v1646, 7
      %v1648 = vsub.s32 0, %v1647
      %v1649 = vrot.slane %v1645, %v1648
      %v1654 = vunpack.c.l.b16 %v1639
      %v1655 = vunpack.c.l.b16 %v1640
      %v1656 = vunpack.c.l.b16 %v1641
      %v1657 = vunpack.c.l.b16 %v1642
      %v1658 = vpack.c.b16 %v1655, %v1654
      %v1659 = vpack.c.b16 %v1657, %v1656
      %1662 = vmatprep.subr.bf16.mxu0 0
      %1663 = vmatpush1.bf16.msra.mxu0 %v1658
      %1664 = vmatprep.subr.bf16.mxu0 0
      %1665 = vmatpush1.bf16.msra.mxu0 %v1659
      %1666 = vmatprep.subr.bf16.mxu0 0
      %1667 = vmatpush1.bf16.msra.mxu0 0
      %1668 = vmatprep.subr.bf16.mxu0 0
      %1669 = vmatpush1.bf16.msra.mxu0 0
      %1670 = vmatprep.subr.bf16.mxu0 0
      %1671 = vmatpush1.bf16.msra.mxu0 0
      %1672 = vmatprep.subr.bf16.mxu0 0
      %1673 = vmatpush1.bf16.msra.mxu0 0
      %1674 = vmatprep.subr.bf16.mxu0 0
      %1675 = vmatpush1.bf16.msra.mxu0 0
      %1676 = vmatprep.subr.bf16.mxu0 0
      %1677 = vmatpush1.bf16.msra.mxu0 0
      %1678 = vmatprep.subr.bf16.mxu0 0
      %1679 = vmatpush1.bf16.msra.mxu0 0
      %1680 = vmatprep.subr.bf16.mxu0 0
      %1681 = vmatpush1.bf16.msra.mxu0 0
      %1682 = vmatprep.subr.bf16.mxu0 0
      %1683 = vmatpush1.bf16.msra.mxu0 0
      %1684 = vmatprep.subr.bf16.mxu0 0
      %1685 = vmatpush1.bf16.msra.mxu0 0
      %1686 = vmatprep.subr.bf16.mxu0 0
      %1687 = vmatpush1.bf16.msra.mxu0 0
      %1688 = vmatprep.subr.bf16.mxu0 0
      %1689 = vmatpush1.bf16.msra.mxu0 0
      %1690 = vmatprep.subr.bf16.mxu0 0
      %1691 = vmatpush1.bf16.msra.mxu0 0
      %1692 = vmatprep.subr.bf16.mxu0 0
      %1693 = vmatpush1.bf16.msra.mxu0 0
      %1694 = vmatprep.mubr.bf16.mxu0 0
      %1695 = vmatmul.mubr.bf16.gmra.mrb[0].mxu0 %v549
      %v1696 = vpop.f32.mrb[0].mxu0
      %v1697 = vadd.f32 %v1649, %v1696
      %v1698 = vpop.f32.mrb[0].mxu0
      %v1699 = vpop.f32.mrb[0].mxu0
      %v1700 = vpop.f32.mrb[0].mxu0
      %1701 = vdwg.mxu0
      %v1702 = vpack.c.bf16 %v1569, %v1569
      %v1703 = vpack.c.bf16 %v1633, %v1633
      %v1705 = vsel %vm655, %v1702, 0
      %v1708 = vsel %vm655, %v1703, 0
      %1710 = vmatprep.subr.bf16.mxu0 0
      %1711 = vmatpush1.bf16.xpose.msra.mxu0 %v1708
      %1712 = vmatprep.subr.bf16.mxu0 0
      %1713 = vmatpush1.bf16.xpose.msra.mxu0 0
      %1714 = vmatprep.subr.bf16.mxu0 0
      %1715 = vmatpush1.bf16.xpose.msra.mxu0 0
      %1716 = vmatprep.subr.bf16.mxu0 0
      %1717 = vmatpush1.bf16.xpose.msra.mxu0 0
      %1718 = vmatprep.subr.bf16.mxu0 0
      %1719 = vmatpush1.bf16.xpose.msra.mxu0 0
      %1720 = vmatprep.subr.bf16.mxu0 0
      %1721 = vmatpush1.bf16.xpose.msra.mxu0 0
      %1722 = vmatprep.subr.bf16.mxu0 0
      %1723 = vmatpush1.bf16.xpose.msra.mxu0 0
      %1724 = vmatprep.subr.bf16.mxu0 0
      %1725 = vmatpush1.bf16.xpose.msra.mxu0 0
      %1726 = vmatprep.subr.bf16.mxu0 0
      %1727 = vmatpush1.bf16.xpose.msra.mxu0 0
      %1728 = vmatprep.subr.bf16.mxu0 0
      %1729 = vmatpush1.bf16.xpose.msra.mxu0 0
      %1730 = vmatprep.subr.bf16.mxu0 0
      %1731 = vmatpush1.bf16.xpose.msra.mxu0 0
      %1732 = vmatprep.subr.bf16.mxu0 0
      %1733 = vmatpush1.bf16.xpose.msra.mxu0 0
      %1734 = vmatprep.subr.bf16.mxu0 0
      %1735 = vmatpush1.bf16.xpose.msra.mxu0 0
      %1736 = vmatprep.subr.bf16.mxu0 0
      %1737 = vmatpush1.bf16.xpose.msra.mxu0 0
      %1738 = vmatprep.subr.bf16.mxu0 0
      %1739 = vmatpush1.bf16.xpose.msra.mxu0 0
      %1740 = vmatprep.subr.bf16.mxu0 0
      %1741 = vmatpush1.bf16.xpose.msra.mxu0 0
      %1742 = vmatprep.mubr.bf16.mxu0 0
      %1743 = vmatmul.mubr.bf16.gmra.mrb[0].mxu0 %v1705
      %v1744 = vpop.f32.mrb[0].mxu0
      %v1745 = vadd.f32 0.0, %v1744
      %v1746 = vpop.f32.mrb[0].mxu0
      %v1747 = vpop.f32.mrb[0].mxu0
      %v1748 = vpop.f32.mrb[0].mxu0
      %1749 = vdwg.mxu0
      %v1750 = vmul.f32 %v1745, 0.35355338
      %v1751 = vsel %vm655, %v1750, -inf
      %1752 = vmax.xlane.f32.xlu0 %v1751
      %v1753 = vpop.xlane.xlu0 %1752
      %v1754 = vsub.f32 %v1750, %v1753
      %v1755 = vmul.f32 %v1754, 1.442695
      %v1756 = vpow.pop %v1755
      %v1757 = vsel %vm655, %v1756, 0.0
      %1758 = vadd.xlane.f32.xlu0 %v1757
      %v1759 = vpop.xlane.xlu0 %1758
      %v1760 = vrcp.pop %v1759
      %v1761 = vmul.f32 %v1756, %v1760
      %v1762 = vpack.c.bf16 %v1761, %v1761
      %v1763 = vpack.c.bf16 %v1697, %v1697
      %v1765 = vsel %vm655, %v1762, 0
      %v1768 = vsel %vm719, %v1763, 0
      %1770 = vmatprep.subr.bf16.mxu0 0
      %1771 = vmatpush1.bf16.msra.mxu0 %v1768
      %1772 = vmatprep.subr.bf16.mxu0 0
      %1773 = vmatpush1.bf16.msra.mxu0 0
      %1774 = vmatprep.subr.bf16.mxu0 0
      %1775 = vmatpush1.bf16.msra.mxu0 0
      %1776 = vmatprep.subr.bf16.mxu0 0
      %1777 = vmatpush1.bf16.msra.mxu0 0
      %1778 = vmatprep.subr.bf16.mxu0 0
      %1779 = vmatpush1.bf16.msra.mxu0 0
      %1780 = vmatprep.subr.bf16.mxu0 0
      %1781 = vmatpush1.bf16.msra.mxu0 0
      %1782 = vmatprep.subr.bf16.mxu0 0
      %1783 = vmatpush1.bf16.msra.mxu0 0
      %1784 = vmatprep.subr.bf16.mxu0 0
      %1785 = vmatpush1.bf16.msra.mxu0 0
      %1786 = vmatprep.subr.bf16.mxu0 0
      %1787 = vmatpush1.bf16.msra.mxu0 0
      %1788 = vmatprep.subr.bf16.mxu0 0
      %1789 = vmatpush1.bf16.msra.mxu0 0
      %1790 = vmatprep.subr.bf16.mxu0 0
      %1791 = vmatpush1.bf16.msra.mxu0 0
      %1792 = vmatprep.subr.bf16.mxu0 0
      %1793 = vmatpush1.bf16.msra.mxu0 0
      %1794 = vmatprep.subr.bf16.mxu0 0
      %1795 = vmatpush1.bf16.msra.mxu0 0
      %1796 = vmatprep.subr.bf16.mxu0 0
      %1797 = vmatpush1.bf16.msra.mxu0 0
      %1798 = vmatprep.subr.bf16.mxu0 0
      %1799 = vmatpush1.bf16.msra.mxu0 0
      %1800 = vmatprep.subr.bf16.mxu0 0
      %1801 = vmatpush1.bf16.msra.mxu0 0
      %1802 = vmatprep.mubr.bf16.mxu0 0
      %1803 = vmatmul.mubr.bf16.gmra.mrb[0].mxu0 %v1765
      %v1804 = vpop.f32.mrb[0].mxu0
      %v1805 = vadd.f32 0.0, %v1804
      %v1806 = vpop.f32.mrb[0].mxu0
      %v1807 = vpop.f32.mrb[0].mxu0
      %v1808 = vpop.f32.mrb[0].mxu0
      %1809 = vdwg.mxu0
      %v1810 = vpack.c.bf16 %v1805, %v1805
      %s1811 = scalar_lea.vmem %s8, 12
      %v1812 = vld [vmem:[%s1811] sm:$0xf]
      %v1814 = vsel %vm655, %v1810, 0
      %v1817 = vsel %vm719, %v1812, 0
      %1819 = vmatprep.subr.bf16.mxu0 0
      %1820 = vmatpush1.bf16.msra.mxu0 %v1817
      %1821 = vmatprep.subr.bf16.mxu0 0
      %1822 = vmatpush1.bf16.msra.mxu0 0
      %1823 = vmatprep.subr.bf16.mxu0 0
      %1824 = vmatpush1.bf16.msra.mxu0 0
      %1825 = vmatprep.subr.bf16.mxu0 0
      %1826 = vmatpush1.bf16.msra.mxu0 0
      %1827 = vmatprep.subr.bf16.mxu0 0
      %1828 = vmatpush1.bf16.msra.mxu0 0
      %1829 = vmatprep.subr.bf16.mxu0 0
      %1830 = vmatpush1.bf16.msra.mxu0 0
      %1831 = vmatprep.subr.bf16.mxu0 0
      %1832 = vmatpush1.bf16.msra.mxu0 0
      %1833 = vmatprep.subr.bf16.mxu0 0
      %1834 = vmatpush1.bf16.msra.mxu0 0
      %1835 = vmatprep.subr.bf16.mxu0 0
      %1836 = vmatpush1.bf16.msra.mxu0 0
      %1837 = vmatprep.subr.bf16.mxu0 0
      %1838 = vmatpush1.bf16.msra.mxu0 0
      %1839 = vmatprep.subr.bf16.mxu0 0
      %1840 = vmatpush1.bf16.msra.mxu0 0
      %1841 = vmatprep.subr.bf16.mxu0 0
      %1842 = vmatpush1.bf16.msra.mxu0 0
      %1843 = vmatprep.subr.bf16.mxu0 0
      %1844 = vmatpush1.bf16.msra.mxu0 0
      %1845 = vmatprep.subr.bf16.mxu0 0
      %1846 = vmatpush1.bf16.msra.mxu0 0
      %1847 = vmatprep.subr.bf16.mxu0 0
      %1848 = vmatpush1.bf16.msra.mxu0 0
      %1849 = vmatprep.subr.bf16.mxu0 0
      %1850 = vmatpush1.bf16.msra.mxu0 0
      %1851 = vmatprep.mubr.bf16.mxu0 0
      %1852 = vmatmul.mubr.bf16.gmra.mrb[0].mxu0 %v1814
      %v1853 = vpop.f32.mrb[0].mxu0
      %v1854 = vadd.f32 0.0, %v1853
      %v1855 = vpop.f32.mrb[0].mxu0
      %v1856 = vpop.f32.mrb[0].mxu0
      %v1857 = vpop.f32.mrb[0].mxu0
      %1858 = vdwg.mxu0
      %v1859 = vadd.f32 %v1509, %v1854
      %v1860 = vld [vmem:[%s9] sm:$0x1]
      %v1861 = vunpack.c.l.bf16 %v1860
      %v1862 = vlaneseq
      %v1863 = vshrl.u32 %v1862, 7
      %v1864 = vsub.s32 0, %v1863
      %v1865 = vrot.slane %v1861, %v1864
      %v1866 = vadd.f32 %v1859, %v1865
      %v1867 = vunpack.c.l.bf16 %v458
      %v1868 = vadd.f32 %v1866, %v1867
      %v1869 = vsel %vm482, %v1868, 0.0
      %1870 = vadd.xlane.f32.xlu0 %v1869
      %v1871 = vpop.xlane.xlu0 %1870
      %v1872 = vrcp.pop 32.0
      %v1873 = vmul.f32 %v1871, %v1872
      %v1874 = vsub.f32 %v1868, %v1873
      %v1875 = vmul.f32 %v1874, %v1874
      %v1876 = vsel %vm482, %v1875, 0.0
      %1877 = vadd.xlane.f32.xlu0 %v1876
      %v1878 = vpop.xlane.xlu0 %1877
      %v1879 = vmul.f32 %v1878, %v1872
      %v1880 = vadd.f32 %v1879, 1e-05
      %v1881 = vrsqrt.pop %v1880
      %v1882 = vmul.f32 %v1874, %v1881
      %v1883 = vld [vmem:[%s10] sm:$0x1]
      %v1884 = vunpack.c.l.bf16 %v1883
      %v1885 = vlaneseq
      %v1886 = vshrl.u32 %v1885, 7
      %v1887 = vsub.s32 0, %v1886
      %v1888 = vrot.slane %v1884, %v1887
      %v1889 = vmul.f32 %v1882, %v1888
      %v1890 = vld [vmem:[%s11] sm:$0x1]
      %v1891 = vunpack.c.l.bf16 %v1890
      %v1892 = vlaneseq
      %v1893 = vshrl.u32 %v1892, 7
      %v1894 = vsub.s32 0, %v1893
      %v1895 = vrot.slane %v1891, %v1894
      %v1896 = vadd.f32 %v1889, %v1895
      %v1897 = vpack.c.bf16 %v1896, %v1896
      %vm1898 = vcmask 257024
      %1899 = vst.msk [vmem:[%s456] sm:$0xf] %vm1898, %v1897
      %p1900 = scmp.lt.s32.totalorder %s27, 1
      %s1901 = scalar_select %p1900, %s27, 1
      %p1902 = scmp.lt.s32.totalorder %s28, 0
      %s1903 = scalar_select %p1902, %s28, 0
      %s1904 = sadd.s32 %s1903, %s1901
      %s1905 = smul.addr %s1904, 4
      %s1906 = scalar_lea.vmem %s12, %s1905
      // Predicated region
      $region69: #{encoder_forward.6} parent=67 // pred_check
        %p1907 = pneg %p319
      $region70: #{encoder_forward.6} parent=67 // pred_check_branch
        %1909 = sbr.rel (%p1907) target = $region72
      $region71: #{encoder_forward.6} parent=67 // pred_region
        _
      $region72: #{encoder_forward.6} parent=67 // pred_fallthru
        _
    $region68: #{encoder_forward.6} parent=5 // pred_fallthru
      _
    %p1910 = scmp.le.s32.totalorder 2, %s18
    // Predicated region
    $region73: #{encoder_forward.6} parent=5 // pred_check
      %p1911 = pneg %p1910
    $region74: #{encoder_forward.6} parent=5 // pred_check_branch
      %1913 = sbr.rel (%p1911) target = $region76
    $region75: #{encoder_forward.6} parent=5 // pred_region
      %s1914 = ssub.s32 %s18, 2
      // Predicated region
      $region77: #{encoder_forward.6} parent=75 // pred_check
        %p1915 = pneg %p325
      $region78: #{encoder_forward.6} parent=75 // pred_check_branch
        %1917 = sbr.rel (%p1915) target = $region80
      $region79: #{encoder_forward.6} parent=75 // pred_region
        %p1918 = scmp.lt.s32.totalorder %s29, 1
        %s1919 = scalar_select %p1918, %s29, 1
        %p1920 = scmp.lt.s32.totalorder %s30, 0
        %s1921 = scalar_select %p1920, %s30, 0
        %s1922 = sadd.s32 %s1921, %s1919
        %s1923 = smul.addr %s1922, 4
        %s1924 = scalar_lea.vmem %s12, %s1923
      $region80: #{encoder_forward.6} parent=75 // pred_fallthru
        _
    $region76: #{encoder_forward.6} parent=5 // pred_fallthru
      _
  $region6: #{encoder_forward.6} parent=0 // loop_footer
    %s22 = sadd.s32 1, %s18
  $region7: #{encoder_forward.6} parent=0 // loop_footer_branch
    %17 = sbr.rel target = $region3
  $region8: #{encoder_forward.6} parent=0 // loop_exit
    _

</llo_original>
